<compile_context>
chip_gen: v7x
topology: tpu7x:2x2x1
jax: 0.10.0
libtpu: 0.0.40
codegen_flags: <defaults>
</compile_context>

<pallas_src>
import math

import jax
import jax.numpy as jnp
from jax.experimental import pallas as pl
from jax.experimental.pallas import tpu as pltpu

# ----------------------------- config ---------------------------------------
D_MODEL = 32          # hidden size
N_HEADS = 2
D_KV = 16             # per-head dim
HD = N_HEADS * D_KV   # 32
D_FF = 64             # gated-GELU feed-forward inner dim
VOCAB = 64            # hyperparams.len_tokenizer
PATCH_DIM = 32        # 2 (row/col idx) + 30 pixel features
MAX_PATCHES = 8       # encoder sequence length
DEC_LEN = 8           # decoder / label sequence length
MAX_POS = 16          # row / column embedding table size
REL_BUCKETS = 32      # T5-style relative-attention buckets (decoder self-attn)
REL_MAX_DIST = 128
PAD_TOKEN_ID = 0
DECODER_START_TOKEN_ID = 0
IGNORE_INDEX = -100
NEG_INF = -1e9
EPS = 1e-6

# Single encoder / decoder layer (matches the previous config N_*_LAYERS = 1).
# TODO(synk): pretrained Pix2Struct weights / tokenizer resize are replaced by
#             deterministic random init; dropout omitted (eval semantics).


# ----------------------------- fused kernel ----------------------------------
def _fused_forward_kernel(
    # per-batch inputs (blocks carry a leading batch dim of 1)
    pix_ref, row_idx_ref, col_idx_ref, enc_mask_ref,
    dec_ids_ref, dec_mask_ref, labels_ref,
    # encoder weights (resident full-VMEM blocks)
    patch_proj_ref, row_emb_ref, col_emb_ref,
    e_ln1_ref, e_qkv_ref, e_o_ref, e_ln2_ref, e_wi_ref, e_wo_ref, e_lnf_ref,
    # decoder weights
    tok_emb_ref, dec_self_bias_ref,
    d_ln_sa_ref, d_sa_qkv_ref, d_sa_o_ref,
    d_ln_ca_ref, d_ca_q_ref, d_ca_kv_ref, d_ca_o_ref,
    d_ln_ff_ref, d_wi_ref, d_wo_ref, d_lnf_ref, lm_head_ref,
    # output
    loss_ref,
    # scratch (persists across the batch grid axis)
    loss_acc, cnt_acc,
):
    b = pl.program_id(0)
    f32 = jnp.float32

    @pl.when(b == 0)
    def _init():
        loss_acc[...] = jnp.zeros_like(loss_acc)
        cnt_acc[...] = jnp.zeros_like(cnt_acc)

    def rmsnorm(x, w_ref):                     # Pix2Struct (T5) RMSNorm
        var = jnp.mean(x * x, axis=-1, keepdims=True)
        return x * jax.lax.rsqrt(var + EPS) * w_ref[...]

    def mha(q, k, v, o_ref, key_bias, extra_ref=None):
        """q:(Sq,HD) k,v:(Sk,HD) o_ref:(HD,D) key_bias:(1,Sk) extra:(H,Sq,Sk)."""
        out = None
        for h in range(N_HEADS):
            sl = slice(h * D_KV, (h + 1) * D_KV)
            # T5/Pix2Struct attention: intentionally NO 1/sqrt(d_kv) scaling.
            s = jax.lax.dot_general(q[:, sl], k[:, sl],
                                    (((1,), (1,)), ((), ())),
                                    preferred_element_type=f32)
            s = s + key_bias
            if extra_ref is not None:
                s = s + extra_ref[h]
            m = jnp.max(s, axis=-1, keepdims=True)
            p = jnp.exp(s - m)
            p = p / jnp.sum(p, axis=-1, keepdims=True)
            oh = jnp.dot(p, v[:, sl], preferred_element_type=f32)          # (Sq, d)
            contrib = jnp.dot(oh, o_ref[sl, :], preferred_element_type=f32)  # (Sq, D)
            out = contrib if out is None else out + contrib
        return out

    def gated_ff(x, ln_ref, wi_ref, wo_ref):
        h = rmsnorm(x, ln_ref)
        hh = jnp.dot(h, wi_ref[...], preferred_element_type=f32)   # (S, 2*FF)=128 lanes
        g = jax.nn.gelu(hh[:, :D_FF], approximate=True) * hh[:, D_FF:]   # gelu_new gate
        return x + jnp.dot(g, wo_ref[...], preferred_element_type=f32)

    # --------------------------- encoder -------------------------------------
    pix = pix_ref[0]                                   # (P, 30)
    row_idx = row_idx_ref[0]                           # (P, 1) int32
    col_idx = col_idx_ref[0]                           # (P, 1) int32
    enc_mask = enc_mask_ref[0]                         # (1, P) float32

    # embedding lookups as one-hot matmuls (MXU-friendly, stays in VMEM)
    pos_iota = jax.lax.broadcasted_iota(jnp.int32, (MAX_PATCHES, MAX_POS), 1)
    row_oh = (pos_iota == row_idx).astype(f32)
    col_oh = (pos_iota == col_idx).astype(f32)
    x = (jnp.dot(pix, patch_proj_ref[...], preferred_element_type=f32)
         + jnp.dot(row_oh, row_emb_ref[...], preferred_element_type=f32)
         + jnp.dot(col_oh, col_emb_ref[...], preferred_element_type=f32))     # (P, D)

    enc_key_bias = (1.0 - enc_mask) * NEG_INF          # (1, P)

    h = rmsnorm(x, e_ln1_ref)
    qkv = jnp.dot(h, e_qkv_ref[...], preferred_element_type=f32)              # (P, 3*HD)
    x = x + mha(qkv[:, :HD], qkv[:, HD:2 * HD], qkv[:, 2 * HD:],
                e_o_ref, enc_key_bias)
    x = gated_ff(x, e_ln2_ref, e_wi_ref, e_wo_ref)
    enc_out = rmsnorm(x, e_lnf_ref)                    # (P, D)

    # --------------------------- decoder -------------------------------------
    dec_ids = dec_ids_ref[0]                           # (T, 1) int32
    dec_mask = dec_mask_ref[0]                         # (1, T) float32
    labels = labels_ref[0]                             # (T, 1) int32

    vocab_iota = jax.lax.broadcasted_iota(jnp.int32, (DEC_LEN, VOCAB), 1)
    tok_oh = (vocab_iota == dec_ids).astype(f32)
    y = jnp.dot(tok_oh, tok_emb_ref[...], preferred_element_type=f32)         # (T, D)

    dec_key_bias = (1.0 - dec_mask) * NEG_INF          # (1, T)

    # self-attention (static causal + relative-position bias passed in)
    h = rmsnorm(y, d_ln_sa_ref)
    qkv = jnp.dot(h, d_sa_qkv_ref[...], preferred_element_type=f32)
    y = y + mha(qkv[:, :HD], qkv[:, HD:2 * HD], qkv[:, 2 * HD:],
                d_sa_o_ref, dec_key_bias, extra_ref=dec_self_bias_ref)
    # cross-attention over the (final-normed) encoder output
    h = rmsnorm(y, d_ln_ca_ref)
    q = jnp.dot(h, d_ca_q_ref[...], preferred_element_type=f32)
    kv = jnp.dot(enc_out, d_ca_kv_ref[...], preferred_element_type=f32)       # (P, 2*HD)
    y = y + mha(q, kv[:, :HD], kv[:, HD:], d_ca_o_ref, enc_key_bias)
    # feed-forward
    y = gated_ff(y, d_ln_ff_ref, d_wi_ref, d_wo_ref)
    y = rmsnorm(y, d_lnf_ref)

    logits = jnp.dot(y, lm_head_ref[...], preferred_element_type=f32)         # (T, V)

    # --------------------------- cross entropy -------------------------------
    m = jnp.max(logits, axis=-1, keepdims=True)
    lse = jnp.log(jnp.sum(jnp.exp(logits - m), axis=-1, keepdims=True)) + m
    tgt = jnp.sum(jnp.where(vocab_iota == labels, logits, 0.0),
                  axis=-1, keepdims=True)
    valid = (labels != IGNORE_INDEX).astype(f32)       # (T, 1)
    per = (lse - tgt) * valid

    loss_acc[...] += jnp.sum(per, axis=0, keepdims=True)
    cnt_acc[...] += jnp.sum(valid, axis=0, keepdims=True)
    # in-kernel guarded mean; the last grid step's write is the final value
    loss_ref[...] = loss_acc[...] / jnp.maximum(cnt_acc[...], 1.0)


# ----------------------------- plain-JAX glue ---------------------------------
def t5_bucket(rel_position, num_buckets=REL_BUCKETS, max_distance=REL_MAX_DIST):
    # causal (bidirectional=False) bucketing, as in T5 / Pix2Struct decoder
    rpos = -jnp.minimum(rel_position, 0)
    max_exact = num_buckets // 2
    is_small = rpos < max_exact
    rpos_large = max_exact + (
        jnp.log(jnp.maximum(rpos, 1).astype(jnp.float32) / max_exact)
        / math.log(max_distance / max_exact)
        * (num_buckets - max_exact)
    ).astype(jnp.int32)
    rpos_large = jnp.minimum(rpos_large, num_buckets - 1)
    return jnp.where(is_small, rpos, rpos_large)


def rel_pos_bias(rel_emb, T):
    q_pos = jnp.arange(T)[:, None]
    k_pos = jnp.arange(T)[None, :]
    buckets = t5_bucket(k_pos - q_pos)          # (T, T)
    return rel_emb[buckets].transpose(2, 0, 1)  # (H, T, T)


def shift_right(labels):
    shifted = jnp.roll(labels, 1, axis=-1)
    shifted = shifted.at[:, 0].set(DECODER_START_TOKEN_ID)
    return jnp.where(shifted == IGNORE_INDEX, PAD_TOKEN_ID, shifted)


def benetech_forward(params, flattened_patches, attention_mask, labels):
    B, P, _ = flattened_patches.shape
    T = labels.shape[1]
    enc, dec = params['enc'], params['dec']

    # index / mask preparation (tiny integer glue)
    row_idx = flattened_patches[:, :, 0].astype(jnp.int32)[..., None]      # (B, P, 1)
    col_idx = flattened_patches[:, :, 1].astype(jnp.int32)[..., None]      # (B, P, 1)
    pix = flattened_patches[:, :, 2:]                                       # (B, P, F-2)
    enc_mask = attention_mask.astype(jnp.float32).reshape(B, 1, P)          # (B, 1, P)

    dec_ids = shift_right(labels)
    dec_mask = (dec_ids != PAD_TOKEN_ID).astype(jnp.float32)
    dec_mask = dec_mask.at[:, 0].set(1.0).reshape(B, 1, T)                  # (B, 1, T)
    dec_ids3 = dec_ids.astype(jnp.int32)[..., None]                         # (B, T, 1)
    labels3 = labels.astype(jnp.int32)[..., None]                           # (B, T, 1)

    # static decoder self-attention bias: causal mask + T5 relative-position bias
    causal = (1.0 - jnp.tril(jnp.ones((T, T), jnp.float32))) * NEG_INF
    dec_self_bias = causal[None] + rel_pos_bias(dec['rel_bias'], T)         # (H, T, T)

    inputs = [
        pix, row_idx, col_idx, enc_mask, dec_ids3, dec_mask, labels3,
        enc['patch_proj'], enc['row_emb'], enc['col_emb'],
        enc['ln1'], enc['qkv'], enc['o'], enc['ln2'], enc['wi'], enc['wo'], enc['ln_f'],
        dec['tok_emb'], dec_self_bias,
        dec['ln_sa'], dec['sa_qkv'], dec['sa_o'],
        dec['ln_ca'], dec['ca_q'], dec['ca_kv'], dec['ca_o'],
        dec['ln_ff'], dec['wi'], dec['wo'], dec['ln_f'], dec['lm_head'],
    ]
    n_batched = 7

    def batch_spec(a):
        nd = a.ndim
        return pl.BlockSpec((1,) + a.shape[1:], lambda b: (b,) + (0,) * (nd - 1))

    def full_spec(a):
        nd = a.ndim
        return pl.BlockSpec(a.shape, lambda b: (0,) * nd)

    in_specs = ([batch_spec(a) for a in inputs[:n_batched]]
                + [full_spec(a) for a in inputs[n_batched:]])

    # TODO(synk): on v7x the batch axis could be split across the two TensorCores by
    #             emitting per-batch (loss_sum, count) partials instead of accumulating
    #             in-kernel; at B=2 toy scale the sequential 2-step grid is negligible.
    loss = pl.pallas_call(
        _fused_forward_kernel,
        out_shape=jax.ShapeDtypeStruct((1, 1), jnp.float32),
        grid=(B,),
        in_specs=in_specs,
        out_specs=pl.BlockSpec((1, 1), lambda b: (0, 0)),
        scratch_shapes=[pltpu.VMEM((1, 1), jnp.float32),    # loss sum accumulator
                        pltpu.VMEM((1, 1), jnp.float32)],   # valid-token count
        compiler_params=pltpu.CompilerParams(
            dimension_semantics=("arbitrary",)),
    )(*inputs)
    return loss[0, 0]


# ----------------------------- parameter init --------------------------------
def init_params(key):
    keys = iter(jax.random.split(key, 40))

    def nrm(shape):
        return jax.random.normal(next(keys), shape, jnp.float32) * 0.02

    ones_row = lambda: jnp.ones((1, D_MODEL), jnp.float32)

    enc = {
        'patch_proj': nrm((PATCH_DIM - 2, D_MODEL)),
        'row_emb': nrm((MAX_POS, D_MODEL)),
        'col_emb': nrm((MAX_POS, D_MODEL)),
        'ln1': ones_row(),
        'qkv': nrm((D_MODEL, 3 * HD)),       # Q|K|V concatenated
        'o': nrm((HD, D_MODEL)),
        'ln2': ones_row(),
        'wi': nrm((D_MODEL, 2 * D_FF)),      # wi0|wi1 concatenated (128 lanes)
        'wo': nrm((D_FF, D_MODEL)),
        'ln_f': ones_row(),
    }
    dec = {
        'tok_emb': nrm((VOCAB, D_MODEL)),
        'rel_bias': nrm((REL_BUCKETS, N_HEADS)),
        'ln_sa': ones_row(),
        'sa_qkv': nrm((D_MODEL, 3 * HD)),
        'sa_o': nrm((HD, D_MODEL)),
        'ln_ca': ones_row(),
        'ca_q': nrm((D_MODEL, HD)),
        'ca_kv': nrm((D_MODEL, 2 * HD)),     # K|V concatenated
        'ca_o': nrm((HD, D_MODEL)),
        'ln_ff': ones_row(),
        'wi': nrm((D_MODEL, 2 * D_FF)),
        'wo': nrm((D_FF, D_MODEL)),
        'ln_f': ones_row(),
        'lm_head': nrm((D_MODEL, VOCAB)),
    }
    return {'enc': enc, 'dec': dec}


# ----------------------------- main -------------------------------------------
if __name__ == "__main__":
    key = jax.random.PRNGKey(0)
    pkey, pixkey, labkey = jax.random.split(key, 3)
    params = init_params(pkey)

    B = 2
    rows = jnp.tile(jnp.repeat(jnp.arange(1, 3), MAX_PATCHES // 2)[None, :],
                    (B, 1)).astype(jnp.float32)
    cols = jnp.tile(jnp.tile(jnp.arange(1, MAX_PATCHES // 2 + 1), 2)[None, :],
                    (B, 1)).astype(jnp.float32)
    pix = jax.random.normal(pixkey, (B, MAX_PATCHES, PATCH_DIM - 2), jnp.float32)
    flattened_patches = jnp.concatenate([rows[..., None], cols[..., None], pix], axis=-1)

    attention_mask = jnp.ones((B, MAX_PATCHES), jnp.float32)
    attention_mask = attention_mask.at[1, -2:].set(0.0)
    flattened_patches = flattened_patches * attention_mask[..., None]

    labels = jax.random.randint(labkey, (B, DEC_LEN), 1, VOCAB).astype(jnp.int32)
    labels = labels.at[0, -1:].set(-100)
    labels = labels.at[1, -3:].set(-100)

    loss = jax.jit(benetech_forward)(params, flattened_patches, attention_mask, labels)
    loss = jax.block_until_ready(loss)
    assert jnp.isfinite(loss), f"loss is not finite: {loss}"
    print("KERNEL_OK")
</pallas_src>

<mosaic_0001>
module attributes {stable_mosaic.version = 11 : i64} {
  func.func @_fused_forward_kernel(%arg0: i32, %arg1: memref<1x8x30xf32, #tpu.memory_space<vmem>>, %arg2: memref<1x8x1xi32, #tpu.memory_space<vmem>>, %arg3: memref<1x8x1xi32, #tpu.memory_space<vmem>>, %arg4: memref<1x1x8xf32, #tpu.memory_space<vmem>>, %arg5: memref<1x8x1xi32, #tpu.memory_space<vmem>>, %arg6: memref<1x1x8xf32, #tpu.memory_space<vmem>>, %arg7: memref<1x8x1xi32, #tpu.memory_space<vmem>>, %arg8: memref<30x32xf32, #tpu.memory_space<vmem>>, %arg9: memref<16x32xf32, #tpu.memory_space<vmem>>, %arg10: memref<16x32xf32, #tpu.memory_space<vmem>>, %arg11: memref<1x32xf32, #tpu.memory_space<vmem>>, %arg12: memref<32x96xf32, #tpu.memory_space<vmem>>, %arg13: memref<32x32xf32, #tpu.memory_space<vmem>>, %arg14: memref<1x32xf32, #tpu.memory_space<vmem>>, %arg15: memref<32x128xf32, #tpu.memory_space<vmem>>, %arg16: memref<64x32xf32, #tpu.memory_space<vmem>>, %arg17: memref<1x32xf32, #tpu.memory_space<vmem>>, %arg18: memref<64x32xf32, #tpu.memory_space<vmem>>, %arg19: memref<2x8x8xf32, #tpu.memory_space<vmem>>, %arg20: memref<1x32xf32, #tpu.memory_space<vmem>>, %arg21: memref<32x96xf32, #tpu.memory_space<vmem>>, %arg22: memref<32x32xf32, #tpu.memory_space<vmem>>, %arg23: memref<1x32xf32, #tpu.memory_space<vmem>>, %arg24: memref<32x32xf32, #tpu.memory_space<vmem>>, %arg25: memref<32x64xf32, #tpu.memory_space<vmem>>, %arg26: memref<32x32xf32, #tpu.memory_space<vmem>>, %arg27: memref<1x32xf32, #tpu.memory_space<vmem>>, %arg28: memref<32x128xf32, #tpu.memory_space<vmem>>, %arg29: memref<64x32xf32, #tpu.memory_space<vmem>>, %arg30: memref<1x32xf32, #tpu.memory_space<vmem>>, %arg31: memref<32x64xf32, #tpu.memory_space<vmem>>, %arg32: memref<1x1xf32, #tpu.memory_space<vmem>>, %arg33: memref<1x1xf32, #tpu.memory_space<vmem>>, %arg34: memref<1x1xf32, #tpu.memory_space<vmem>>) attributes {dimension_semantics = [#tpu.dimension_semantics<arbitrary>], iteration_bounds = array<i64: 2>, scalar_prefetch = 0 : i64, scratch_operands = 2 : i64, tpu.core_type = #tpu.core_type<tc>, window_params = [{transform_indices = @transform_0, window_bounds = array<i64: 1, 8, 30>}, {transform_indices = @transform_1, window_bounds = array<i64: 1, 8, 1>}, {transform_indices = @transform_2, window_bounds = array<i64: 1, 8, 1>}, {transform_indices = @transform_3, window_bounds = array<i64: 1, 1, 8>}, {transform_indices = @transform_4, window_bounds = array<i64: 1, 8, 1>}, {transform_indices = @transform_5, window_bounds = array<i64: 1, 1, 8>}, {transform_indices = @transform_6, window_bounds = array<i64: 1, 8, 1>}, {pipeline_mode = #tpu.pipeline_mode<synchronous>, transform_indices = @transform_7, window_bounds = array<i64: 30, 32>}, {pipeline_mode = #tpu.pipeline_mode<synchronous>, transform_indices = @transform_8, window_bounds = array<i64: 16, 32>}, {pipeline_mode = #tpu.pipeline_mode<synchronous>, transform_indices = @transform_9, window_bounds = array<i64: 16, 32>}, {pipeline_mode = #tpu.pipeline_mode<synchronous>, transform_indices = @transform_10, window_bounds = array<i64: 1, 32>}, {pipeline_mode = #tpu.pipeline_mode<synchronous>, transform_indices = @transform_11, window_bounds = array<i64: 32, 96>}, {pipeline_mode = #tpu.pipeline_mode<synchronous>, transform_indices = @transform_12, window_bounds = array<i64: 32, 32>}, {pipeline_mode = #tpu.pipeline_mode<synchronous>, transform_indices = @transform_13, window_bounds = array<i64: 1, 32>}, {pipeline_mode = #tpu.pipeline_mode<synchronous>, transform_indices = @transform_14, window_bounds = array<i64: 32, 128>}, {pipeline_mode = #tpu.pipeline_mode<synchronous>, transform_indices = @transform_15, window_bounds = array<i64: 64, 32>}, {pipeline_mode = #tpu.pipeline_mode<synchronous>, transform_indices = @transform_16, window_bounds = array<i64: 1, 32>}, {pipeline_mode = #tpu.pipeline_mode<synchronous>, transform_indices = @transform_17, window_bounds = array<i64: 64, 32>}, {pipeline_mode = #tpu.pipeline_mode<synchronous>, transform_indices = @transform_18, window_bounds = array<i64: 2, 8, 8>}, {pipeline_mode = #tpu.pipeline_mode<synchronous>, transform_indices = @transform_19, window_bounds = array<i64: 1, 32>}, {pipeline_mode = #tpu.pipeline_mode<synchronous>, transform_indices = @transform_20, window_bounds = array<i64: 32, 96>}, {pipeline_mode = #tpu.pipeline_mode<synchronous>, transform_indices = @transform_21, window_bounds = array<i64: 32, 32>}, {pipeline_mode = #tpu.pipeline_mode<synchronous>, transform_indices = @transform_22, window_bounds = array<i64: 1, 32>}, {pipeline_mode = #tpu.pipeline_mode<synchronous>, transform_indices = @transform_23, window_bounds = array<i64: 32, 32>}, {pipeline_mode = #tpu.pipeline_mode<synchronous>, transform_indices = @transform_24, window_bounds = array<i64: 32, 64>}, {pipeline_mode = #tpu.pipeline_mode<synchronous>, transform_indices = @transform_25, window_bounds = array<i64: 32, 32>}, {pipeline_mode = #tpu.pipeline_mode<synchronous>, transform_indices = @transform_26, window_bounds = array<i64: 1, 32>}, {pipeline_mode = #tpu.pipeline_mode<synchronous>, transform_indices = @transform_27, window_bounds = array<i64: 32, 128>}, {pipeline_mode = #tpu.pipeline_mode<synchronous>, transform_indices = @transform_28, window_bounds = array<i64: 64, 32>}, {pipeline_mode = #tpu.pipeline_mode<synchronous>, transform_indices = @transform_29, window_bounds = array<i64: 1, 32>}, {pipeline_mode = #tpu.pipeline_mode<synchronous>, transform_indices = @transform_30, window_bounds = array<i64: 32, 64>}, {pipeline_mode = #tpu.pipeline_mode<synchronous>, transform_indices = @transform_31, window_bounds = array<i64: 1, 1>}]} {
    %c0_i32 = arith.constant 0 : i32
    %0 = arith.cmpi eq, %arg0, %c0_i32 : i32
    %1 = arith.extui %0 : i1 to i32
    %c0_i32_0 = arith.constant 0 : i32
    %2 = arith.cmpi ne, %1, %c0_i32_0 : i32
    scf.if %2 {
      %cst_173 = arith.constant 0.000000e+00 : f32
      %357 = vector.broadcast %cst_173 : f32 to vector<1x1xf32>
      %c0_174 = arith.constant 0 : index
      %c0_175 = arith.constant 0 : index
      %358 = vector.load %arg33[%c0_174, %c0_175] : memref<1x1xf32, #tpu.memory_space<vmem>>, vector<1x1xf32>
      tpu.vector_store %arg33[%c0_174, %c0_175], %357 {strides = array<i32>} : memref<1x1xf32, #tpu.memory_space<vmem>>, vector<1x1xf32>,
      %cst_176 = arith.constant 0.000000e+00 : f32
      %359 = vector.broadcast %cst_176 : f32 to vector<1x1xf32>
      %c0_177 = arith.constant 0 : index
      %c0_178 = arith.constant 0 : index
      %360 = vector.load %arg34[%c0_177, %c0_178] : memref<1x1xf32, #tpu.memory_space<vmem>>, vector<1x1xf32>
      tpu.vector_store %arg34[%c0_177, %c0_178], %359 {strides = array<i32>} : memref<1x1xf32, #tpu.memory_space<vmem>>, vector<1x1xf32>,
    } else {
    }
    %c0 = arith.constant 0 : index
    %c0_1 = arith.constant 0 : index
    %c0_2 = arith.constant 0 : index
    %3 = vector.load %arg1[%c0, %c0_1, %c0_2] : memref<1x8x30xf32, #tpu.memory_space<vmem>>, vector<1x8x30xf32>
    %4 = vector.shape_cast %3 : vector<1x8x30xf32> to vector<8x30xf32>
    %c0_3 = arith.constant 0 : index
    %c0_4 = arith.constant 0 : index
    %c0_5 = arith.constant 0 : index
    %5 = vector.load %arg2[%c0_3, %c0_4, %c0_5] : memref<1x8x1xi32, #tpu.memory_space<vmem>>, vector<1x8x1xi32>
    %6 = vector.shape_cast %5 : vector<1x8x1xi32> to vector<8x1xi32>
    %c0_6 = arith.constant 0 : index
    %c0_7 = arith.constant 0 : index
    %c0_8 = arith.constant 0 : index
    %7 = vector.load %arg3[%c0_6, %c0_7, %c0_8] : memref<1x8x1xi32, #tpu.memory_space<vmem>>, vector<1x8x1xi32>
    %8 = vector.shape_cast %7 : vector<1x8x1xi32> to vector<8x1xi32>
    %c0_9 = arith.constant 0 : index
    %c0_10 = arith.constant 0 : index
    %c0_11 = arith.constant 0 : index
    %9 = vector.load %arg4[%c0_9, %c0_10, %c0_11] : memref<1x1x8xf32, #tpu.memory_space<vmem>>, vector<1x1x8xf32>
    %10 = vector.shape_cast %9 : vector<1x1x8xf32> to vector<1x8xf32>
    %11 = tpu.iota {dimensions = array<i32: 1>} : vector<8x16xi32>
    %12 = vector.broadcast %6 : vector<8x1xi32> to vector<8x16xi32>
    %13 = arith.cmpi eq, %11, %12 : vector<8x16xi32>
    %14 = arith.extui %13 : vector<8x16xi1> to vector<8x16xi32>
    %15 = arith.sitofp %14 : vector<8x16xi32> to vector<8x16xf32>
    %16 = vector.broadcast %8 : vector<8x1xi32> to vector<8x16xi32>
    %17 = arith.cmpi eq, %11, %16 : vector<8x16xi32>
    %18 = arith.extui %17 : vector<8x16xi1> to vector<8x16xi32>
    %19 = arith.sitofp %18 : vector<8x16xi32> to vector<8x16xf32>
    %c0_12 = arith.constant 0 : index
    %c0_13 = arith.constant 0 : index
    %20 = vector.load %arg8[%c0_12, %c0_13] : memref<30x32xf32, #tpu.memory_space<vmem>>, vector<30x32xf32>
    %cst = arith.constant dense<0.000000e+00> : vector<8x32xf32>
    %21 = tpu.matmul %4, %20, %cst {dimension_numbers = #tpu.dot_dimension_numbers<[1], [0], [0], [1], [0, 0, 1, 1], [], []>} : vector<8x30xf32>, vector<30x32xf32>, vector<8x32xf32> -> vector<8x32xf32>
    %c0_14 = arith.constant 0 : index
    %c0_15 = arith.constant 0 : index
    %22 = vector.load %arg9[%c0_14, %c0_15] : memref<16x32xf32, #tpu.memory_space<vmem>>, vector<16x32xf32>
    %cst_16 = arith.constant dense<0.000000e+00> : vector<8x32xf32>
    %23 = tpu.matmul %15, %22, %cst_16 {dimension_numbers = #tpu.dot_dimension_numbers<[1], [0], [0], [1], [0, 0, 1, 1], [], []>} : vector<8x16xf32>, vector<16x32xf32>, vector<8x32xf32> -> vector<8x32xf32>
    %24 = arith.addf %21, %23 : vector<8x32xf32>
    %c0_17 = arith.constant 0 : index
    %c0_18 = arith.constant 0 : index
    %25 = vector.load %arg10[%c0_17, %c0_18] : memref<16x32xf32, #tpu.memory_space<vmem>>, vector<16x32xf32>
    %cst_19 = arith.constant dense<0.000000e+00> : vector<8x32xf32>
    %26 = tpu.matmul %19, %25, %cst_19 {dimension_numbers = #tpu.dot_dimension_numbers<[1], [0], [0], [1], [0, 0, 1, 1], [], []>} : vector<8x16xf32>, vector<16x32xf32>, vector<8x32xf32> -> vector<8x32xf32>
    %27 = arith.addf %24, %26 : vector<8x32xf32>
    %cst_20 = arith.constant 1.000000e+00 : f32
    %28 = vector.broadcast %cst_20 : f32 to vector<1x8xf32>
    %29 = arith.subf %28, %10 : vector<1x8xf32>
    %cst_21 = arith.constant -1.000000e+09 : f32
    %30 = vector.broadcast %cst_21 : f32 to vector<1x8xf32>
    %31 = arith.mulf %29, %30 : vector<1x8xf32>
    %32 = arith.mulf %27, %27 : vector<8x32xf32>
    %cst_22 = arith.constant dense<0.000000e+00> : vector<8xf32>
    %33 = vector.multi_reduction <add>, %32, %cst_22 [1] : vector<8x32xf32> to vector<8xf32>
    %34 = vector.shape_cast %33 : vector<8xf32> to vector<8x1xf32>
    %cst_23 = arith.constant 3.200000e+01 : f32
    %35 = vector.broadcast %cst_23 : f32 to vector<8x1xf32>
    %36 = arith.divf %34, %35 : vector<8x1xf32>
    %cst_24 = arith.constant 9.99999997E-7 : f32
    %37 = vector.broadcast %cst_24 : f32 to vector<8x1xf32>
    %38 = arith.addf %36, %37 : vector<8x1xf32>
    %39 = math.rsqrt %38 : vector<8x1xf32>
    %40 = vector.broadcast %39 : vector<8x1xf32> to vector<8x32xf32>
    %41 = arith.mulf %27, %40 : vector<8x32xf32>
    %c0_25 = arith.constant 0 : index
    %c0_26 = arith.constant 0 : index
    %42 = vector.load %arg11[%c0_25, %c0_26] : memref<1x32xf32, #tpu.memory_space<vmem>>, vector<1x32xf32>
    %43 = vector.broadcast %42 : vector<1x32xf32> to vector<8x32xf32>
    %44 = arith.mulf %41, %43 : vector<8x32xf32>
    %c0_27 = arith.constant 0 : index
    %c0_28 = arith.constant 0 : index
    %45 = vector.load %arg12[%c0_27, %c0_28] : memref<32x96xf32, #tpu.memory_space<vmem>>, vector<32x96xf32>
    %cst_29 = arith.constant dense<0.000000e+00> : vector<8x96xf32>
    %46 = tpu.matmul %44, %45, %cst_29 {dimension_numbers = #tpu.dot_dimension_numbers<[1], [0], [0], [1], [0, 0, 1, 1], [], []>} : vector<8x32xf32>, vector<32x96xf32>, vector<8x96xf32> -> vector<8x96xf32>
    %47 = vector.extract_strided_slice %46 {offsets = [0, 0], sizes = [8, 32], strides = [1, 1]} : vector<8x96xf32> to vector<8x32xf32>
    %48 = vector.extract_strided_slice %46 {offsets = [0, 32], sizes = [8, 32], strides = [1, 1]} : vector<8x96xf32> to vector<8x32xf32>
    %49 = vector.extract_strided_slice %46 {offsets = [0, 64], sizes = [8, 32], strides = [1, 1]} : vector<8x96xf32> to vector<8x32xf32>
    %50 = vector.extract_strided_slice %47 {offsets = [0, 0], sizes = [8, 16], strides = [1, 1]} : vector<8x32xf32> to vector<8x16xf32>
    %51 = vector.extract_strided_slice %48 {offsets = [0, 0], sizes = [8, 16], strides = [1, 1]} : vector<8x32xf32> to vector<8x16xf32>
    %cst_30 = arith.constant dense<0.000000e+00> : vector<8x8xf32>
    %52 = tpu.matmul %50, %51, %cst_30 {dimension_numbers = #tpu.dot_dimension_numbers<[1], [1], [0], [0], [0, 0, 1, 0], [], []>} : vector<8x16xf32>, vector<8x16xf32>, vector<8x8xf32> -> vector<8x8xf32>
    %53 = vector.broadcast %31 : vector<1x8xf32> to vector<8x8xf32>
    %54 = arith.addf %52, %53 : vector<8x8xf32>
    %cst_31 = arith.constant dense<0xFF800000> : vector<8xf32>
    %55 = vector.multi_reduction <maximumf>, %54, %cst_31 [1] : vector<8x8xf32> to vector<8xf32>
    %56 = vector.shape_cast %55 : vector<8xf32> to vector<8x1xf32>
    %57 = vector.broadcast %56 : vector<8x1xf32> to vector<8x8xf32>
    %58 = arith.subf %54, %57 : vector<8x8xf32>
    %59 = math.exp %58 : vector<8x8xf32>
    %cst_32 = arith.constant dense<0.000000e+00> : vector<8xf32>
    %60 = vector.multi_reduction <add>, %59, %cst_32 [1] : vector<8x8xf32> to vector<8xf32>
    %61 = vector.shape_cast %60 : vector<8xf32> to vector<8x1xf32>
    %62 = vector.broadcast %61 : vector<8x1xf32> to vector<8x8xf32>
    %63 = arith.divf %59, %62 : vector<8x8xf32>
    %64 = vector.extract_strided_slice %49 {offsets = [0, 0], sizes = [8, 16], strides = [1, 1]} : vector<8x32xf32> to vector<8x16xf32>
    %cst_33 = arith.constant dense<0.000000e+00> : vector<8x16xf32>
    %65 = tpu.matmul %63, %64, %cst_33 {dimension_numbers = #tpu.dot_dimension_numbers<[1], [0], [0], [1], [0, 0, 1, 1], [], []>} : vector<8x8xf32>, vector<8x16xf32>, vector<8x16xf32> -> vector<8x16xf32>
    %c0_34 = arith.constant 0 : index
    %c0_35 = arith.constant 0 : index
    %66 = vector.load %arg13[%c0_34, %c0_35] : memref<32x32xf32, #tpu.memory_space<vmem>>, vector<16x32xf32>
    %cst_36 = arith.constant dense<0.000000e+00> : vector<8x32xf32>
    %67 = tpu.matmul %65, %66, %cst_36 {dimension_numbers = #tpu.dot_dimension_numbers<[1], [0], [0], [1], [0, 0, 1, 1], [], []>} : vector<8x16xf32>, vector<16x32xf32>, vector<8x32xf32> -> vector<8x32xf32>
    %68 = vector.extract_strided_slice %47 {offsets = [0, 16], sizes = [8, 16], strides = [1, 1]} : vector<8x32xf32> to vector<8x16xf32>
    %69 = vector.extract_strided_slice %48 {offsets = [0, 16], sizes = [8, 16], strides = [1, 1]} : vector<8x32xf32> to vector<8x16xf32>
    %cst_37 = arith.constant dense<0.000000e+00> : vector<8x8xf32>
    %70 = tpu.matmul %68, %69, %cst_37 {dimension_numbers = #tpu.dot_dimension_numbers<[1], [1], [0], [0], [0, 0, 1, 0], [], []>} : vector<8x16xf32>, vector<8x16xf32>, vector<8x8xf32> -> vector<8x8xf32>
    %71 = vector.broadcast %31 : vector<1x8xf32> to vector<8x8xf32>
    %72 = arith.addf %70, %71 : vector<8x8xf32>
    %cst_38 = arith.constant dense<0xFF800000> : vector<8xf32>
    %73 = vector.multi_reduction <maximumf>, %72, %cst_38 [1] : vector<8x8xf32> to vector<8xf32>
    %74 = vector.shape_cast %73 : vector<8xf32> to vector<8x1xf32>
    %75 = vector.broadcast %74 : vector<8x1xf32> to vector<8x8xf32>
    %76 = arith.subf %72, %75 : vector<8x8xf32>
    %77 = math.exp %76 : vector<8x8xf32>
    %cst_39 = arith.constant dense<0.000000e+00> : vector<8xf32>
    %78 = vector.multi_reduction <add>, %77, %cst_39 [1] : vector<8x8xf32> to vector<8xf32>
    %79 = vector.shape_cast %78 : vector<8xf32> to vector<8x1xf32>
    %80 = vector.broadcast %79 : vector<8x1xf32> to vector<8x8xf32>
    %81 = arith.divf %77, %80 : vector<8x8xf32>
    %82 = vector.extract_strided_slice %49 {offsets = [0, 16], sizes = [8, 16], strides = [1, 1]} : vector<8x32xf32> to vector<8x16xf32>
    %cst_40 = arith.constant dense<0.000000e+00> : vector<8x16xf32>
    %83 = tpu.matmul %81, %82, %cst_40 {dimension_numbers = #tpu.dot_dimension_numbers<[1], [0], [0], [1], [0, 0, 1, 1], [], []>} : vector<8x8xf32>, vector<8x16xf32>, vector<8x16xf32> -> vector<8x16xf32>
    %c16 = arith.constant 16 : index
    %c0_41 = arith.constant 0 : index
    %84 = vector.load %arg13[%c16, %c0_41] : memref<32x32xf32, #tpu.memory_space<vmem>>, vector<16x32xf32>
    %cst_42 = arith.constant dense<0.000000e+00> : vector<8x32xf32>
    %85 = tpu.matmul %83, %84, %cst_42 {dimension_numbers = #tpu.dot_dimension_numbers<[1], [0], [0], [1], [0, 0, 1, 1], [], []>} : vector<8x16xf32>, vector<16x32xf32>, vector<8x32xf32> -> vector<8x32xf32>
    %86 = arith.addf %67, %85 : vector<8x32xf32>
    %87 = arith.addf %27, %86 : vector<8x32xf32>
    %88 = arith.mulf %87, %87 : vector<8x32xf32>
    %cst_43 = arith.constant dense<0.000000e+00> : vector<8xf32>
    %89 = vector.multi_reduction <add>, %88, %cst_43 [1] : vector<8x32xf32> to vector<8xf32>
    %90 = vector.shape_cast %89 : vector<8xf32> to vector<8x1xf32>
    %cst_44 = arith.constant 3.200000e+01 : f32
    %91 = vector.broadcast %cst_44 : f32 to vector<8x1xf32>
    %92 = arith.divf %90, %91 : vector<8x1xf32>
    %cst_45 = arith.constant 9.99999997E-7 : f32
    %93 = vector.broadcast %cst_45 : f32 to vector<8x1xf32>
    %94 = arith.addf %92, %93 : vector<8x1xf32>
    %95 = math.rsqrt %94 : vector<8x1xf32>
    %96 = vector.broadcast %95 : vector<8x1xf32> to vector<8x32xf32>
    %97 = arith.mulf %87, %96 : vector<8x32xf32>
    %c0_46 = arith.constant 0 : index
    %c0_47 = arith.constant 0 : index
    %98 = vector.load %arg14[%c0_46, %c0_47] : memref<1x32xf32, #tpu.memory_space<vmem>>, vector<1x32xf32>
    %99 = vector.broadcast %98 : vector<1x32xf32> to vector<8x32xf32>
    %100 = arith.mulf %97, %99 : vector<8x32xf32>
    %c0_48 = arith.constant 0 : index
    %c0_49 = arith.constant 0 : index
    %101 = vector.load %arg15[%c0_48, %c0_49] : memref<32x128xf32, #tpu.memory_space<vmem>>, vector<32x128xf32>
    %cst_50 = arith.constant dense<0.000000e+00> : vector<8x128xf32>
    %102 = tpu.matmul %100, %101, %cst_50 {dimension_numbers = #tpu.dot_dimension_numbers<[1], [0], [0], [1], [0, 0, 1, 1], [], []>} : vector<8x32xf32>, vector<32x128xf32>, vector<8x128xf32> -> vector<8x128xf32>
    %103 = vector.extract_strided_slice %102 {offsets = [0, 0], sizes = [8, 64], strides = [1, 1]} : vector<8x128xf32> to vector<8x64xf32>
    %104 = arith.mulf %103, %103 : vector<8x64xf32>
    %105 = arith.mulf %103, %104 : vector<8x64xf32>
    %cst_51 = arith.constant 4.471500e-02 : f32
    %106 = vector.broadcast %cst_51 : f32 to vector<8x64xf32>
    %107 = arith.mulf %106, %105 : vector<8x64xf32>
    %108 = arith.addf %103, %107 : vector<8x64xf32>
    %cst_52 = arith.constant 0.797884583 : f32
    %109 = vector.broadcast %cst_52 : f32 to vector<8x64xf32>
    %110 = arith.mulf %109, %108 : vector<8x64xf32>
    %111 = math.tanh %110 : vector<8x64xf32>
    %cst_53 = arith.constant 1.000000e+00 : f32
    %112 = vector.broadcast %cst_53 : f32 to vector<8x64xf32>
    %113 = arith.addf %112, %111 : vector<8x64xf32>
    %cst_54 = arith.constant 5.000000e-01 : f32
    %114 = vector.broadcast %cst_54 : f32 to vector<8x64xf32>
    %115 = arith.mulf %114, %113 : vector<8x64xf32>
    %116 = arith.mulf %103, %115 : vector<8x64xf32>
    %117 = vector.extract_strided_slice %102 {offsets = [0, 64], sizes = [8, 64], strides = [1, 1]} : vector<8x128xf32> to vector<8x64xf32>
    %118 = arith.mulf %116, %117 : vector<8x64xf32>
    %c0_55 = arith.constant 0 : index
    %c0_56 = arith.constant 0 : index
    %119 = vector.load %arg16[%c0_55, %c0_56] : memref<64x32xf32, #tpu.memory_space<vmem>>, vector<64x32xf32>
    %cst_57 = arith.constant dense<0.000000e+00> : vector<8x32xf32>
    %120 = tpu.matmul %118, %119, %cst_57 {dimension_numbers = #tpu.dot_dimension_numbers<[1], [0], [0], [1], [0, 0, 1, 1], [], []>} : vector<8x64xf32>, vector<64x32xf32>, vector<8x32xf32> -> vector<8x32xf32>
    %121 = arith.addf %87, %120 : vector<8x32xf32>
    %122 = arith.mulf %121, %121 : vector<8x32xf32>
    %cst_58 = arith.constant dense<0.000000e+00> : vector<8xf32>
    %123 = vector.multi_reduction <add>, %122, %cst_58 [1] : vector<8x32xf32> to vector<8xf32>
    %124 = vector.shape_cast %123 : vector<8xf32> to vector<8x1xf32>
    %cst_59 = arith.constant 3.200000e+01 : f32
    %125 = vector.broadcast %cst_59 : f32 to vector<8x1xf32>
    %126 = arith.divf %124, %125 : vector<8x1xf32>
    %cst_60 = arith.constant 9.99999997E-7 : f32
    %127 = vector.broadcast %cst_60 : f32 to vector<8x1xf32>
    %128 = arith.addf %126, %127 : vector<8x1xf32>
    %129 = math.rsqrt %128 : vector<8x1xf32>
    %130 = vector.broadcast %129 : vector<8x1xf32> to vector<8x32xf32>
    %131 = arith.mulf %121, %130 : vector<8x32xf32>
    %c0_61 = arith.constant 0 : index
    %c0_62 = arith.constant 0 : index
    %132 = vector.load %arg17[%c0_61, %c0_62] : memref<1x32xf32, #tpu.memory_space<vmem>>, vector<1x32xf32>
    %133 = vector.broadcast %132 : vector<1x32xf32> to vector<8x32xf32>
    %134 = arith.mulf %131, %133 : vector<8x32xf32>
    %c0_63 = arith.constant 0 : index
    %c0_64 = arith.constant 0 : index
    %c0_65 = arith.constant 0 : index
    %135 = vector.load %arg5[%c0_63, %c0_64, %c0_65] : memref<1x8x1xi32, #tpu.memory_space<vmem>>, vector<1x8x1xi32>
    %136 = vector.shape_cast %135 : vector<1x8x1xi32> to vector<8x1xi32>
    %c0_66 = arith.constant 0 : index
    %c0_67 = arith.constant 0 : index
    %c0_68 = arith.constant 0 : index
    %137 = vector.load %arg6[%c0_66, %c0_67, %c0_68] : memref<1x1x8xf32, #tpu.memory_space<vmem>>, vector<1x1x8xf32>
    %138 = vector.shape_cast %137 : vector<1x1x8xf32> to vector<1x8xf32>
    %c0_69 = arith.constant 0 : index
    %c0_70 = arith.constant 0 : index
    %c0_71 = arith.constant 0 : index
    %139 = vector.load %arg7[%c0_69, %c0_70, %c0_71] : memref<1x8x1xi32, #tpu.memory_space<vmem>>, vector<1x8x1xi32>
    %140 = vector.shape_cast %139 : vector<1x8x1xi32> to vector<8x1xi32>
    %141 = tpu.iota {dimensions = array<i32: 1>} : vector<8x64xi32>
    %142 = vector.broadcast %136 : vector<8x1xi32> to vector<8x64xi32>
    %143 = arith.cmpi eq, %141, %142 : vector<8x64xi32>
    %144 = arith.extui %143 : vector<8x64xi1> to vector<8x64xi32>
    %145 = arith.sitofp %144 : vector<8x64xi32> to vector<8x64xf32>
    %c0_72 = arith.constant 0 : index
    %c0_73 = arith.constant 0 : index
    %146 = vector.load %arg18[%c0_72, %c0_73] : memref<64x32xf32, #tpu.memory_space<vmem>>, vector<64x32xf32>
    %cst_74 = arith.constant dense<0.000000e+00> : vector<8x32xf32>
    %147 = tpu.matmul %145, %146, %cst_74 {dimension_numbers = #tpu.dot_dimension_numbers<[1], [0], [0], [1], [0, 0, 1, 1], [], []>} : vector<8x64xf32>, vector<64x32xf32>, vector<8x32xf32> -> vector<8x32xf32>
    %cst_75 = arith.constant 1.000000e+00 : f32
    %148 = vector.broadcast %cst_75 : f32 to vector<1x8xf32>
    %149 = arith.subf %148, %138 : vector<1x8xf32>
    %cst_76 = arith.constant -1.000000e+09 : f32
    %150 = vector.broadcast %cst_76 : f32 to vector<1x8xf32>
    %151 = arith.mulf %149, %150 : vector<1x8xf32>
    %152 = arith.mulf %147, %147 : vector<8x32xf32>
    %cst_77 = arith.constant dense<0.000000e+00> : vector<8xf32>
    %153 = vector.multi_reduction <add>, %152, %cst_77 [1] : vector<8x32xf32> to vector<8xf32>
    %154 = vector.shape_cast %153 : vector<8xf32> to vector<8x1xf32>
    %cst_78 = arith.constant 3.200000e+01 : f32
    %155 = vector.broadcast %cst_78 : f32 to vector<8x1xf32>
    %156 = arith.divf %154, %155 : vector<8x1xf32>
    %cst_79 = arith.constant 9.99999997E-7 : f32
    %157 = vector.broadcast %cst_79 : f32 to vector<8x1xf32>
    %158 = arith.addf %156, %157 : vector<8x1xf32>
    %159 = math.rsqrt %158 : vector<8x1xf32>
    %160 = vector.broadcast %159 : vector<8x1xf32> to vector<8x32xf32>
    %161 = arith.mulf %147, %160 : vector<8x32xf32>
    %c0_80 = arith.constant 0 : index
    %c0_81 = arith.constant 0 : index
    %162 = vector.load %arg20[%c0_80, %c0_81] : memref<1x32xf32, #tpu.memory_space<vmem>>, vector<1x32xf32>
    %163 = vector.broadcast %162 : vector<1x32xf32> to vector<8x32xf32>
    %164 = arith.mulf %161, %163 : vector<8x32xf32>
    %c0_82 = arith.constant 0 : index
    %c0_83 = arith.constant 0 : index
    %165 = vector.load %arg21[%c0_82, %c0_83] : memref<32x96xf32, #tpu.memory_space<vmem>>, vector<32x96xf32>
    %cst_84 = arith.constant dense<0.000000e+00> : vector<8x96xf32>
    %166 = tpu.matmul %164, %165, %cst_84 {dimension_numbers = #tpu.dot_dimension_numbers<[1], [0], [0], [1], [0, 0, 1, 1], [], []>} : vector<8x32xf32>, vector<32x96xf32>, vector<8x96xf32> -> vector<8x96xf32>
    %167 = vector.extract_strided_slice %166 {offsets = [0, 0], sizes = [8, 32], strides = [1, 1]} : vector<8x96xf32> to vector<8x32xf32>
    %168 = vector.extract_strided_slice %166 {offsets = [0, 32], sizes = [8, 32], strides = [1, 1]} : vector<8x96xf32> to vector<8x32xf32>
    %169 = vector.extract_strided_slice %166 {offsets = [0, 64], sizes = [8, 32], strides = [1, 1]} : vector<8x96xf32> to vector<8x32xf32>
    %170 = vector.extract_strided_slice %167 {offsets = [0, 0], sizes = [8, 16], strides = [1, 1]} : vector<8x32xf32> to vector<8x16xf32>
    %171 = vector.extract_strided_slice %168 {offsets = [0, 0], sizes = [8, 16], strides = [1, 1]} : vector<8x32xf32> to vector<8x16xf32>
    %cst_85 = arith.constant dense<0.000000e+00> : vector<8x8xf32>
    %172 = tpu.matmul %170, %171, %cst_85 {dimension_numbers = #tpu.dot_dimension_numbers<[1], [1], [0], [0], [0, 0, 1, 0], [], []>} : vector<8x16xf32>, vector<8x16xf32>, vector<8x8xf32> -> vector<8x8xf32>
    %173 = vector.broadcast %151 : vector<1x8xf32> to vector<8x8xf32>
    %174 = arith.addf %172, %173 : vector<8x8xf32>
    %c0_86 = arith.constant 0 : index
    %c0_87 = arith.constant 0 : index
    %c0_88 = arith.constant 0 : index
    %175 = vector.load %arg19[%c0_86, %c0_87, %c0_88] : memref<2x8x8xf32, #tpu.memory_space<vmem>>, vector<1x8x8xf32>
    %176 = vector.shape_cast %175 : vector<1x8x8xf32> to vector<8x8xf32>
    %177 = arith.addf %174, %176 : vector<8x8xf32>
    %cst_89 = arith.constant dense<0xFF800000> : vector<8xf32>
    %178 = vector.multi_reduction <maximumf>, %177, %cst_89 [1] : vector<8x8xf32> to vector<8xf32>
    %179 = vector.shape_cast %178 : vector<8xf32> to vector<8x1xf32>
    %180 = vector.broadcast %179 : vector<8x1xf32> to vector<8x8xf32>
    %181 = arith.subf %177, %180 : vector<8x8xf32>
    %182 = math.exp %181 : vector<8x8xf32>
    %cst_90 = arith.constant dense<0.000000e+00> : vector<8xf32>
    %183 = vector.multi_reduction <add>, %182, %cst_90 [1] : vector<8x8xf32> to vector<8xf32>
    %184 = vector.shape_cast %183 : vector<8xf32> to vector<8x1xf32>
    %185 = vector.broadcast %184 : vector<8x1xf32> to vector<8x8xf32>
    %186 = arith.divf %182, %185 : vector<8x8xf32>
    %187 = vector.extract_strided_slice %169 {offsets = [0, 0], sizes = [8, 16], strides = [1, 1]} : vector<8x32xf32> to vector<8x16xf32>
    %cst_91 = arith.constant dense<0.000000e+00> : vector<8x16xf32>
    %188 = tpu.matmul %186, %187, %cst_91 {dimension_numbers = #tpu.dot_dimension_numbers<[1], [0], [0], [1], [0, 0, 1, 1], [], []>} : vector<8x8xf32>, vector<8x16xf32>, vector<8x16xf32> -> vector<8x16xf32>
    %c0_92 = arith.constant 0 : index
    %c0_93 = arith.constant 0 : index
    %189 = vector.load %arg22[%c0_92, %c0_93] : memref<32x32xf32, #tpu.memory_space<vmem>>, vector<16x32xf32>
    %cst_94 = arith.constant dense<0.000000e+00> : vector<8x32xf32>
    %190 = tpu.matmul %188, %189, %cst_94 {dimension_numbers = #tpu.dot_dimension_numbers<[1], [0], [0], [1], [0, 0, 1, 1], [], []>} : vector<8x16xf32>, vector<16x32xf32>, vector<8x32xf32> -> vector<8x32xf32>
    %191 = vector.extract_strided_slice %167 {offsets = [0, 16], sizes = [8, 16], strides = [1, 1]} : vector<8x32xf32> to vector<8x16xf32>
    %192 = vector.extract_strided_slice %168 {offsets = [0, 16], sizes = [8, 16], strides = [1, 1]} : vector<8x32xf32> to vector<8x16xf32>
    %cst_95 = arith.constant dense<0.000000e+00> : vector<8x8xf32>
    %193 = tpu.matmul %191, %192, %cst_95 {dimension_numbers = #tpu.dot_dimension_numbers<[1], [1], [0], [0], [0, 0, 1, 0], [], []>} : vector<8x16xf32>, vector<8x16xf32>, vector<8x8xf32> -> vector<8x8xf32>
    %194 = vector.broadcast %151 : vector<1x8xf32> to vector<8x8xf32>
    %195 = arith.addf %193, %194 : vector<8x8xf32>
    %c1 = arith.constant 1 : index
    %c0_96 = arith.constant 0 : index
    %c0_97 = arith.constant 0 : index
    %196 = vector.load %arg19[%c1, %c0_96, %c0_97] : memref<2x8x8xf32, #tpu.memory_space<vmem>>, vector<1x8x8xf32>
    %197 = vector.shape_cast %196 : vector<1x8x8xf32> to vector<8x8xf32>
    %198 = arith.addf %195, %197 : vector<8x8xf32>
    %cst_98 = arith.constant dense<0xFF800000> : vector<8xf32>
    %199 = vector.multi_reduction <maximumf>, %198, %cst_98 [1] : vector<8x8xf32> to vector<8xf32>
    %200 = vector.shape_cast %199 : vector<8xf32> to vector<8x1xf32>
    %201 = vector.broadcast %200 : vector<8x1xf32> to vector<8x8xf32>
    %202 = arith.subf %198, %201 : vector<8x8xf32>
    %203 = math.exp %202 : vector<8x8xf32>
    %cst_99 = arith.constant dense<0.000000e+00> : vector<8xf32>
    %204 = vector.multi_reduction <add>, %203, %cst_99 [1] : vector<8x8xf32> to vector<8xf32>
    %205 = vector.shape_cast %204 : vector<8xf32> to vector<8x1xf32>
    %206 = vector.broadcast %205 : vector<8x1xf32> to vector<8x8xf32>
    %207 = arith.divf %203, %206 : vector<8x8xf32>
    %208 = vector.extract_strided_slice %169 {offsets = [0, 16], sizes = [8, 16], strides = [1, 1]} : vector<8x32xf32> to vector<8x16xf32>
    %cst_100 = arith.constant dense<0.000000e+00> : vector<8x16xf32>
    %209 = tpu.matmul %207, %208, %cst_100 {dimension_numbers = #tpu.dot_dimension_numbers<[1], [0], [0], [1], [0, 0, 1, 1], [], []>} : vector<8x8xf32>, vector<8x16xf32>, vector<8x16xf32> -> vector<8x16xf32>
    %c16_101 = arith.constant 16 : index
    %c0_102 = arith.constant 0 : index
    %210 = vector.load %arg22[%c16_101, %c0_102] : memref<32x32xf32, #tpu.memory_space<vmem>>, vector<16x32xf32>
    %cst_103 = arith.constant dense<0.000000e+00> : vector<8x32xf32>
    %211 = tpu.matmul %209, %210, %cst_103 {dimension_numbers = #tpu.dot_dimension_numbers<[1], [0], [0], [1], [0, 0, 1, 1], [], []>} : vector<8x16xf32>, vector<16x32xf32>, vector<8x32xf32> -> vector<8x32xf32>
    %212 = arith.addf %190, %211 : vector<8x32xf32>
    %213 = arith.addf %147, %212 : vector<8x32xf32>
    %214 = arith.mulf %213, %213 : vector<8x32xf32>
    %cst_104 = arith.constant dense<0.000000e+00> : vector<8xf32>
    %215 = vector.multi_reduction <add>, %214, %cst_104 [1] : vector<8x32xf32> to vector<8xf32>
    %216 = vector.shape_cast %215 : vector<8xf32> to vector<8x1xf32>
    %cst_105 = arith.constant 3.200000e+01 : f32
    %217 = vector.broadcast %cst_105 : f32 to vector<8x1xf32>
    %218 = arith.divf %216, %217 : vector<8x1xf32>
    %cst_106 = arith.constant 9.99999997E-7 : f32
    %219 = vector.broadcast %cst_106 : f32 to vector<8x1xf32>
    %220 = arith.addf %218, %219 : vector<8x1xf32>
    %221 = math.rsqrt %220 : vector<8x1xf32>
    %222 = vector.broadcast %221 : vector<8x1xf32> to vector<8x32xf32>
    %223 = arith.mulf %213, %222 : vector<8x32xf32>
    %c0_107 = arith.constant 0 : index
    %c0_108 = arith.constant 0 : index
    %224 = vector.load %arg23[%c0_107, %c0_108] : memref<1x32xf32, #tpu.memory_space<vmem>>, vector<1x32xf32>
    %225 = vector.broadcast %224 : vector<1x32xf32> to vector<8x32xf32>
    %226 = arith.mulf %223, %225 : vector<8x32xf32>
    %c0_109 = arith.constant 0 : index
    %c0_110 = arith.constant 0 : index
    %227 = vector.load %arg24[%c0_109, %c0_110] : memref<32x32xf32, #tpu.memory_space<vmem>>, vector<32x32xf32>
    %cst_111 = arith.constant dense<0.000000e+00> : vector<8x32xf32>
    %228 = tpu.matmul %226, %227, %cst_111 {dimension_numbers = #tpu.dot_dimension_numbers<[1], [0], [0], [1], [0, 0, 1, 1], [], []>} : vector<8x32xf32>, vector<32x32xf32>, vector<8x32xf32> -> vector<8x32xf32>
    %c0_112 = arith.constant 0 : index
    %c0_113 = arith.constant 0 : index
    %229 = vector.load %arg25[%c0_112, %c0_113] : memref<32x64xf32, #tpu.memory_space<vmem>>, vector<32x64xf32>
    %cst_114 = arith.constant dense<0.000000e+00> : vector<8x64xf32>
    %230 = tpu.matmul %134, %229, %cst_114 {dimension_numbers = #tpu.dot_dimension_numbers<[1], [0], [0], [1], [0, 0, 1, 1], [], []>} : vector<8x32xf32>, vector<32x64xf32>, vector<8x64xf32> -> vector<8x64xf32>
    %231 = vector.extract_strided_slice %230 {offsets = [0, 0], sizes = [8, 32], strides = [1, 1]} : vector<8x64xf32> to vector<8x32xf32>
    %232 = vector.extract_strided_slice %230 {offsets = [0, 32], sizes = [8, 32], strides = [1, 1]} : vector<8x64xf32> to vector<8x32xf32>
    %233 = vector.extract_strided_slice %228 {offsets = [0, 0], sizes = [8, 16], strides = [1, 1]} : vector<8x32xf32> to vector<8x16xf32>
    %234 = vector.extract_strided_slice %231 {offsets = [0, 0], sizes = [8, 16], strides = [1, 1]} : vector<8x32xf32> to vector<8x16xf32>
    %cst_115 = arith.constant dense<0.000000e+00> : vector<8x8xf32>
    %235 = tpu.matmul %233, %234, %cst_115 {dimension_numbers = #tpu.dot_dimension_numbers<[1], [1], [0], [0], [0, 0, 1, 0], [], []>} : vector<8x16xf32>, vector<8x16xf32>, vector<8x8xf32> -> vector<8x8xf32>
    %236 = vector.broadcast %31 : vector<1x8xf32> to vector<8x8xf32>
    %237 = arith.addf %235, %236 : vector<8x8xf32>
    %cst_116 = arith.constant dense<0xFF800000> : vector<8xf32>
    %238 = vector.multi_reduction <maximumf>, %237, %cst_116 [1] : vector<8x8xf32> to vector<8xf32>
    %239 = vector.shape_cast %238 : vector<8xf32> to vector<8x1xf32>
    %240 = vector.broadcast %239 : vector<8x1xf32> to vector<8x8xf32>
    %241 = arith.subf %237, %240 : vector<8x8xf32>
    %242 = math.exp %241 : vector<8x8xf32>
    %cst_117 = arith.constant dense<0.000000e+00> : vector<8xf32>
    %243 = vector.multi_reduction <add>, %242, %cst_117 [1] : vector<8x8xf32> to vector<8xf32>
    %244 = vector.shape_cast %243 : vector<8xf32> to vector<8x1xf32>
    %245 = vector.broadcast %244 : vector<8x1xf32> to vector<8x8xf32>
    %246 = arith.divf %242, %245 : vector<8x8xf32>
    %247 = vector.extract_strided_slice %232 {offsets = [0, 0], sizes = [8, 16], strides = [1, 1]} : vector<8x32xf32> to vector<8x16xf32>
    %cst_118 = arith.constant dense<0.000000e+00> : vector<8x16xf32>
    %248 = tpu.matmul %246, %247, %cst_118 {dimension_numbers = #tpu.dot_dimension_numbers<[1], [0], [0], [1], [0, 0, 1, 1], [], []>} : vector<8x8xf32>, vector<8x16xf32>, vector<8x16xf32> -> vector<8x16xf32>
    %c0_119 = arith.constant 0 : index
    %c0_120 = arith.constant 0 : index
    %249 = vector.load %arg26[%c0_119, %c0_120] : memref<32x32xf32, #tpu.memory_space<vmem>>, vector<16x32xf32>
    %cst_121 = arith.constant dense<0.000000e+00> : vector<8x32xf32>
    %250 = tpu.matmul %248, %249, %cst_121 {dimension_numbers = #tpu.dot_dimension_numbers<[1], [0], [0], [1], [0, 0, 1, 1], [], []>} : vector<8x16xf32>, vector<16x32xf32>, vector<8x32xf32> -> vector<8x32xf32>
    %251 = vector.extract_strided_slice %228 {offsets = [0, 16], sizes = [8, 16], strides = [1, 1]} : vector<8x32xf32> to vector<8x16xf32>
    %252 = vector.extract_strided_slice %231 {offsets = [0, 16], sizes = [8, 16], strides = [1, 1]} : vector<8x32xf32> to vector<8x16xf32>
    %cst_122 = arith.constant dense<0.000000e+00> : vector<8x8xf32>
    %253 = tpu.matmul %251, %252, %cst_122 {dimension_numbers = #tpu.dot_dimension_numbers<[1], [1], [0], [0], [0, 0, 1, 0], [], []>} : vector<8x16xf32>, vector<8x16xf32>, vector<8x8xf32> -> vector<8x8xf32>
    %254 = vector.broadcast %31 : vector<1x8xf32> to vector<8x8xf32>
    %255 = arith.addf %253, %254 : vector<8x8xf32>
    %cst_123 = arith.constant dense<0xFF800000> : vector<8xf32>
    %256 = vector.multi_reduction <maximumf>, %255, %cst_123 [1] : vector<8x8xf32> to vector<8xf32>
    %257 = vector.shape_cast %256 : vector<8xf32> to vector<8x1xf32>
    %258 = vector.broadcast %257 : vector<8x1xf32> to vector<8x8xf32>
    %259 = arith.subf %255, %258 : vector<8x8xf32>
    %260 = math.exp %259 : vector<8x8xf32>
    %cst_124 = arith.constant dense<0.000000e+00> : vector<8xf32>
    %261 = vector.multi_reduction <add>, %260, %cst_124 [1] : vector<8x8xf32> to vector<8xf32>
    %262 = vector.shape_cast %261 : vector<8xf32> to vector<8x1xf32>
    %263 = vector.broadcast %262 : vector<8x1xf32> to vector<8x8xf32>
    %264 = arith.divf %260, %263 : vector<8x8xf32>
    %265 = vector.extract_strided_slice %232 {offsets = [0, 16], sizes = [8, 16], strides = [1, 1]} : vector<8x32xf32> to vector<8x16xf32>
    %cst_125 = arith.constant dense<0.000000e+00> : vector<8x16xf32>
    %266 = tpu.matmul %264, %265, %cst_125 {dimension_numbers = #tpu.dot_dimension_numbers<[1], [0], [0], [1], [0, 0, 1, 1], [], []>} : vector<8x8xf32>, vector<8x16xf32>, vector<8x16xf32> -> vector<8x16xf32>
    %c16_126 = arith.constant 16 : index
    %c0_127 = arith.constant 0 : index
    %267 = vector.load %arg26[%c16_126, %c0_127] : memref<32x32xf32, #tpu.memory_space<vmem>>, vector<16x32xf32>
    %cst_128 = arith.constant dense<0.000000e+00> : vector<8x32xf32>
    %268 = tpu.matmul %266, %267, %cst_128 {dimension_numbers = #tpu.dot_dimension_numbers<[1], [0], [0], [1], [0, 0, 1, 1], [], []>} : vector<8x16xf32>, vector<16x32xf32>, vector<8x32xf32> -> vector<8x32xf32>
    %269 = arith.addf %250, %268 : vector<8x32xf32>
    %270 = arith.addf %213, %269 : vector<8x32xf32>
    %271 = arith.mulf %270, %270 : vector<8x32xf32>
    %cst_129 = arith.constant dense<0.000000e+00> : vector<8xf32>
    %272 = vector.multi_reduction <add>, %271, %cst_129 [1] : vector<8x32xf32> to vector<8xf32>
    %273 = vector.shape_cast %272 : vector<8xf32> to vector<8x1xf32>
    %cst_130 = arith.constant 3.200000e+01 : f32
    %274 = vector.broadcast %cst_130 : f32 to vector<8x1xf32>
    %275 = arith.divf %273, %274 : vector<8x1xf32>
    %cst_131 = arith.constant 9.99999997E-7 : f32
    %276 = vector.broadcast %cst_131 : f32 to vector<8x1xf32>
    %277 = arith.addf %275, %276 : vector<8x1xf32>
    %278 = math.rsqrt %277 : vector<8x1xf32>
    %279 = vector.broadcast %278 : vector<8x1xf32> to vector<8x32xf32>
    %280 = arith.mulf %270, %279 : vector<8x32xf32>
    %c0_132 = arith.constant 0 : index
    %c0_133 = arith.constant 0 : index
    %281 = vector.load %arg27[%c0_132, %c0_133] : memref<1x32xf32, #tpu.memory_space<vmem>>, vector<1x32xf32>
    %282 = vector.broadcast %281 : vector<1x32xf32> to vector<8x32xf32>
    %283 = arith.mulf %280, %282 : vector<8x32xf32>
    %c0_134 = arith.constant 0 : index
    %c0_135 = arith.constant 0 : index
    %284 = vector.load %arg28[%c0_134, %c0_135] : memref<32x128xf32, #tpu.memory_space<vmem>>, vector<32x128xf32>
    %cst_136 = arith.constant dense<0.000000e+00> : vector<8x128xf32>
    %285 = tpu.matmul %283, %284, %cst_136 {dimension_numbers = #tpu.dot_dimension_numbers<[1], [0], [0], [1], [0, 0, 1, 1], [], []>} : vector<8x32xf32>, vector<32x128xf32>, vector<8x128xf32> -> vector<8x128xf32>
    %286 = vector.extract_strided_slice %285 {offsets = [0, 0], sizes = [8, 64], strides = [1, 1]} : vector<8x128xf32> to vector<8x64xf32>
    %287 = arith.mulf %286, %286 : vector<8x64xf32>
    %288 = arith.mulf %286, %287 : vector<8x64xf32>
    %cst_137 = arith.constant 4.471500e-02 : f32
    %289 = vector.broadcast %cst_137 : f32 to vector<8x64xf32>
    %290 = arith.mulf %289, %288 : vector<8x64xf32>
    %291 = arith.addf %286, %290 : vector<8x64xf32>
    %cst_138 = arith.constant 0.797884583 : f32
    %292 = vector.broadcast %cst_138 : f32 to vector<8x64xf32>
    %293 = arith.mulf %292, %291 : vector<8x64xf32>
    %294 = math.tanh %293 : vector<8x64xf32>
    %cst_139 = arith.constant 1.000000e+00 : f32
    %295 = vector.broadcast %cst_139 : f32 to vector<8x64xf32>
    %296 = arith.addf %295, %294 : vector<8x64xf32>
    %cst_140 = arith.constant 5.000000e-01 : f32
    %297 = vector.broadcast %cst_140 : f32 to vector<8x64xf32>
    %298 = arith.mulf %297, %296 : vector<8x64xf32>
    %299 = arith.mulf %286, %298 : vector<8x64xf32>
    %300 = vector.extract_strided_slice %285 {offsets = [0, 64], sizes = [8, 64], strides = [1, 1]} : vector<8x128xf32> to vector<8x64xf32>
    %301 = arith.mulf %299, %300 : vector<8x64xf32>
    %c0_141 = arith.constant 0 : index
    %c0_142 = arith.constant 0 : index
    %302 = vector.load %arg29[%c0_141, %c0_142] : memref<64x32xf32, #tpu.memory_space<vmem>>, vector<64x32xf32>
    %cst_143 = arith.constant dense<0.000000e+00> : vector<8x32xf32>
    %303 = tpu.matmul %301, %302, %cst_143 {dimension_numbers = #tpu.dot_dimension_numbers<[1], [0], [0], [1], [0, 0, 1, 1], [], []>} : vector<8x64xf32>, vector<64x32xf32>, vector<8x32xf32> -> vector<8x32xf32>
    %304 = arith.addf %270, %303 : vector<8x32xf32>
    %305 = arith.mulf %304, %304 : vector<8x32xf32>
    %cst_144 = arith.constant dense<0.000000e+00> : vector<8xf32>
    %306 = vector.multi_reduction <add>, %305, %cst_144 [1] : vector<8x32xf32> to vector<8xf32>
    %307 = vector.shape_cast %306 : vector<8xf32> to vector<8x1xf32>
    %cst_145 = arith.constant 3.200000e+01 : f32
    %308 = vector.broadcast %cst_145 : f32 to vector<8x1xf32>
    %309 = arith.divf %307, %308 : vector<8x1xf32>
    %cst_146 = arith.constant 9.99999997E-7 : f32
    %310 = vector.broadcast %cst_146 : f32 to vector<8x1xf32>
    %311 = arith.addf %309, %310 : vector<8x1xf32>
    %312 = math.rsqrt %311 : vector<8x1xf32>
    %313 = vector.broadcast %312 : vector<8x1xf32> to vector<8x32xf32>
    %314 = arith.mulf %304, %313 : vector<8x32xf32>
    %c0_147 = arith.constant 0 : index
    %c0_148 = arith.constant 0 : index
    %315 = vector.load %arg30[%c0_147, %c0_148] : memref<1x32xf32, #tpu.memory_space<vmem>>, vector<1x32xf32>
    %316 = vector.broadcast %315 : vector<1x32xf32> to vector<8x32xf32>
    %317 = arith.mulf %314, %316 : vector<8x32xf32>
    %c0_149 = arith.constant 0 : index
    %c0_150 = arith.constant 0 : index
    %318 = vector.load %arg31[%c0_149, %c0_150] : memref<32x64xf32, #tpu.memory_space<vmem>>, vector<32x64xf32>
    %cst_151 = arith.constant dense<0.000000e+00> : vector<8x64xf32>
    %319 = tpu.matmul %317, %318, %cst_151 {dimension_numbers = #tpu.dot_dimension_numbers<[1], [0], [0], [1], [0, 0, 1, 1], [], []>} : vector<8x32xf32>, vector<32x64xf32>, vector<8x64xf32> -> vector<8x64xf32>
    %cst_152 = arith.constant dense<0xFF800000> : vector<8xf32>
    %320 = vector.multi_reduction <maximumf>, %319, %cst_152 [1] : vector<8x64xf32> to vector<8xf32>
    %321 = vector.shape_cast %320 : vector<8xf32> to vector<8x1xf32>
    %322 = vector.broadcast %321 : vector<8x1xf32> to vector<8x64xf32>
    %323 = arith.subf %319, %322 : vector<8x64xf32>
    %324 = math.exp %323 : vector<8x64xf32>
    %cst_153 = arith.constant dense<0.000000e+00> : vector<8xf32>
    %325 = vector.multi_reduction <add>, %324, %cst_153 [1] : vector<8x64xf32> to vector<8xf32>
    %326 = vector.shape_cast %325 : vector<8xf32> to vector<8x1xf32>
    %327 = math.log %326 : vector<8x1xf32>
    %328 = arith.addf %327, %321 : vector<8x1xf32>
    %329 = vector.broadcast %140 : vector<8x1xi32> to vector<8x64xi32>
    %330 = arith.cmpi eq, %141, %329 : vector<8x64xi32>
    %cst_154 = arith.constant 0.000000e+00 : f32
    %331 = vector.broadcast %cst_154 : f32 to vector<8x64xf32>
    %332 = arith.select %330, %319, %331 : vector<8x64xi1>, vector<8x64xf32>
    %cst_155 = arith.constant dense<0.000000e+00> : vector<8xf32>
    %333 = vector.multi_reduction <add>, %332, %cst_155 [1] : vector<8x64xf32> to vector<8xf32>
    %334 = vector.shape_cast %333 : vector<8xf32> to vector<8x1xf32>
    %c-100_i32 = arith.constant -100 : i32
    %335 = vector.broadcast %c-100_i32 : i32 to vector<8x1xi32>
    %336 = arith.cmpi ne, %140, %335 : vector<8x1xi32>
    %337 = arith.extui %336 : vector<8x1xi1> to vector<8x1xi32>
    %338 = arith.sitofp %337 : vector<8x1xi32> to vector<8x1xf32>
    %339 = arith.subf %328, %334 : vector<8x1xf32>
    %340 = arith.mulf %339, %338 : vector<8x1xf32>
    %c0_156 = arith.constant 0 : index
    %c0_157 = arith.constant 0 : index
    %341 = vector.load %arg33[%c0_156, %c0_157] : memref<1x1xf32, #tpu.memory_space<vmem>>, vector<1x1xf32>
    %cst_158 = arith.constant dense<0.000000e+00> : vector<1xf32>
    %342 = vector.multi_reduction <add>, %340, %cst_158 [0] : vector<8x1xf32> to vector<1xf32>
    %343 = vector.shape_cast %342 : vector<1xf32> to vector<1x1xf32>
    %344 = arith.addf %341, %343 : vector<1x1xf32>
    %c0_159 = arith.constant 0 : index
    %c0_160 = arith.constant 0 : index
    %345 = vector.load %arg33[%c0_159, %c0_160] : memref<1x1xf32, #tpu.memory_space<vmem>>, vector<1x1xf32>
    tpu.vector_store %arg33[%c0_159, %c0_160], %344 {strides = array<i32>} : memref<1x1xf32, #tpu.memory_space<vmem>>, vector<1x1xf32>,
    %c0_161 = arith.constant 0 : index
    %c0_162 = arith.constant 0 : index
    %346 = vector.load %arg34[%c0_161, %c0_162] : memref<1x1xf32, #tpu.memory_space<vmem>>, vector<1x1xf32>
    %cst_163 = arith.constant dense<0.000000e+00> : vector<1xf32>
    %347 = vector.multi_reduction <add>, %338, %cst_163 [0] : vector<8x1xf32> to vector<1xf32>
    %348 = vector.shape_cast %347 : vector<1xf32> to vector<1x1xf32>
    %349 = arith.addf %346, %348 : vector<1x1xf32>
    %c0_164 = arith.constant 0 : index
    %c0_165 = arith.constant 0 : index
    %350 = vector.load %arg34[%c0_164, %c0_165] : memref<1x1xf32, #tpu.memory_space<vmem>>, vector<1x1xf32>
    tpu.vector_store %arg34[%c0_164, %c0_165], %349 {strides = array<i32>} : memref<1x1xf32, #tpu.memory_space<vmem>>, vector<1x1xf32>,
    %c0_166 = arith.constant 0 : index
    %c0_167 = arith.constant 0 : index
    %351 = vector.load %arg33[%c0_166, %c0_167] : memref<1x1xf32, #tpu.memory_space<vmem>>, vector<1x1xf32>
    %c0_168 = arith.constant 0 : index
    %c0_169 = arith.constant 0 : index
    %352 = vector.load %arg34[%c0_168, %c0_169] : memref<1x1xf32, #tpu.memory_space<vmem>>, vector<1x1xf32>
    %cst_170 = arith.constant 1.000000e+00 : f32
    %353 = vector.broadcast %cst_170 : f32 to vector<1x1xf32>
    %354 = arith.maximumf %352, %353 : vector<1x1xf32>
    %355 = arith.divf %351, %354 : vector<1x1xf32>
    %c0_171 = arith.constant 0 : index
    %c0_172 = arith.constant 0 : index
    %356 = vector.load %arg32[%c0_171, %c0_172] : memref<1x1xf32, #tpu.memory_space<vmem>>, vector<1x1xf32>
    tpu.vector_store %arg32[%c0_171, %c0_172], %355 {strides = array<i32>} : memref<1x1xf32, #tpu.memory_space<vmem>>, vector<1x1xf32>,
    return
  }
  func.func @transform_0(%arg0: i32) -> (i32, i32, i32) {
    %c0_i32 = arith.constant 0 : i32
    %c0_i32_0 = arith.constant 0 : i32
    %c0_i32_1 = arith.constant 0 : i32
    return %arg0, %c0_i32, %c0_i32_0 : i32, i32, i32
  }
  func.func @transform_1(%arg0: i32) -> (i32, i32, i32) {
    %c0_i32 = arith.constant 0 : i32
    %c0_i32_0 = arith.constant 0 : i32
    %c0_i32_1 = arith.constant 0 : i32
    return %arg0, %c0_i32, %c0_i32_0 : i32, i32, i32
  }
  func.func @transform_2(%arg0: i32) -> (i32, i32, i32) {
    %c0_i32 = arith.constant 0 : i32
    %c0_i32_0 = arith.constant 0 : i32
    %c0_i32_1 = arith.constant 0 : i32
    return %arg0, %c0_i32, %c0_i32_0 : i32, i32, i32
  }
  func.func @transform_3(%arg0: i32) -> (i32, i32, i32) {
    %c0_i32 = arith.constant 0 : i32
    %c0_i32_0 = arith.constant 0 : i32
    %c0_i32_1 = arith.constant 0 : i32
    return %arg0, %c0_i32, %c0_i32_0 : i32, i32, i32
  }
  func.func @transform_4(%arg0: i32) -> (i32, i32, i32) {
    %c0_i32 = arith.constant 0 : i32
    %c0_i32_0 = arith.constant 0 : i32
    %c0_i32_1 = arith.constant 0 : i32
    return %arg0, %c0_i32, %c0_i32_0 : i32, i32, i32
  }
  func.func @transform_5(%arg0: i32) -> (i32, i32, i32) {
    %c0_i32 = arith.constant 0 : i32
    %c0_i32_0 = arith.constant 0 : i32
    %c0_i32_1 = arith.constant 0 : i32
    return %arg0, %c0_i32, %c0_i32_0 : i32, i32, i32
  }
  func.func @transform_6(%arg0: i32) -> (i32, i32, i32) {
    %c0_i32 = arith.constant 0 : i32
    %c0_i32_0 = arith.constant 0 : i32
    %c0_i32_1 = arith.constant 0 : i32
    return %arg0, %c0_i32, %c0_i32_0 : i32, i32, i32
  }
  func.func @transform_7(%arg0: i32) -> (i32, i32) {
    %c0_i32 = arith.constant 0 : i32
    %c0_i32_0 = arith.constant 0 : i32
    %c0_i32_1 = arith.constant 0 : i32
    return %c0_i32, %c0_i32_0 : i32, i32
  }
  func.func @transform_8(%arg0: i32) -> (i32, i32) {
    %c0_i32 = arith.constant 0 : i32
    %c0_i32_0 = arith.constant 0 : i32
    %c0_i32_1 = arith.constant 0 : i32
    return %c0_i32, %c0_i32_0 : i32, i32
  }
  func.func @transform_9(%arg0: i32) -> (i32, i32) {
    %c0_i32 = arith.constant 0 : i32
    %c0_i32_0 = arith.constant 0 : i32
    %c0_i32_1 = arith.constant 0 : i32
    return %c0_i32, %c0_i32_0 : i32, i32
  }
  func.func @transform_10(%arg0: i32) -> (i32, i32) {
    %c0_i32 = arith.constant 0 : i32
    %c0_i32_0 = arith.constant 0 : i32
    %c0_i32_1 = arith.constant 0 : i32
    return %c0_i32, %c0_i32_0 : i32, i32
  }
  func.func @transform_11(%arg0: i32) -> (i32, i32) {
    %c0_i32 = arith.constant 0 : i32
    %c0_i32_0 = arith.constant 0 : i32
    %c0_i32_1 = arith.constant 0 : i32
    return %c0_i32, %c0_i32_0 : i32, i32
  }
  func.func @transform_12(%arg0: i32) -> (i32, i32) {
    %c0_i32 = arith.constant 0 : i32
    %c0_i32_0 = arith.constant 0 : i32
    %c0_i32_1 = arith.constant 0 : i32
    return %c0_i32, %c0_i32_0 : i32, i32
  }
  func.func @transform_13(%arg0: i32) -> (i32, i32) {
    %c0_i32 = arith.constant 0 : i32
    %c0_i32_0 = arith.constant 0 : i32
    %c0_i32_1 = arith.constant 0 : i32
    return %c0_i32, %c0_i32_0 : i32, i32
  }
  func.func @transform_14(%arg0: i32) -> (i32, i32) {
    %c0_i32 = arith.constant 0 : i32
    %c0_i32_0 = arith.constant 0 : i32
    %c0_i32_1 = arith.constant 0 : i32
    return %c0_i32, %c0_i32_0 : i32, i32
  }
  func.func @transform_15(%arg0: i32) -> (i32, i32) {
    %c0_i32 = arith.constant 0 : i32
    %c0_i32_0 = arith.constant 0 : i32
    %c0_i32_1 = arith.constant 0 : i32
    return %c0_i32, %c0_i32_0 : i32, i32
  }
  func.func @transform_16(%arg0: i32) -> (i32, i32) {
    %c0_i32 = arith.constant 0 : i32
    %c0_i32_0 = arith.constant 0 : i32
    %c0_i32_1 = arith.constant 0 : i32
    return %c0_i32, %c0_i32_0 : i32, i32
  }
  func.func @transform_17(%arg0: i32) -> (i32, i32) {
    %c0_i32 = arith.constant 0 : i32
    %c0_i32_0 = arith.constant 0 : i32
    %c0_i32_1 = arith.constant 0 : i32
    return %c0_i32, %c0_i32_0 : i32, i32
  }
  func.func @transform_18(%arg0: i32) -> (i32, i32, i32) {
    %c0_i32 = arith.constant 0 : i32
    %c0_i32_0 = arith.constant 0 : i32
    %c0_i32_1 = arith.constant 0 : i32
    %c0_i32_2 = arith.constant 0 : i32
    return %c0_i32, %c0_i32_0, %c0_i32_1 : i32, i32, i32
  }
  func.func @transform_19(%arg0: i32) -> (i32, i32) {
    %c0_i32 = arith.constant 0 : i32
    %c0_i32_0 = arith.constant 0 : i32
    %c0_i32_1 = arith.constant 0 : i32
    return %c0_i32, %c0_i32_0 : i32, i32
  }
  func.func @transform_20(%arg0: i32) -> (i32, i32) {
    %c0_i32 = arith.constant 0 : i32
    %c0_i32_0 = arith.constant 0 : i32
    %c0_i32_1 = arith.constant 0 : i32
    return %c0_i32, %c0_i32_0 : i32, i32
  }
  func.func @transform_21(%arg0: i32) -> (i32, i32) {
    %c0_i32 = arith.constant 0 : i32
    %c0_i32_0 = arith.constant 0 : i32
    %c0_i32_1 = arith.constant 0 : i32
    return %c0_i32, %c0_i32_0 : i32, i32
  }
  func.func @transform_22(%arg0: i32) -> (i32, i32) {
    %c0_i32 = arith.constant 0 : i32
    %c0_i32_0 = arith.constant 0 : i32
    %c0_i32_1 = arith.constant 0 : i32
    return %c0_i32, %c0_i32_0 : i32, i32
  }
  func.func @transform_23(%arg0: i32) -> (i32, i32) {
    %c0_i32 = arith.constant 0 : i32
    %c0_i32_0 = arith.constant 0 : i32
    %c0_i32_1 = arith.constant 0 : i32
    return %c0_i32, %c0_i32_0 : i32, i32
  }
  func.func @transform_24(%arg0: i32) -> (i32, i32) {
    %c0_i32 = arith.constant 0 : i32
    %c0_i32_0 = arith.constant 0 : i32
    %c0_i32_1 = arith.constant 0 : i32
    return %c0_i32, %c0_i32_0 : i32, i32
  }
  func.func @transform_25(%arg0: i32) -> (i32, i32) {
    %c0_i32 = arith.constant 0 : i32
    %c0_i32_0 = arith.constant 0 : i32
    %c0_i32_1 = arith.constant 0 : i32
    return %c0_i32, %c0_i32_0 : i32, i32
  }
  func.func @transform_26(%arg0: i32) -> (i32, i32) {
    %c0_i32 = arith.constant 0 : i32
    %c0_i32_0 = arith.constant 0 : i32
    %c0_i32_1 = arith.constant 0 : i32
    return %c0_i32, %c0_i32_0 : i32, i32
  }
  func.func @transform_27(%arg0: i32) -> (i32, i32) {
    %c0_i32 = arith.constant 0 : i32
    %c0_i32_0 = arith.constant 0 : i32
    %c0_i32_1 = arith.constant 0 : i32
    return %c0_i32, %c0_i32_0 : i32, i32
  }
  func.func @transform_28(%arg0: i32) -> (i32, i32) {
    %c0_i32 = arith.constant 0 : i32
    %c0_i32_0 = arith.constant 0 : i32
    %c0_i32_1 = arith.constant 0 : i32
    return %c0_i32, %c0_i32_0 : i32, i32
  }
  func.func @transform_29(%arg0: i32) -> (i32, i32) {
    %c0_i32 = arith.constant 0 : i32
    %c0_i32_0 = arith.constant 0 : i32
    %c0_i32_1 = arith.constant 0 : i32
    return %c0_i32, %c0_i32_0 : i32, i32
  }
  func.func @transform_30(%arg0: i32) -> (i32, i32) {
    %c0_i32 = arith.constant 0 : i32
    %c0_i32_0 = arith.constant 0 : i32
    %c0_i32_1 = arith.constant 0 : i32
    return %c0_i32, %c0_i32_0 : i32, i32
  }
  func.func @transform_31(%arg0: i32) -> (i32, i32) {
    %c0_i32 = arith.constant 0 : i32
    %c0_i32_0 = arith.constant 0 : i32
    %c0_i32_1 = arith.constant 0 : i32
    return %c0_i32, %c0_i32_0 : i32, i32
  }
}

</mosaic_0001>

<llo_original>
// kernel: benetech_forward.1
$region0: #{benetech_forward.1}
  #allocation0 [shape = 'u32[]', space=smem, size = 0x4, offset = 0x4, fixed_abs, tag = 'smem constant byte address 0x4 - core index']
  #allocation1 [shape = 'u32[144,128]{1,0:T(1,128)}', space=vmem, size = 0x12000, scoped, tag = 'internal scratch']
  #allocation2 [shape = 'f32[1,1]{1,0:T(1,128)}', space=vmem, size = 0x200, scoped, tag = 'scratch operand']
  #allocation3 [shape = 'f32[1,1]{1,0:T(1,128)}', space=vmem, size = 0x200, scoped, tag = 'scratch operand']
  %s0 = inlined_call_operand.smem [shape: u32[32], index: -1, kind: input, shape index: {}]
  %s1 = sld [smem:[%s0]]
  %s2 = scalar_lea.smem %s0, 1
  %s3 = sld [smem:[%s2]]
  %s4 = scalar_lea.smem %s0, 2
  %s5 = sld [smem:[%s4]]
  %s6 = scalar_lea.smem %s0, 3
  %s7 = sld [smem:[%s6]]
  %s8 = scalar_lea.smem %s0, 4
  %s9 = sld [smem:[%s8]]
  %s10 = scalar_lea.smem %s0, 5
  %s11 = sld [smem:[%s10]]
  %s12 = scalar_lea.smem %s0, 6
  %s13 = sld [smem:[%s12]]
  %s14 = scalar_lea.smem %s0, 7
  %s15 = sld [smem:[%s14]]
  %s16 = scalar_lea.smem %s0, 8
  %s17 = sld [smem:[%s16]]
  %s18 = scalar_lea.smem %s0, 9
  %s19 = sld [smem:[%s18]]
  %s20 = scalar_lea.smem %s0, 10
  %s21 = sld [smem:[%s20]]
  %s22 = scalar_lea.smem %s0, 11
  %s23 = sld [smem:[%s22]]
  %s24 = scalar_lea.smem %s0, 12
  %s25 = sld [smem:[%s24]]
  %s26 = scalar_lea.smem %s0, 13
  %s27 = sld [smem:[%s26]]
  %s28 = scalar_lea.smem %s0, 14
  %s29 = sld [smem:[%s28]]
  %s30 = scalar_lea.smem %s0, 15
  %s31 = sld [smem:[%s30]]
  %s32 = scalar_lea.smem %s0, 16
  %s33 = sld [smem:[%s32]]
  %s34 = scalar_lea.smem %s0, 17
  %s35 = sld [smem:[%s34]]
  %s36 = scalar_lea.smem %s0, 18
  %s37 = sld [smem:[%s36]]
  %s38 = scalar_lea.smem %s0, 19
  %s39 = sld [smem:[%s38]]
  %s40 = scalar_lea.smem %s0, 20
  %s41 = sld [smem:[%s40]]
  %s42 = scalar_lea.smem %s0, 21
  %s43 = sld [smem:[%s42]]
  %s44 = scalar_lea.smem %s0, 22
  %s45 = sld [smem:[%s44]]
  %s46 = scalar_lea.smem %s0, 23
  %s47 = sld [smem:[%s46]]
  %s48 = scalar_lea.smem %s0, 24
  %s49 = sld [smem:[%s48]]
  %s50 = scalar_lea.smem %s0, 25
  %s51 = sld [smem:[%s50]]
  %s52 = scalar_lea.smem %s0, 26
  %s53 = sld [smem:[%s52]]
  %s54 = scalar_lea.smem %s0, 27
  %s55 = sld [smem:[%s54]]
  %s56 = scalar_lea.smem %s0, 28
  %s57 = sld [smem:[%s56]]
  %s58 = scalar_lea.smem %s0, 29
  %s59 = sld [smem:[%s58]]
  %s60 = scalar_lea.smem %s0, 30
  %s61 = sld [smem:[%s60]]
  %s62 = scalar_lea.smem %s0, 31
  %s63 = sld [smem:[%s62]]
  %s64 = sld [smem:[#allocation0]]
  $region161: #{benetech_forward.1} parent=0
    _
  %s66 = ssub.s32 1, %s64
  %s67 = scalar_select 0, %s66, %s64
  $region1: #{benetech_forward.1} parent=0
    #allocation4 [shape = 'u8[512]{0}', space=vmem, size = 0x400, scoped, tag = 'output window, operand 0, single buffered']
    #allocation5 [shape = 's32[2]{0}', space=sflag, size = 0x8, scoped, tag = 'scoped memory for benetech_forward.1']
    %68 = vsyncpa [#allocation5], 0
    loop: start=0, step=1, limit=4
    $region2: #{benetech_forward.1} parent=1 // loop_pre_header
      _
    $region3: #{benetech_forward.1} parent=1 // loop_header
      %s70 = sphi 0, %s74
      %p71 = scmp.ge.s32.totalorder %s70, 4
      %s80 = sphi 0, %s82
      %s83 = sphi 0, %s80
      %s84 = sphi 0, %s83
      %s100 = sphi 0, %s84
      %s106 = sphi 0, %s108
      %s109 = sphi 0, %s106
      %s110 = sphi 0, %s109
      %s126 = sphi 0, %s110
      %s132 = sphi 0, %s134
      %s135 = sphi 0, %s132
      %s136 = sphi 0, %s135
      %s152 = sphi 0, %s136
      %s158 = sphi 0, %s160
      %s161 = sphi 0, %s158
      %s162 = sphi 0, %s161
      %s178 = sphi 0, %s162
      %s184 = sphi 0, %s186
      %s187 = sphi 0, %s184
      %s188 = sphi 0, %s187
      %s204 = sphi 0, %s188
      %s210 = sphi 0, %s212
      %s213 = sphi 0, %s210
      %s214 = sphi 0, %s213
      %s230 = sphi 0, %s214
      %s236 = sphi 0, %s238
      %s239 = sphi 0, %s236
      %s240 = sphi 0, %s239
      %s256 = sphi 0, %s240
      %s260 = sphi 0, %s260
      %s262 = sphi 0, %s260
      %s263 = sphi 0, %s262
      %s277 = sphi 0, %s263
      %s281 = sphi 0, %s281
      %s283 = sphi 0, %s281
      %s284 = sphi 0, %s283
      %s298 = sphi 0, %s284
      %s302 = sphi 0, %s302
      %s304 = sphi 0, %s302
      %s305 = sphi 0, %s304
      %s319 = sphi 0, %s305
      %s323 = sphi 0, %s323
      %s325 = sphi 0, %s323
      %s326 = sphi 0, %s325
      %s340 = sphi 0, %s326
      %s344 = sphi 0, %s344
      %s346 = sphi 0, %s344
      %s347 = sphi 0, %s346
      %s361 = sphi 0, %s347
      %s365 = sphi 0, %s365
      %s367 = sphi 0, %s365
      %s368 = sphi 0, %s367
      %s382 = sphi 0, %s368
      %s386 = sphi 0, %s386
      %s388 = sphi 0, %s386
      %s389 = sphi 0, %s388
      %s403 = sphi 0, %s389
      %s407 = sphi 0, %s407
      %s409 = sphi 0, %s407
      %s410 = sphi 0, %s409
      %s424 = sphi 0, %s410
      %s428 = sphi 0, %s428
      %s430 = sphi 0, %s428
      %s431 = sphi 0, %s430
      %s445 = sphi 0, %s431
      %s449 = sphi 0, %s449
      %s451 = sphi 0, %s449
      %s452 = sphi 0, %s451
      %s466 = sphi 0, %s452
      %s470 = sphi 0, %s470
      %s472 = sphi 0, %s470
      %s473 = sphi 0, %s472
      %s487 = sphi 0, %s473
      %s491 = sphi 0, %s491
      %s493 = sphi 0, %s491
      %s494 = sphi 0, %s493
      %s508 = sphi 0, %s494
      %s512 = sphi 0, %s512
      %s514 = sphi 0, %s512
      %s515 = sphi 0, %s514
      %s529 = sphi 0, %s515
      %s533 = sphi 0, %s533
      %s535 = sphi 0, %s533
      %s536 = sphi 0, %s535
      %s550 = sphi 0, %s536
      %s554 = sphi 0, %s554
      %s556 = sphi 0, %s554
      %s557 = sphi 0, %s556
      %s571 = sphi 0, %s557
      %s575 = sphi 0, %s575
      %s577 = sphi 0, %s575
      %s578 = sphi 0, %s577
      %s592 = sphi 0, %s578
      %s596 = sphi 0, %s596
      %s598 = sphi 0, %s596
      %s599 = sphi 0, %s598
      %s613 = sphi 0, %s599
      %s617 = sphi 0, %s617
      %s619 = sphi 0, %s617
      %s620 = sphi 0, %s619
      %s634 = sphi 0, %s620
      %s638 = sphi 0, %s638
      %s640 = sphi 0, %s638
      %s641 = sphi 0, %s640
      %s655 = sphi 0, %s641
      %s659 = sphi 0, %s659
      %s661 = sphi 0, %s659
      %s662 = sphi 0, %s661
      %s676 = sphi 0, %s662
      %s680 = sphi 0, %s680
      %s682 = sphi 0, %s680
      %s683 = sphi 0, %s682
      %s697 = sphi 0, %s683
      %s701 = sphi 0, %s701
      %s703 = sphi 0, %s701
      %s704 = sphi 0, %s703
      %s718 = sphi 0, %s704
      %s722 = sphi 0, %s722
      %s724 = sphi 0, %s722
      %s725 = sphi 0, %s724
      %s739 = sphi 0, %s725
      %s743 = sphi 0, %s743
      %s745 = sphi 0, %s743
      %s746 = sphi 0, %s745
      %s760 = sphi 0, %s746
      %s764 = sphi 0, %s764
      %s766 = sphi 0, %s764
      %s767 = sphi 0, %s766
      %s781 = sphi 0, %s767
    $region4: #{benetech_forward.1} parent=1 // loop_header_branch
      %73 = sbr.rel (%p71) target = $region8
    $region5: #{benetech_forward.1} parent=1 // loop_body
      %s75 = ssub.s32 %s70, 1
      %s76 = ssub.s32 %s70, 2
      %s77 = sadd.s32 %s70, 1
      %s78 = ssub.s32 %s70, %s77
      %p79 = scmp.eq.s32.totalorder %s78, 0
      %s81 = sadd.s32 %s80, 1
      %s82 = scalar_select %p79, %s80, %s81
      %p85 = pneg %p79
      %p86 = scmp.eq.s32.totalorder %s70, 1
      %p87 = por %p85, %p86
      %p88 = scmp.ne.s32.totalorder %s80, %s83
      %p89 = scmp.eq.s32.totalorder %s70, 0
      %p90 = por %p88, %p89
      %p91 = scmp.ne.s32.totalorder %s80, %s83
      %p92 = scmp.eq.s32.totalorder %s75, 1
      %p93 = por %p91, %p92
      %p94 = scmp.ne.s32.totalorder %s83, %s84
      %p95 = scmp.eq.s32.totalorder %s75, 0
      %p96 = por %p94, %p95
      %p97 = scmp.ne.s32.totalorder %s83, %s84
      %p98 = scmp.eq.s32.totalorder %s76, 1
      %p99 = por %p97, %p98
      %p101 = scmp.ne.s32.totalorder %s84, %s100
      %p102 = scmp.eq.s32.totalorder %s76, 0
      %p103 = por %p101, %p102
      %s104 = ssub.s32 %s70, %s77
      %p105 = scmp.eq.s32.totalorder %s104, 0
      %s107 = sadd.s32 %s106, 1
      %s108 = scalar_select %p105, %s106, %s107
      %p111 = pneg %p105
      %p112 = scmp.eq.s32.totalorder %s70, 1
      %p113 = por %p111, %p112
      %p114 = scmp.ne.s32.totalorder %s106, %s109
      %p115 = scmp.eq.s32.totalorder %s70, 0
      %p116 = por %p114, %p115
      %p117 = scmp.ne.s32.totalorder %s106, %s109
      %p118 = scmp.eq.s32.totalorder %s75, 1
      %p119 = por %p117, %p118
      %p120 = scmp.ne.s32.totalorder %s109, %s110
      %p121 = scmp.eq.s32.totalorder %s75, 0
      %p122 = por %p120, %p121
      %p123 = scmp.ne.s32.totalorder %s109, %s110
      %p124 = scmp.eq.s32.totalorder %s76, 1
      %p125 = por %p123, %p124
      %p127 = scmp.ne.s32.totalorder %s110, %s126
      %p128 = scmp.eq.s32.totalorder %s76, 0
      %p129 = por %p127, %p128
      %s130 = ssub.s32 %s70, %s77
      %p131 = scmp.eq.s32.totalorder %s130, 0
      %s133 = sadd.s32 %s132, 1
      %s134 = scalar_select %p131, %s132, %s133
      %p137 = pneg %p131
      %p138 = scmp.eq.s32.totalorder %s70, 1
      %p139 = por %p137, %p138
      %p140 = scmp.ne.s32.totalorder %s132, %s135
      %p141 = scmp.eq.s32.totalorder %s70, 0
      %p142 = por %p140, %p141
      %p143 = scmp.ne.s32.totalorder %s132, %s135
      %p144 = scmp.eq.s32.totalorder %s75, 1
      %p145 = por %p143, %p144
      %p146 = scmp.ne.s32.totalorder %s135, %s136
      %p147 = scmp.eq.s32.totalorder %s75, 0
      %p148 = por %p146, %p147
      %p149 = scmp.ne.s32.totalorder %s135, %s136
      %p150 = scmp.eq.s32.totalorder %s76, 1
      %p151 = por %p149, %p150
      %p153 = scmp.ne.s32.totalorder %s136, %s152
      %p154 = scmp.eq.s32.totalorder %s76, 0
      %p155 = por %p153, %p154
      %s156 = ssub.s32 %s70, %s77
      %p157 = scmp.eq.s32.totalorder %s156, 0
      %s159 = sadd.s32 %s158, 1
      %s160 = scalar_select %p157, %s158, %s159
      %p163 = pneg %p157
      %p164 = scmp.eq.s32.totalorder %s70, 1
      %p165 = por %p163, %p164
      %p166 = scmp.ne.s32.totalorder %s158, %s161
      %p167 = scmp.eq.s32.totalorder %s70, 0
      %p168 = por %p166, %p167
      %p169 = scmp.ne.s32.totalorder %s158, %s161
      %p170 = scmp.eq.s32.totalorder %s75, 1
      %p171 = por %p169, %p170
      %p172 = scmp.ne.s32.totalorder %s161, %s162
      %p173 = scmp.eq.s32.totalorder %s75, 0
      %p174 = por %p172, %p173
      %p175 = scmp.ne.s32.totalorder %s161, %s162
      %p176 = scmp.eq.s32.totalorder %s76, 1
      %p177 = por %p175, %p176
      %p179 = scmp.ne.s32.totalorder %s162, %s178
      %p180 = scmp.eq.s32.totalorder %s76, 0
      %p181 = por %p179, %p180
      %s182 = ssub.s32 %s70, %s77
      %p183 = scmp.eq.s32.totalorder %s182, 0
      %s185 = sadd.s32 %s184, 1
      %s186 = scalar_select %p183, %s184, %s185
      %p189 = pneg %p183
      %p190 = scmp.eq.s32.totalorder %s70, 1
      %p191 = por %p189, %p190
      %p192 = scmp.ne.s32.totalorder %s184, %s187
      %p193 = scmp.eq.s32.totalorder %s70, 0
      %p194 = por %p192, %p193
      %p195 = scmp.ne.s32.totalorder %s184, %s187
      %p196 = scmp.eq.s32.totalorder %s75, 1
      %p197 = por %p195, %p196
      %p198 = scmp.ne.s32.totalorder %s187, %s188
      %p199 = scmp.eq.s32.totalorder %s75, 0
      %p200 = por %p198, %p199
      %p201 = scmp.ne.s32.totalorder %s187, %s188
      %p202 = scmp.eq.s32.totalorder %s76, 1
      %p203 = por %p201, %p202
      %p205 = scmp.ne.s32.totalorder %s188, %s204
      %p206 = scmp.eq.s32.totalorder %s76, 0
      %p207 = por %p205, %p206
      %s208 = ssub.s32 %s70, %s77
      %p209 = scmp.eq.s32.totalorder %s208, 0
      %s211 = sadd.s32 %s210, 1
      %s212 = scalar_select %p209, %s210, %s211
      %p215 = pneg %p209
      %p216 = scmp.eq.s32.totalorder %s70, 1
      %p217 = por %p215, %p216
      %p218 = scmp.ne.s32.totalorder %s210, %s213
      %p219 = scmp.eq.s32.totalorder %s70, 0
      %p220 = por %p218, %p219
      %p221 = scmp.ne.s32.totalorder %s210, %s213
      %p222 = scmp.eq.s32.totalorder %s75, 1
      %p223 = por %p221, %p222
      %p224 = scmp.ne.s32.totalorder %s213, %s214
      %p225 = scmp.eq.s32.totalorder %s75, 0
      %p226 = por %p224, %p225
      %p227 = scmp.ne.s32.totalorder %s213, %s214
      %p228 = scmp.eq.s32.totalorder %s76, 1
      %p229 = por %p227, %p228
      %p231 = scmp.ne.s32.totalorder %s214, %s230
      %p232 = scmp.eq.s32.totalorder %s76, 0
      %p233 = por %p231, %p232
      %s234 = ssub.s32 %s70, %s77
      %p235 = scmp.eq.s32.totalorder %s234, 0
      %s237 = sadd.s32 %s236, 1
      %s238 = scalar_select %p235, %s236, %s237
      %p241 = pneg %p235
      %p242 = scmp.eq.s32.totalorder %s70, 1
      %p243 = por %p241, %p242
      %p244 = scmp.ne.s32.totalorder %s236, %s239
      %p245 = scmp.eq.s32.totalorder %s70, 0
      %p246 = por %p244, %p245
      %p247 = scmp.ne.s32.totalorder %s236, %s239
      %p248 = scmp.eq.s32.totalorder %s75, 1
      %p249 = por %p247, %p248
      %p250 = scmp.ne.s32.totalorder %s239, %s240
      %p251 = scmp.eq.s32.totalorder %s75, 0
      %p252 = por %p250, %p251
      %p253 = scmp.ne.s32.totalorder %s239, %s240
      %p254 = scmp.eq.s32.totalorder %s76, 1
      %p255 = por %p253, %p254
      %p257 = scmp.ne.s32.totalorder %s240, %s256
      %p258 = scmp.eq.s32.totalorder %s76, 0
      %p259 = por %p257, %p258
      %s261 = sadd.s32 %s260, 1
      %p264 = scmp.eq.s32.totalorder %s70, 1
      %p265 = scmp.ne.s32.totalorder %s260, %s262
      %p266 = scmp.eq.s32.totalorder %s70, 0
      %p267 = por %p265, %p266
      %p268 = scmp.ne.s32.totalorder %s260, %s262
      %p269 = scmp.eq.s32.totalorder %s75, 1
      %p270 = por %p268, %p269
      %p271 = scmp.ne.s32.totalorder %s262, %s263
      %p272 = scmp.eq.s32.totalorder %s75, 0
      %p273 = por %p271, %p272
      %p274 = scmp.ne.s32.totalorder %s262, %s263
      %p275 = scmp.eq.s32.totalorder %s76, 1
      %p276 = por %p274, %p275
      %p278 = scmp.ne.s32.totalorder %s263, %s277
      %p279 = scmp.eq.s32.totalorder %s76, 0
      %p280 = por %p278, %p279
      %s282 = sadd.s32 %s281, 1
      %p285 = scmp.eq.s32.totalorder %s70, 1
      %p286 = scmp.ne.s32.totalorder %s281, %s283
      %p287 = scmp.eq.s32.totalorder %s70, 0
      %p288 = por %p286, %p287
      %p289 = scmp.ne.s32.totalorder %s281, %s283
      %p290 = scmp.eq.s32.totalorder %s75, 1
      %p291 = por %p289, %p290
      %p292 = scmp.ne.s32.totalorder %s283, %s284
      %p293 = scmp.eq.s32.totalorder %s75, 0
      %p294 = por %p292, %p293
      %p295 = scmp.ne.s32.totalorder %s283, %s284
      %p296 = scmp.eq.s32.totalorder %s76, 1
      %p297 = por %p295, %p296
      %p299 = scmp.ne.s32.totalorder %s284, %s298
      %p300 = scmp.eq.s32.totalorder %s76, 0
      %p301 = por %p299, %p300
      %s303 = sadd.s32 %s302, 1
      %p306 = scmp.eq.s32.totalorder %s70, 1
      %p307 = scmp.ne.s32.totalorder %s302, %s304
      %p308 = scmp.eq.s32.totalorder %s70, 0
      %p309 = por %p307, %p308
      %p310 = scmp.ne.s32.totalorder %s302, %s304
      %p311 = scmp.eq.s32.totalorder %s75, 1
      %p312 = por %p310, %p311
      %p313 = scmp.ne.s32.totalorder %s304, %s305
      %p314 = scmp.eq.s32.totalorder %s75, 0
      %p315 = por %p313, %p314
      %p316 = scmp.ne.s32.totalorder %s304, %s305
      %p317 = scmp.eq.s32.totalorder %s76, 1
      %p318 = por %p316, %p317
      %p320 = scmp.ne.s32.totalorder %s305, %s319
      %p321 = scmp.eq.s32.totalorder %s76, 0
      %p322 = por %p320, %p321
      %s324 = sadd.s32 %s323, 1
      %p327 = scmp.eq.s32.totalorder %s70, 1
      %p328 = scmp.ne.s32.totalorder %s323, %s325
      %p329 = scmp.eq.s32.totalorder %s70, 0
      %p330 = por %p328, %p329
      %p331 = scmp.ne.s32.totalorder %s323, %s325
      %p332 = scmp.eq.s32.totalorder %s75, 1
      %p333 = por %p331, %p332
      %p334 = scmp.ne.s32.totalorder %s325, %s326
      %p335 = scmp.eq.s32.totalorder %s75, 0
      %p336 = por %p334, %p335
      %p337 = scmp.ne.s32.totalorder %s325, %s326
      %p338 = scmp.eq.s32.totalorder %s76, 1
      %p339 = por %p337, %p338
      %p341 = scmp.ne.s32.totalorder %s326, %s340
      %p342 = scmp.eq.s32.totalorder %s76, 0
      %p343 = por %p341, %p342
      %s345 = sadd.s32 %s344, 1
      %p348 = scmp.eq.s32.totalorder %s70, 1
      %p349 = scmp.ne.s32.totalorder %s344, %s346
      %p350 = scmp.eq.s32.totalorder %s70, 0
      %p351 = por %p349, %p350
      %p352 = scmp.ne.s32.totalorder %s344, %s346
      %p353 = scmp.eq.s32.totalorder %s75, 1
      %p354 = por %p352, %p353
      %p355 = scmp.ne.s32.totalorder %s346, %s347
      %p356 = scmp.eq.s32.totalorder %s75, 0
      %p357 = por %p355, %p356
      %p358 = scmp.ne.s32.totalorder %s346, %s347
      %p359 = scmp.eq.s32.totalorder %s76, 1
      %p360 = por %p358, %p359
      %p362 = scmp.ne.s32.totalorder %s347, %s361
      %p363 = scmp.eq.s32.totalorder %s76, 0
      %p364 = por %p362, %p363
      %s366 = sadd.s32 %s365, 1
      %p369 = scmp.eq.s32.totalorder %s70, 1
      %p370 = scmp.ne.s32.totalorder %s365, %s367
      %p371 = scmp.eq.s32.totalorder %s70, 0
      %p372 = por %p370, %p371
      %p373 = scmp.ne.s32.totalorder %s365, %s367
      %p374 = scmp.eq.s32.totalorder %s75, 1
      %p375 = por %p373, %p374
      %p376 = scmp.ne.s32.totalorder %s367, %s368
      %p377 = scmp.eq.s32.totalorder %s75, 0
      %p378 = por %p376, %p377
      %p379 = scmp.ne.s32.totalorder %s367, %s368
      %p380 = scmp.eq.s32.totalorder %s76, 1
      %p381 = por %p379, %p380
      %p383 = scmp.ne.s32.totalorder %s368, %s382
      %p384 = scmp.eq.s32.totalorder %s76, 0
      %p385 = por %p383, %p384
      %s387 = sadd.s32 %s386, 1
      %p390 = scmp.eq.s32.totalorder %s70, 1
      %p391 = scmp.ne.s32.totalorder %s386, %s388
      %p392 = scmp.eq.s32.totalorder %s70, 0
      %p393 = por %p391, %p392
      %p394 = scmp.ne.s32.totalorder %s386, %s388
      %p395 = scmp.eq.s32.totalorder %s75, 1
      %p396 = por %p394, %p395
      %p397 = scmp.ne.s32.totalorder %s388, %s389
      %p398 = scmp.eq.s32.totalorder %s75, 0
      %p399 = por %p397, %p398
      %p400 = scmp.ne.s32.totalorder %s388, %s389
      %p401 = scmp.eq.s32.totalorder %s76, 1
      %p402 = por %p400, %p401
      %p404 = scmp.ne.s32.totalorder %s389, %s403
      %p405 = scmp.eq.s32.totalorder %s76, 0
      %p406 = por %p404, %p405
      %s408 = sadd.s32 %s407, 1
      %p411 = scmp.eq.s32.totalorder %s70, 1
      %p412 = scmp.ne.s32.totalorder %s407, %s409
      %p413 = scmp.eq.s32.totalorder %s70, 0
      %p414 = por %p412, %p413
      %p415 = scmp.ne.s32.totalorder %s407, %s409
      %p416 = scmp.eq.s32.totalorder %s75, 1
      %p417 = por %p415, %p416
      %p418 = scmp.ne.s32.totalorder %s409, %s410
      %p419 = scmp.eq.s32.totalorder %s75, 0
      %p420 = por %p418, %p419
      %p421 = scmp.ne.s32.totalorder %s409, %s410
      %p422 = scmp.eq.s32.totalorder %s76, 1
      %p423 = por %p421, %p422
      %p425 = scmp.ne.s32.totalorder %s410, %s424
      %p426 = scmp.eq.s32.totalorder %s76, 0
      %p427 = por %p425, %p426
      %s429 = sadd.s32 %s428, 1
      %p432 = scmp.eq.s32.totalorder %s70, 1
      %p433 = scmp.ne.s32.totalorder %s428, %s430
      %p434 = scmp.eq.s32.totalorder %s70, 0
      %p435 = por %p433, %p434
      %p436 = scmp.ne.s32.totalorder %s428, %s430
      %p437 = scmp.eq.s32.totalorder %s75, 1
      %p438 = por %p436, %p437
      %p439 = scmp.ne.s32.totalorder %s430, %s431
      %p440 = scmp.eq.s32.totalorder %s75, 0
      %p441 = por %p439, %p440
      %p442 = scmp.ne.s32.totalorder %s430, %s431
      %p443 = scmp.eq.s32.totalorder %s76, 1
      %p444 = por %p442, %p443
      %p446 = scmp.ne.s32.totalorder %s431, %s445
      %p447 = scmp.eq.s32.totalorder %s76, 0
      %p448 = por %p446, %p447
      %s450 = sadd.s32 %s449, 1
      %p453 = scmp.eq.s32.totalorder %s70, 1
      %p454 = scmp.ne.s32.totalorder %s449, %s451
      %p455 = scmp.eq.s32.totalorder %s70, 0
      %p456 = por %p454, %p455
      %p457 = scmp.ne.s32.totalorder %s449, %s451
      %p458 = scmp.eq.s32.totalorder %s75, 1
      %p459 = por %p457, %p458
      %p460 = scmp.ne.s32.totalorder %s451, %s452
      %p461 = scmp.eq.s32.totalorder %s75, 0
      %p462 = por %p460, %p461
      %p463 = scmp.ne.s32.totalorder %s451, %s452
      %p464 = scmp.eq.s32.totalorder %s76, 1
      %p465 = por %p463, %p464
      %p467 = scmp.ne.s32.totalorder %s452, %s466
      %p468 = scmp.eq.s32.totalorder %s76, 0
      %p469 = por %p467, %p468
      %s471 = sadd.s32 %s470, 1
      %p474 = scmp.eq.s32.totalorder %s70, 1
      %p475 = scmp.ne.s32.totalorder %s470, %s472
      %p476 = scmp.eq.s32.totalorder %s70, 0
      %p477 = por %p475, %p476
      %p478 = scmp.ne.s32.totalorder %s470, %s472
      %p479 = scmp.eq.s32.totalorder %s75, 1
      %p480 = por %p478, %p479
      %p481 = scmp.ne.s32.totalorder %s472, %s473
      %p482 = scmp.eq.s32.totalorder %s75, 0
      %p483 = por %p481, %p482
      %p484 = scmp.ne.s32.totalorder %s472, %s473
      %p485 = scmp.eq.s32.totalorder %s76, 1
      %p486 = por %p484, %p485
      %p488 = scmp.ne.s32.totalorder %s473, %s487
      %p489 = scmp.eq.s32.totalorder %s76, 0
      %p490 = por %p488, %p489
      %s492 = sadd.s32 %s491, 1
      %p495 = scmp.eq.s32.totalorder %s70, 1
      %p496 = scmp.ne.s32.totalorder %s491, %s493
      %p497 = scmp.eq.s32.totalorder %s70, 0
      %p498 = por %p496, %p497
      %p499 = scmp.ne.s32.totalorder %s491, %s493
      %p500 = scmp.eq.s32.totalorder %s75, 1
      %p501 = por %p499, %p500
      %p502 = scmp.ne.s32.totalorder %s493, %s494
      %p503 = scmp.eq.s32.totalorder %s75, 0
      %p504 = por %p502, %p503
      %p505 = scmp.ne.s32.totalorder %s493, %s494
      %p506 = scmp.eq.s32.totalorder %s76, 1
      %p507 = por %p505, %p506
      %p509 = scmp.ne.s32.totalorder %s494, %s508
      %p510 = scmp.eq.s32.totalorder %s76, 0
      %p511 = por %p509, %p510
      %s513 = sadd.s32 %s512, 1
      %p516 = scmp.eq.s32.totalorder %s70, 1
      %p517 = scmp.ne.s32.totalorder %s512, %s514
      %p518 = scmp.eq.s32.totalorder %s70, 0
      %p519 = por %p517, %p518
      %p520 = scmp.ne.s32.totalorder %s512, %s514
      %p521 = scmp.eq.s32.totalorder %s75, 1
      %p522 = por %p520, %p521
      %p523 = scmp.ne.s32.totalorder %s514, %s515
      %p524 = scmp.eq.s32.totalorder %s75, 0
      %p525 = por %p523, %p524
      %p526 = scmp.ne.s32.totalorder %s514, %s515
      %p527 = scmp.eq.s32.totalorder %s76, 1
      %p528 = por %p526, %p527
      %p530 = scmp.ne.s32.totalorder %s515, %s529
      %p531 = scmp.eq.s32.totalorder %s76, 0
      %p532 = por %p530, %p531
      %s534 = sadd.s32 %s533, 1
      %p537 = scmp.eq.s32.totalorder %s70, 1
      %p538 = scmp.ne.s32.totalorder %s533, %s535
      %p539 = scmp.eq.s32.totalorder %s70, 0
      %p540 = por %p538, %p539
      %p541 = scmp.ne.s32.totalorder %s533, %s535
      %p542 = scmp.eq.s32.totalorder %s75, 1
      %p543 = por %p541, %p542
      %p544 = scmp.ne.s32.totalorder %s535, %s536
      %p545 = scmp.eq.s32.totalorder %s75, 0
      %p546 = por %p544, %p545
      %p547 = scmp.ne.s32.totalorder %s535, %s536
      %p548 = scmp.eq.s32.totalorder %s76, 1
      %p549 = por %p547, %p548
      %p551 = scmp.ne.s32.totalorder %s536, %s550
      %p552 = scmp.eq.s32.totalorder %s76, 0
      %p553 = por %p551, %p552
      %s555 = sadd.s32 %s554, 1
      %p558 = scmp.eq.s32.totalorder %s70, 1
      %p559 = scmp.ne.s32.totalorder %s554, %s556
      %p560 = scmp.eq.s32.totalorder %s70, 0
      %p561 = por %p559, %p560
      %p562 = scmp.ne.s32.totalorder %s554, %s556
      %p563 = scmp.eq.s32.totalorder %s75, 1
      %p564 = por %p562, %p563
      %p565 = scmp.ne.s32.totalorder %s556, %s557
      %p566 = scmp.eq.s32.totalorder %s75, 0
      %p567 = por %p565, %p566
      %p568 = scmp.ne.s32.totalorder %s556, %s557
      %p569 = scmp.eq.s32.totalorder %s76, 1
      %p570 = por %p568, %p569
      %p572 = scmp.ne.s32.totalorder %s557, %s571
      %p573 = scmp.eq.s32.totalorder %s76, 0
      %p574 = por %p572, %p573
      %s576 = sadd.s32 %s575, 1
      %p579 = scmp.eq.s32.totalorder %s70, 1
      %p580 = scmp.ne.s32.totalorder %s575, %s577
      %p581 = scmp.eq.s32.totalorder %s70, 0
      %p582 = por %p580, %p581
      %p583 = scmp.ne.s32.totalorder %s575, %s577
      %p584 = scmp.eq.s32.totalorder %s75, 1
      %p585 = por %p583, %p584
      %p586 = scmp.ne.s32.totalorder %s577, %s578
      %p587 = scmp.eq.s32.totalorder %s75, 0
      %p588 = por %p586, %p587
      %p589 = scmp.ne.s32.totalorder %s577, %s578
      %p590 = scmp.eq.s32.totalorder %s76, 1
      %p591 = por %p589, %p590
      %p593 = scmp.ne.s32.totalorder %s578, %s592
      %p594 = scmp.eq.s32.totalorder %s76, 0
      %p595 = por %p593, %p594
      %s597 = sadd.s32 %s596, 1
      %p600 = scmp.eq.s32.totalorder %s70, 1
      %p601 = scmp.ne.s32.totalorder %s596, %s598
      %p602 = scmp.eq.s32.totalorder %s70, 0
      %p603 = por %p601, %p602
      %p604 = scmp.ne.s32.totalorder %s596, %s598
      %p605 = scmp.eq.s32.totalorder %s75, 1
      %p606 = por %p604, %p605
      %p607 = scmp.ne.s32.totalorder %s598, %s599
      %p608 = scmp.eq.s32.totalorder %s75, 0
      %p609 = por %p607, %p608
      %p610 = scmp.ne.s32.totalorder %s598, %s599
      %p611 = scmp.eq.s32.totalorder %s76, 1
      %p612 = por %p610, %p611
      %p614 = scmp.ne.s32.totalorder %s599, %s613
      %p615 = scmp.eq.s32.totalorder %s76, 0
      %p616 = por %p614, %p615
      %s618 = sadd.s32 %s617, 1
      %p621 = scmp.eq.s32.totalorder %s70, 1
      %p622 = scmp.ne.s32.totalorder %s617, %s619
      %p623 = scmp.eq.s32.totalorder %s70, 0
      %p624 = por %p622, %p623
      %p625 = scmp.ne.s32.totalorder %s617, %s619
      %p626 = scmp.eq.s32.totalorder %s75, 1
      %p627 = por %p625, %p626
      %p628 = scmp.ne.s32.totalorder %s619, %s620
      %p629 = scmp.eq.s32.totalorder %s75, 0
      %p630 = por %p628, %p629
      %p631 = scmp.ne.s32.totalorder %s619, %s620
      %p632 = scmp.eq.s32.totalorder %s76, 1
      %p633 = por %p631, %p632
      %p635 = scmp.ne.s32.totalorder %s620, %s634
      %p636 = scmp.eq.s32.totalorder %s76, 0
      %p637 = por %p635, %p636
      %s639 = sadd.s32 %s638, 1
      %p642 = scmp.eq.s32.totalorder %s70, 1
      %p643 = scmp.ne.s32.totalorder %s638, %s640
      %p644 = scmp.eq.s32.totalorder %s70, 0
      %p645 = por %p643, %p644
      %p646 = scmp.ne.s32.totalorder %s638, %s640
      %p647 = scmp.eq.s32.totalorder %s75, 1
      %p648 = por %p646, %p647
      %p649 = scmp.ne.s32.totalorder %s640, %s641
      %p650 = scmp.eq.s32.totalorder %s75, 0
      %p651 = por %p649, %p650
      %p652 = scmp.ne.s32.totalorder %s640, %s641
      %p653 = scmp.eq.s32.totalorder %s76, 1
      %p654 = por %p652, %p653
      %p656 = scmp.ne.s32.totalorder %s641, %s655
      %p657 = scmp.eq.s32.totalorder %s76, 0
      %p658 = por %p656, %p657
      %s660 = sadd.s32 %s659, 1
      %p663 = scmp.eq.s32.totalorder %s70, 1
      %p664 = scmp.ne.s32.totalorder %s659, %s661
      %p665 = scmp.eq.s32.totalorder %s70, 0
      %p666 = por %p664, %p665
      %p667 = scmp.ne.s32.totalorder %s659, %s661
      %p668 = scmp.eq.s32.totalorder %s75, 1
      %p669 = por %p667, %p668
      %p670 = scmp.ne.s32.totalorder %s661, %s662
      %p671 = scmp.eq.s32.totalorder %s75, 0
      %p672 = por %p670, %p671
      %p673 = scmp.ne.s32.totalorder %s661, %s662
      %p674 = scmp.eq.s32.totalorder %s76, 1
      %p675 = por %p673, %p674
      %p677 = scmp.ne.s32.totalorder %s662, %s676
      %p678 = scmp.eq.s32.totalorder %s76, 0
      %p679 = por %p677, %p678
      %s681 = sadd.s32 %s680, 1
      %p684 = scmp.eq.s32.totalorder %s70, 1
      %p685 = scmp.ne.s32.totalorder %s680, %s682
      %p686 = scmp.eq.s32.totalorder %s70, 0
      %p687 = por %p685, %p686
      %p688 = scmp.ne.s32.totalorder %s680, %s682
      %p689 = scmp.eq.s32.totalorder %s75, 1
      %p690 = por %p688, %p689
      %p691 = scmp.ne.s32.totalorder %s682, %s683
      %p692 = scmp.eq.s32.totalorder %s75, 0
      %p693 = por %p691, %p692
      %p694 = scmp.ne.s32.totalorder %s682, %s683
      %p695 = scmp.eq.s32.totalorder %s76, 1
      %p696 = por %p694, %p695
      %p698 = scmp.ne.s32.totalorder %s683, %s697
      %p699 = scmp.eq.s32.totalorder %s76, 0
      %p700 = por %p698, %p699
      %s702 = sadd.s32 %s701, 1
      %p705 = scmp.eq.s32.totalorder %s70, 1
      %p706 = scmp.ne.s32.totalorder %s701, %s703
      %p707 = scmp.eq.s32.totalorder %s70, 0
      %p708 = por %p706, %p707
      %p709 = scmp.ne.s32.totalorder %s701, %s703
      %p710 = scmp.eq.s32.totalorder %s75, 1
      %p711 = por %p709, %p710
      %p712 = scmp.ne.s32.totalorder %s703, %s704
      %p713 = scmp.eq.s32.totalorder %s75, 0
      %p714 = por %p712, %p713
      %p715 = scmp.ne.s32.totalorder %s703, %s704
      %p716 = scmp.eq.s32.totalorder %s76, 1
      %p717 = por %p715, %p716
      %p719 = scmp.ne.s32.totalorder %s704, %s718
      %p720 = scmp.eq.s32.totalorder %s76, 0
      %p721 = por %p719, %p720
      %s723 = sadd.s32 %s722, 1
      %p726 = scmp.eq.s32.totalorder %s70, 1
      %p727 = scmp.ne.s32.totalorder %s722, %s724
      %p728 = scmp.eq.s32.totalorder %s70, 0
      %p729 = por %p727, %p728
      %p730 = scmp.ne.s32.totalorder %s722, %s724
      %p731 = scmp.eq.s32.totalorder %s75, 1
      %p732 = por %p730, %p731
      %p733 = scmp.ne.s32.totalorder %s724, %s725
      %p734 = scmp.eq.s32.totalorder %s75, 0
      %p735 = por %p733, %p734
      %p736 = scmp.ne.s32.totalorder %s724, %s725
      %p737 = scmp.eq.s32.totalorder %s76, 1
      %p738 = por %p736, %p737
      %p740 = scmp.ne.s32.totalorder %s725, %s739
      %p741 = scmp.eq.s32.totalorder %s76, 0
      %p742 = por %p740, %p741
      %s744 = sadd.s32 %s743, 1
      %p747 = scmp.eq.s32.totalorder %s70, 1
      %p748 = scmp.ne.s32.totalorder %s743, %s745
      %p749 = scmp.eq.s32.totalorder %s70, 0
      %p750 = por %p748, %p749
      %p751 = scmp.ne.s32.totalorder %s743, %s745
      %p752 = scmp.eq.s32.totalorder %s75, 1
      %p753 = por %p751, %p752
      %p754 = scmp.ne.s32.totalorder %s745, %s746
      %p755 = scmp.eq.s32.totalorder %s75, 0
      %p756 = por %p754, %p755
      %p757 = scmp.ne.s32.totalorder %s745, %s746
      %p758 = scmp.eq.s32.totalorder %s76, 1
      %p759 = por %p757, %p758
      %p761 = scmp.ne.s32.totalorder %s746, %s760
      %p762 = scmp.eq.s32.totalorder %s76, 0
      %p763 = por %p761, %p762
      %s765 = sadd.s32 %s764, 1
      %p768 = scmp.eq.s32.totalorder %s70, 1
      %p769 = scmp.ne.s32.totalorder %s764, %s766
      %p770 = scmp.eq.s32.totalorder %s70, 0
      %p771 = por %p769, %p770
      %p772 = scmp.ne.s32.totalorder %s764, %s766
      %p773 = scmp.eq.s32.totalorder %s75, 1
      %p774 = por %p772, %p773
      %p775 = scmp.ne.s32.totalorder %s766, %s767
      %p776 = scmp.eq.s32.totalorder %s75, 0
      %p777 = por %p775, %p776
      %p778 = scmp.ne.s32.totalorder %s766, %s767
      %p779 = scmp.eq.s32.totalorder %s76, 1
      %p780 = por %p778, %p779
      %p782 = scmp.ne.s32.totalorder %s767, %s781
      %p783 = scmp.eq.s32.totalorder %s76, 0
      %p784 = por %p782, %p783
      %p785 = scmp.le.s32.totalorder 1, %s70
      %p786 = scmp.lt.s32.totalorder %s70, 3
      %p787 = pnand %p785, %p786
      %p788 = pneg %p787
      // Predicated region
      $region9: #{benetech_forward.1} parent=5 // pred_check
        _
      $region10: #{benetech_forward.1} parent=5 // pred_check_branch
        %790 = sbr.rel (%p787) target = $region12
      $region11: #{benetech_forward.1} parent=5 // pred_region
        %s791 = ssub.s32 %s70, 1
        // Predicated region
        $region13: #{benetech_forward.1} parent=11 // pred_check
          %p792 = pneg %p273
        $region14: #{benetech_forward.1} parent=11 // pred_check_branch
          %794 = sbr.rel (%p792) target = $region16
        $region15: #{benetech_forward.1} parent=11 // pred_region
          _
        $region16: #{benetech_forward.1} parent=11 // pred_fallthru
          _
        // Predicated region
        $region17: #{benetech_forward.1} parent=11 // pred_check
          %p795 = pneg %p294
        $region18: #{benetech_forward.1} parent=11 // pred_check_branch
          %797 = sbr.rel (%p795) target = $region20
        $region19: #{benetech_forward.1} parent=11 // pred_region
          _
        $region20: #{benetech_forward.1} parent=11 // pred_fallthru
          _
        // Predicated region
        $region21: #{benetech_forward.1} parent=11 // pred_check
          %p798 = pneg %p315
        $region22: #{benetech_forward.1} parent=11 // pred_check_branch
          %800 = sbr.rel (%p798) target = $region24
        $region23: #{benetech_forward.1} parent=11 // pred_region
          _
        $region24: #{benetech_forward.1} parent=11 // pred_fallthru
          _
        // Predicated region
        $region25: #{benetech_forward.1} parent=11 // pred_check
          %p801 = pneg %p336
        $region26: #{benetech_forward.1} parent=11 // pred_check_branch
          %803 = sbr.rel (%p801) target = $region28
        $region27: #{benetech_forward.1} parent=11 // pred_region
          _
        $region28: #{benetech_forward.1} parent=11 // pred_fallthru
          _
        // Predicated region
        $region29: #{benetech_forward.1} parent=11 // pred_check
          %p804 = pneg %p357
        $region30: #{benetech_forward.1} parent=11 // pred_check_branch
          %806 = sbr.rel (%p804) target = $region32
        $region31: #{benetech_forward.1} parent=11 // pred_region
          _
        $region32: #{benetech_forward.1} parent=11 // pred_fallthru
          _
        // Predicated region
        $region33: #{benetech_forward.1} parent=11 // pred_check
          %p807 = pneg %p378
        $region34: #{benetech_forward.1} parent=11 // pred_check_branch
          %809 = sbr.rel (%p807) target = $region36
        $region35: #{benetech_forward.1} parent=11 // pred_region
          _
        $region36: #{benetech_forward.1} parent=11 // pred_fallthru
          _
        // Predicated region
        $region37: #{benetech_forward.1} parent=11 // pred_check
          %p810 = pneg %p399
        $region38: #{benetech_forward.1} parent=11 // pred_check_branch
          %812 = sbr.rel (%p810) target = $region40
        $region39: #{benetech_forward.1} parent=11 // pred_region
          _
        $region40: #{benetech_forward.1} parent=11 // pred_fallthru
          _
        // Predicated region
        $region41: #{benetech_forward.1} parent=11 // pred_check
          %p813 = pneg %p420
        $region42: #{benetech_forward.1} parent=11 // pred_check_branch
          %815 = sbr.rel (%p813) target = $region44
        $region43: #{benetech_forward.1} parent=11 // pred_region
          _
        $region44: #{benetech_forward.1} parent=11 // pred_fallthru
          _
        // Predicated region
        $region45: #{benetech_forward.1} parent=11 // pred_check
          %p816 = pneg %p441
        $region46: #{benetech_forward.1} parent=11 // pred_check_branch
          %818 = sbr.rel (%p816) target = $region48
        $region47: #{benetech_forward.1} parent=11 // pred_region
          _
        $region48: #{benetech_forward.1} parent=11 // pred_fallthru
          _
        // Predicated region
        $region49: #{benetech_forward.1} parent=11 // pred_check
          %p819 = pneg %p462
        $region50: #{benetech_forward.1} parent=11 // pred_check_branch
          %821 = sbr.rel (%p819) target = $region52
        $region51: #{benetech_forward.1} parent=11 // pred_region
          _
        $region52: #{benetech_forward.1} parent=11 // pred_fallthru
          _
        // Predicated region
        $region53: #{benetech_forward.1} parent=11 // pred_check
          %p822 = pneg %p483
        $region54: #{benetech_forward.1} parent=11 // pred_check_branch
          %824 = sbr.rel (%p822) target = $region56
        $region55: #{benetech_forward.1} parent=11 // pred_region
          _
        $region56: #{benetech_forward.1} parent=11 // pred_fallthru
          _
        // Predicated region
        $region57: #{benetech_forward.1} parent=11 // pred_check
          %p825 = pneg %p504
        $region58: #{benetech_forward.1} parent=11 // pred_check_branch
          %827 = sbr.rel (%p825) target = $region60
        $region59: #{benetech_forward.1} parent=11 // pred_region
          _
        $region60: #{benetech_forward.1} parent=11 // pred_fallthru
          _
        // Predicated region
        $region61: #{benetech_forward.1} parent=11 // pred_check
          %p828 = pneg %p525
        $region62: #{benetech_forward.1} parent=11 // pred_check_branch
          %830 = sbr.rel (%p828) target = $region64
        $region63: #{benetech_forward.1} parent=11 // pred_region
          _
        $region64: #{benetech_forward.1} parent=11 // pred_fallthru
          _
        // Predicated region
        $region65: #{benetech_forward.1} parent=11 // pred_check
          %p831 = pneg %p546
        $region66: #{benetech_forward.1} parent=11 // pred_check_branch
          %833 = sbr.rel (%p831) target = $region68
        $region67: #{benetech_forward.1} parent=11 // pred_region
          _
        $region68: #{benetech_forward.1} parent=11 // pred_fallthru
          _
        // Predicated region
        $region69: #{benetech_forward.1} parent=11 // pred_check
          %p834 = pneg %p567
        $region70: #{benetech_forward.1} parent=11 // pred_check_branch
          %836 = sbr.rel (%p834) target = $region72
        $region71: #{benetech_forward.1} parent=11 // pred_region
          _
        $region72: #{benetech_forward.1} parent=11 // pred_fallthru
          _
        // Predicated region
        $region73: #{benetech_forward.1} parent=11 // pred_check
          %p837 = pneg %p588
        $region74: #{benetech_forward.1} parent=11 // pred_check_branch
          %839 = sbr.rel (%p837) target = $region76
        $region75: #{benetech_forward.1} parent=11 // pred_region
          _
        $region76: #{benetech_forward.1} parent=11 // pred_fallthru
          _
        // Predicated region
        $region77: #{benetech_forward.1} parent=11 // pred_check
          %p840 = pneg %p609
        $region78: #{benetech_forward.1} parent=11 // pred_check_branch
          %842 = sbr.rel (%p840) target = $region80
        $region79: #{benetech_forward.1} parent=11 // pred_region
          _
        $region80: #{benetech_forward.1} parent=11 // pred_fallthru
          _
        // Predicated region
        $region81: #{benetech_forward.1} parent=11 // pred_check
          %p843 = pneg %p630
        $region82: #{benetech_forward.1} parent=11 // pred_check_branch
          %845 = sbr.rel (%p843) target = $region84
        $region83: #{benetech_forward.1} parent=11 // pred_region
          _
        $region84: #{benetech_forward.1} parent=11 // pred_fallthru
          _
        // Predicated region
        $region85: #{benetech_forward.1} parent=11 // pred_check
          %p846 = pneg %p651
        $region86: #{benetech_forward.1} parent=11 // pred_check_branch
          %848 = sbr.rel (%p846) target = $region88
        $region87: #{benetech_forward.1} parent=11 // pred_region
          _
        $region88: #{benetech_forward.1} parent=11 // pred_fallthru
          _
        // Predicated region
        $region89: #{benetech_forward.1} parent=11 // pred_check
          %p849 = pneg %p672
        $region90: #{benetech_forward.1} parent=11 // pred_check_branch
          %851 = sbr.rel (%p849) target = $region92
        $region91: #{benetech_forward.1} parent=11 // pred_region
          _
        $region92: #{benetech_forward.1} parent=11 // pred_fallthru
          _
        // Predicated region
        $region93: #{benetech_forward.1} parent=11 // pred_check
          %p852 = pneg %p693
        $region94: #{benetech_forward.1} parent=11 // pred_check_branch
          %854 = sbr.rel (%p852) target = $region96
        $region95: #{benetech_forward.1} parent=11 // pred_region
          _
        $region96: #{benetech_forward.1} parent=11 // pred_fallthru
          _
        // Predicated region
        $region97: #{benetech_forward.1} parent=11 // pred_check
          %p855 = pneg %p714
        $region98: #{benetech_forward.1} parent=11 // pred_check_branch
          %857 = sbr.rel (%p855) target = $region100
        $region99: #{benetech_forward.1} parent=11 // pred_region
          _
        $region100: #{benetech_forward.1} parent=11 // pred_fallthru
          _
        // Predicated region
        $region101: #{benetech_forward.1} parent=11 // pred_check
          %p858 = pneg %p735
        $region102: #{benetech_forward.1} parent=11 // pred_check_branch
          %860 = sbr.rel (%p858) target = $region104
        $region103: #{benetech_forward.1} parent=11 // pred_region
          _
        $region104: #{benetech_forward.1} parent=11 // pred_fallthru
          _
        // Predicated region
        $region105: #{benetech_forward.1} parent=11 // pred_check
          %p861 = pneg %p756
        $region106: #{benetech_forward.1} parent=11 // pred_check_branch
          %863 = sbr.rel (%p861) target = $region108
        $region107: #{benetech_forward.1} parent=11 // pred_region
          _
        $region108: #{benetech_forward.1} parent=11 // pred_fallthru
          _
      $region12: #{benetech_forward.1} parent=5 // pred_fallthru
        _
      %p864 = scmp.lt.s32.totalorder %s70, 2
      // Predicated region
      $region109: #{benetech_forward.1} parent=5 // pred_check
        %p865 = pneg %p864
      $region110: #{benetech_forward.1} parent=5 // pred_check_branch
        %867 = sbr.rel (%p865) target = $region112
      $region111: #{benetech_forward.1} parent=5 // pred_region
        // Predicated region
        $region113: #{benetech_forward.1} parent=111 // pred_check
          %p868 = pneg %p90
        $region114: #{benetech_forward.1} parent=111 // pred_check_branch
          %870 = sbr.rel (%p868) target = $region116
        $region115: #{benetech_forward.1} parent=111 // pred_region
          %p871 = scmp.lt.s32.totalorder %s70, 1
          %s872 = scalar_select %p871, %s70, 1
          %s873 = smul.addr %s872, 8
          %s874 = scalar_lea.vmem %s1, %s873
        $region116: #{benetech_forward.1} parent=111 // pred_fallthru
          _
        // Predicated region
        $region117: #{benetech_forward.1} parent=111 // pred_check
          %p875 = pneg %p116
        $region118: #{benetech_forward.1} parent=111 // pred_check_branch
          %877 = sbr.rel (%p875) target = $region120
        $region119: #{benetech_forward.1} parent=111 // pred_region
          %p878 = scmp.lt.s32.totalorder %s70, 1
          %s879 = scalar_select %p878, %s70, 1
          %s880 = smul.addr %s879, 8
          %s881 = scalar_lea.vmem %s3, %s880
        $region120: #{benetech_forward.1} parent=111 // pred_fallthru
          _
        // Predicated region
        $region121: #{benetech_forward.1} parent=111 // pred_check
          %p882 = pneg %p142
        $region122: #{benetech_forward.1} parent=111 // pred_check_branch
          %884 = sbr.rel (%p882) target = $region124
        $region123: #{benetech_forward.1} parent=111 // pred_region
          %p885 = scmp.lt.s32.totalorder %s70, 1
          %s886 = scalar_select %p885, %s70, 1
          %s887 = smul.addr %s886, 8
          %s888 = scalar_lea.vmem %s5, %s887
        $region124: #{benetech_forward.1} parent=111 // pred_fallthru
          _
        // Predicated region
        $region125: #{benetech_forward.1} parent=111 // pred_check
          %p889 = pneg %p168
        $region126: #{benetech_forward.1} parent=111 // pred_check_branch
          %891 = sbr.rel (%p889) target = $region128
        $region127: #{benetech_forward.1} parent=111 // pred_region
          %p892 = scmp.lt.s32.totalorder %s70, 1
          %s893 = scalar_select %p892, %s70, 1
          %s894 = scalar_lea.vmem %s7, %s893
        $region128: #{benetech_forward.1} parent=111 // pred_fallthru
          _
        // Predicated region
        $region129: #{benetech_forward.1} parent=111 // pred_check
          %p895 = pneg %p194
        $region130: #{benetech_forward.1} parent=111 // pred_check_branch
          %897 = sbr.rel (%p895) target = $region132
        $region131: #{benetech_forward.1} parent=111 // pred_region
          %p898 = scmp.lt.s32.totalorder %s70, 1
          %s899 = scalar_select %p898, %s70, 1
          %s900 = smul.addr %s899, 8
          %s901 = scalar_lea.vmem %s9, %s900
        $region132: #{benetech_forward.1} parent=111 // pred_fallthru
          _
        // Predicated region
        $region133: #{benetech_forward.1} parent=111 // pred_check
          %p902 = pneg %p220
        $region134: #{benetech_forward.1} parent=111 // pred_check_branch
          %904 = sbr.rel (%p902) target = $region136
        $region135: #{benetech_forward.1} parent=111 // pred_region
          %p905 = scmp.lt.s32.totalorder %s70, 1
          %s906 = scalar_select %p905, %s70, 1
          %s907 = scalar_lea.vmem %s11, %s906
        $region136: #{benetech_forward.1} parent=111 // pred_fallthru
          _
        // Predicated region
        $region137: #{benetech_forward.1} parent=111 // pred_check
          %p908 = pneg %p246
        $region138: #{benetech_forward.1} parent=111 // pred_check_branch
          %910 = sbr.rel (%p908) target = $region140
        $region139: #{benetech_forward.1} parent=111 // pred_region
          %p911 = scmp.lt.s32.totalorder %s70, 1
          %s912 = scalar_select %p911, %s70, 1
          %s913 = smul.addr %s912, 8
          %s914 = scalar_lea.vmem %s13, %s913
        $region140: #{benetech_forward.1} parent=111 // pred_fallthru
          _
      $region112: #{benetech_forward.1} parent=5 // pred_fallthru
        _
      %p915 = scmp.le.s32.totalorder 1, %s70
      %p916 = scmp.lt.s32.totalorder %s70, 3
      %p917 = pnand %p915, %p916
      %p918 = pneg %p917
      // Predicated region
      $region141: #{benetech_forward.1} parent=5 // pred_check
        _
      $region142: #{benetech_forward.1} parent=5 // pred_check_branch
        %920 = sbr.rel (%p917) target = $region144
      $region143: #{benetech_forward.1} parent=5 // pred_region
        %s921 = ssub.s32 %s70, 1
        %p922 = scmp.lt.s32.totalorder %s75, 1
        %s923 = scalar_select %p922, %s75, 1
        %s924 = smul.addr %s923, 8
        %s925 = scalar_lea.vmem %s1, %s924
        %p926 = pneg %p96
        %p927 = pneg %p93
        %p928 = scmp.lt.s32.totalorder %s75, 1
        %s929 = scalar_select %p928, %s75, 1
        %s930 = smul.addr %s929, 8
        %s931 = scalar_lea.vmem %s3, %s930
        %p932 = pneg %p122
        %p933 = pneg %p119
        %p934 = scmp.lt.s32.totalorder %s75, 1
        %s935 = scalar_select %p934, %s75, 1
        %s936 = smul.addr %s935, 8
        %s937 = scalar_lea.vmem %s5, %s936
        %p938 = pneg %p148
        %p939 = pneg %p145
        %p940 = scmp.lt.s32.totalorder %s75, 1
        %s941 = scalar_select %p940, %s75, 1
        %s942 = scalar_lea.vmem %s7, %s941
        %p943 = pneg %p174
        %p944 = pneg %p171
        %p945 = scmp.lt.s32.totalorder %s75, 1
        %s946 = scalar_select %p945, %s75, 1
        %s947 = smul.addr %s946, 8
        %s948 = scalar_lea.vmem %s9, %s947
        %p949 = pneg %p200
        %p950 = pneg %p197
        %p951 = scmp.lt.s32.totalorder %s75, 1
        %s952 = scalar_select %p951, %s75, 1
        %s953 = scalar_lea.vmem %s11, %s952
        %p954 = pneg %p226
        %p955 = pneg %p223
        %p956 = scmp.lt.s32.totalorder %s75, 1
        %s957 = scalar_select %p956, %s75, 1
        %s958 = smul.addr %s957, 8
        %s959 = scalar_lea.vmem %s13, %s958
        %p960 = pneg %p252
        %p961 = pneg %p249
        %p962 = pneg %p273
        %p963 = pneg %p270
        %p964 = pneg %p294
        %p965 = pneg %p291
        %p966 = pneg %p315
        %p967 = pneg %p312
        %p968 = pneg %p336
        %p969 = pneg %p333
        %p970 = pneg %p357
        %p971 = pneg %p354
        %p972 = pneg %p378
        %p973 = pneg %p375
        %p974 = pneg %p399
        %p975 = pneg %p396
        %p976 = pneg %p420
        %p977 = pneg %p417
        %p978 = pneg %p441
        %p979 = pneg %p438
        %p980 = pneg %p462
        %p981 = pneg %p459
        %p982 = pneg %p483
        %p983 = pneg %p480
        %p984 = pneg %p504
        %p985 = pneg %p501
        %p986 = pneg %p525
        %p987 = pneg %p522
        %p988 = pneg %p546
        %p989 = pneg %p543
        %p990 = pneg %p567
        %p991 = pneg %p564
        %p992 = pneg %p588
        %p993 = pneg %p585
        %p994 = pneg %p609
        %p995 = pneg %p606
        %p996 = pneg %p630
        %p997 = pneg %p627
        %p998 = pneg %p651
        %p999 = pneg %p648
        %p1000 = pneg %p672
        %p1001 = pneg %p669
        %p1002 = pneg %p693
        %p1003 = pneg %p690
        %p1004 = pneg %p714
        %p1005 = pneg %p711
        %p1006 = pneg %p735
        %p1007 = pneg %p732
        %p1008 = pneg %p756
        %p1009 = pneg %p753
        %p1010 = pneg %p777
        %p1011 = pneg %p774
        %p1012 = scmp.lt.s32.totalorder %s75, 1
        %s1013 = scalar_select %p1012, %s75, 1
        %s1014 = smul.addr %s1013, 8
        %s1015 = scalar_lea.vmem %s1, %s1014
        %p1016 = scmp.lt.s32.totalorder %s75, 1
        %s1017 = scalar_select %p1016, %s75, 1
        %s1018 = smul.addr %s1017, 8
        %s1019 = scalar_lea.vmem %s3, %s1018
        %p1020 = scmp.lt.s32.totalorder %s75, 1
        %s1021 = scalar_select %p1020, %s75, 1
        %s1022 = smul.addr %s1021, 8
        %s1023 = scalar_lea.vmem %s5, %s1022
        %p1024 = scmp.lt.s32.totalorder %s75, 1
        %s1025 = scalar_select %p1024, %s75, 1
        %s1026 = scalar_lea.vmem %s7, %s1025
        %p1027 = scmp.lt.s32.totalorder %s75, 1
        %s1028 = scalar_select %p1027, %s75, 1
        %s1029 = smul.addr %s1028, 8
        %s1030 = scalar_lea.vmem %s9, %s1029
        %p1031 = scmp.lt.s32.totalorder %s75, 1
        %s1032 = scalar_select %p1031, %s75, 1
        %s1033 = scalar_lea.vmem %s11, %s1032
        %p1034 = scmp.lt.s32.totalorder %s75, 1
        %s1035 = scalar_select %p1034, %s75, 1
        %s1036 = smul.addr %s1035, 8
        %s1037 = scalar_lea.vmem %s13, %s1036
        %p1038 = scmp.eq.s32.totalorder %s75, 0
        // Predicated region
        $region145: #{benetech_forward.1} parent=143 // pred_check
          %p1039 = pneg %p1038
        $region146: #{benetech_forward.1} parent=143 // pred_check_branch
          %1041 = sbr.rel (%p1039) target = $region148
        $region147: #{benetech_forward.1} parent=143 // pred_region
          %vm1042 = vcmask 0
          %1043 = vst.msk [vmem:[#allocation2] sm:$0x1] %vm1042, 0.0
          %1044 = vst.msk [vmem:[#allocation3] sm:$0x1] %vm1042, 0.0
        $region148: #{benetech_forward.1} parent=143 // pred_fallthru
          _
        %v1045 = vld [vmem:[%s1015] sm:$0xff]
        %v1046 = vld [vmem:[%s1019] sm:$0xff]
        %v1047 = vld [vmem:[%s1023] sm:$0xff]
        %v1048 = vld [vmem:[%s1026] sm:$0x1]
        %v1049 = vlaneseq
        %v1050 = vand.u32 %v1049, 127
        %1051 = vset.pattern.permute.xlu0 0
        %1052 = vperm.xlu0 %1051, %v1046
        %v1053 = vpop.permute.xlu0 %1052
        %vm1054 = vcmp.eq.s32.totalorder %v1050, %v1053
        %v1055 = vsel %vm1054, 1, 0
        %v1056 = vcvt.s32.f32 %v1055
        %1057 = vset.pattern.permute.xlu0 0
        %1058 = vperm.xlu0 %1057, %v1047
        %v1059 = vpop.permute.xlu0 %1058
        %vm1060 = vcmp.eq.s32.totalorder %v1050, %v1059
        %v1061 = vsel %vm1060, 1, 0
        %v1062 = vcvt.s32.f32 %v1061
        %v1063 = vld [vmem:[%s15] sm:$0xff]
        %v1064 = vld [vmem:[%s15 + $0x8] sm:$0xff]
        %v1065 = vld [vmem:[%s15 + $0x10] sm:$0xff]
        %v1066 = vld [vmem:[%s15 + $0x18] sm:$0x3f]
        %v1067 = vld [vmem:[%s17] sm:$0xff]
        %v1068 = vld [vmem:[%s17 + $0x8] sm:$0xff]
        %vm1069 = vcmask 130048
        %v1071 = vsel %vm1069, %v1056, 0
        %1073 = vmatprep.subr.mxu0 0.0
        %1074 = vmatpush1.msra.mxu0 %v1067
        %1075 = vmatprep.subr.mxu0 0.0
        %1076 = vmatpush1.msra.mxu0 %v1068
        %1077 = vmatprep.subr.mxu0 0.0
        %1078 = vmatpush1.msra.mxu0 0.0
        %1079 = vmatprep.subr.mxu0 0.0
        %1080 = vmatpush1.msra.mxu0 0.0
        %1081 = vmatprep.subr.mxu0 0.0
        %1082 = vmatpush1.msra.mxu0 0.0
        %1083 = vmatprep.subr.mxu0 0.0
        %1084 = vmatpush1.msra.mxu0 0.0
        %1085 = vmatprep.subr.mxu0 0.0
        %1086 = vmatpush1.msra.mxu0 0.0
        %1087 = vmatprep.subr.mxu0 0.0
        %1088 = vmatpush1.msra.mxu0 0.0
        %1089 = vmatprep.subr.mxu0 0.0
        %1090 = vmatpush1.msra.mxu0 0.0
        %1091 = vmatprep.subr.mxu0 0.0
        %1092 = vmatpush1.msra.mxu0 0.0
        %1093 = vmatprep.subr.mxu0 0.0
        %1094 = vmatpush1.msra.mxu0 0.0
        %1095 = vmatprep.subr.mxu0 0.0
        %1096 = vmatpush1.msra.mxu0 0.0
        %1097 = vmatprep.subr.mxu0 0.0
        %1098 = vmatpush1.msra.mxu0 0.0
        %1099 = vmatprep.subr.mxu0 0.0
        %1100 = vmatpush1.msra.mxu0 0.0
        %1101 = vmatprep.subr.mxu0 0.0
        %1102 = vmatpush1.msra.mxu0 0.0
        %1103 = vmatprep.subr.mxu0 0.0
        %1104 = vmatpush1.msra.mxu0 0.0
        %1105 = vmatprep.subr.mxu0 0.0
        %1106 = vmatpush1.msra.mxu0 0.0
        %1107 = vmatprep.subr.mxu0 0.0
        %1108 = vmatpush1.msra.mxu0 0.0
        %1109 = vmatprep.subr.mxu0 0.0
        %1110 = vmatpush1.msra.mxu0 0.0
        %1111 = vmatprep.subr.mxu0 0.0
        %1112 = vmatpush1.msra.mxu0 0.0
        %1113 = vmatprep.subr.mxu0 0.0
        %1114 = vmatpush1.msra.mxu0 0.0
        %1115 = vmatprep.subr.mxu0 0.0
        %1116 = vmatpush1.msra.mxu0 0.0
        %1117 = vmatprep.subr.mxu0 0.0
        %1118 = vmatpush1.msra.mxu0 0.0
        %1119 = vmatprep.subr.mxu0 0.0
        %1120 = vmatpush1.msra.mxu0 0.0
        %1121 = vmatprep.subr.mxu0 0.0
        %1122 = vmatpush1.msra.mxu0 0.0
        %1123 = vmatprep.subr.mxu0 0.0
        %1124 = vmatpush1.msra.mxu0 0.0
        %1125 = vmatprep.subr.mxu0 0.0
        %1126 = vmatpush1.msra.mxu0 0.0
        %1127 = vmatprep.subr.mxu0 0.0
        %1128 = vmatpush1.msra.mxu0 0.0
        %1129 = vmatprep.subr.mxu0 0.0
        %1130 = vmatpush1.msra.mxu0 0.0
        %1131 = vmatprep.subr.mxu0 0.0
        %1132 = vmatpush1.msra.mxu0 0.0
        %1133 = vmatprep.subr.mxu0 0.0
        %1134 = vmatpush1.msra.mxu0 0.0
        %1135 = vmatprep.subr.mxu0 0.0
        %1136 = vmatpush1.msra.mxu0 0.0
        %1137 = vmatprep.mubr.f32.mxu0 0.0
        %1138 = vmatmul.mubr.f32.gmra.mrb[0].mxu0 %v1071
        %v1139 = vpop.f32.mrb[0].mxu0
        %v1140 = vadd.f32 0.0, %v1139
        %v1141 = vpop.f32.mrb[0].mxu0
        %1142 = vdwg.mxu0
        %vm1143 = vcmask 244736
        %v1145 = vsel %vm1143, %v1045, 0
        %vm1147 = vcmask 1045504
        %v1149 = vsel %vm1147, %v1066, 0
        %1151 = vmatprep.subr.mxu0 0.0
        %1152 = vmatpush1.msra.mxu0 %v1063
        %1153 = vmatprep.subr.mxu0 0.0
        %1154 = vmatpush1.msra.mxu0 %v1064
        %1155 = vmatprep.subr.mxu0 0.0
        %1156 = vmatpush1.msra.mxu0 %v1065
        %1157 = vmatprep.subr.mxu0 0.0
        %1158 = vmatpush1.msra.mxu0 %v1149
        %1159 = vmatprep.subr.mxu0 0.0
        %1160 = vmatpush1.msra.mxu0 0.0
        %1161 = vmatprep.subr.mxu0 0.0
        %1162 = vmatpush1.msra.mxu0 0.0
        %1163 = vmatprep.subr.mxu0 0.0
        %1164 = vmatpush1.msra.mxu0 0.0
        %1165 = vmatprep.subr.mxu0 0.0
        %1166 = vmatpush1.msra.mxu0 0.0
        %1167 = vmatprep.subr.mxu0 0.0
        %1168 = vmatpush1.msra.mxu0 0.0
        %1169 = vmatprep.subr.mxu0 0.0
        %1170 = vmatpush1.msra.mxu0 0.0
        %1171 = vmatprep.subr.mxu0 0.0
        %1172 = vmatpush1.msra.mxu0 0.0
        %1173 = vmatprep.subr.mxu0 0.0
        %1174 = vmatpush1.msra.mxu0 0.0
        %1175 = vmatprep.subr.mxu0 0.0
        %1176 = vmatpush1.msra.mxu0 0.0
        %1177 = vmatprep.subr.mxu0 0.0
        %1178 = vmatpush1.msra.mxu0 0.0
        %1179 = vmatprep.subr.mxu0 0.0
        %1180 = vmatpush1.msra.mxu0 0.0
        %1181 = vmatprep.subr.mxu0 0.0
        %1182 = vmatpush1.msra.mxu0 0.0
        %1183 = vmatprep.subr.mxu0 0.0
        %1184 = vmatpush1.msra.mxu0 0.0
        %1185 = vmatprep.subr.mxu0 0.0
        %1186 = vmatpush1.msra.mxu0 0.0
        %1187 = vmatprep.subr.mxu0 0.0
        %1188 = vmatpush1.msra.mxu0 0.0
        %1189 = vmatprep.subr.mxu0 0.0
        %1190 = vmatpush1.msra.mxu0 0.0
        %1191 = vmatprep.subr.mxu0 0.0
        %1192 = vmatpush1.msra.mxu0 0.0
        %1193 = vmatprep.subr.mxu0 0.0
        %1194 = vmatpush1.msra.mxu0 0.0
        %1195 = vmatprep.subr.mxu0 0.0
        %1196 = vmatpush1.msra.mxu0 0.0
        %1197 = vmatprep.subr.mxu0 0.0
        %1198 = vmatpush1.msra.mxu0 0.0
        %1199 = vmatprep.subr.mxu0 0.0
        %1200 = vmatpush1.msra.mxu0 0.0
        %1201 = vmatprep.subr.mxu0 0.0
        %1202 = vmatpush1.msra.mxu0 0.0
        %1203 = vmatprep.subr.mxu0 0.0
        %1204 = vmatpush1.msra.mxu0 0.0
        %1205 = vmatprep.subr.mxu0 0.0
        %1206 = vmatpush1.msra.mxu0 0.0
        %1207 = vmatprep.subr.mxu0 0.0
        %1208 = vmatpush1.msra.mxu0 0.0
        %1209 = vmatprep.subr.mxu0 0.0
        %1210 = vmatpush1.msra.mxu0 0.0
        %1211 = vmatprep.subr.mxu0 0.0
        %1212 = vmatpush1.msra.mxu0 0.0
        %1213 = vmatprep.subr.mxu0 0.0
        %1214 = vmatpush1.msra.mxu0 0.0
        %1215 = vmatprep.mubr.f32.mxu0 0.0
        %1216 = vmatmul.mubr.f32.gmra.mrb[0].mxu0 %v1145
        %v1217 = vpop.f32.mrb[0].mxu0
        %v1218 = vadd.f32 %v1140, %v1217
        %v1219 = vpop.f32.mrb[0].mxu0
        %1220 = vdwg.mxu0
        %v1221 = vld [vmem:[%s19] sm:$0xff]
        %v1222 = vld [vmem:[%s19 + $0x8] sm:$0xff]
        %v1224 = vsel %vm1069, %v1062, 0
        %1226 = vmatprep.subr.mxu0 0.0
        %1227 = vmatpush1.msra.mxu0 %v1221
        %1228 = vmatprep.subr.mxu0 0.0
        %1229 = vmatpush1.msra.mxu0 %v1222
        %1230 = vmatprep.subr.mxu0 0.0
        %1231 = vmatpush1.msra.mxu0 0.0
        %1232 = vmatprep.subr.mxu0 0.0
        %1233 = vmatpush1.msra.mxu0 0.0
        %1234 = vmatprep.subr.mxu0 0.0
        %1235 = vmatpush1.msra.mxu0 0.0
        %1236 = vmatprep.subr.mxu0 0.0
        %1237 = vmatpush1.msra.mxu0 0.0
        %1238 = vmatprep.subr.mxu0 0.0
        %1239 = vmatpush1.msra.mxu0 0.0
        %1240 = vmatprep.subr.mxu0 0.0
        %1241 = vmatpush1.msra.mxu0 0.0
        %1242 = vmatprep.subr.mxu0 0.0
        %1243 = vmatpush1.msra.mxu0 0.0
        %1244 = vmatprep.subr.mxu0 0.0
        %1245 = vmatpush1.msra.mxu0 0.0
        %1246 = vmatprep.subr.mxu0 0.0
        %1247 = vmatpush1.msra.mxu0 0.0
        %1248 = vmatprep.subr.mxu0 0.0
        %1249 = vmatpush1.msra.mxu0 0.0
        %1250 = vmatprep.subr.mxu0 0.0
        %1251 = vmatpush1.msra.mxu0 0.0
        %1252 = vmatprep.subr.mxu0 0.0
        %1253 = vmatpush1.msra.mxu0 0.0
        %1254 = vmatprep.subr.mxu0 0.0
        %1255 = vmatpush1.msra.mxu0 0.0
        %1256 = vmatprep.subr.mxu0 0.0
        %1257 = vmatpush1.msra.mxu0 0.0
        %1258 = vmatprep.subr.mxu0 0.0
        %1259 = vmatpush1.msra.mxu0 0.0
        %1260 = vmatprep.subr.mxu0 0.0
        %1261 = vmatpush1.msra.mxu0 0.0
        %1262 = vmatprep.subr.mxu0 0.0
        %1263 = vmatpush1.msra.mxu0 0.0
        %1264 = vmatprep.subr.mxu0 0.0
        %1265 = vmatpush1.msra.mxu0 0.0
        %1266 = vmatprep.subr.mxu0 0.0
        %1267 = vmatpush1.msra.mxu0 0.0
        %1268 = vmatprep.subr.mxu0 0.0
        %1269 = vmatpush1.msra.mxu0 0.0
        %1270 = vmatprep.subr.mxu0 0.0
        %1271 = vmatpush1.msra.mxu0 0.0
        %1272 = vmatprep.subr.mxu0 0.0
        %1273 = vmatpush1.msra.mxu0 0.0
        %1274 = vmatprep.subr.mxu0 0.0
        %1275 = vmatpush1.msra.mxu0 0.0
        %1276 = vmatprep.subr.mxu0 0.0
        %1277 = vmatpush1.msra.mxu0 0.0
        %1278 = vmatprep.subr.mxu0 0.0
        %1279 = vmatpush1.msra.mxu0 0.0
        %1280 = vmatprep.subr.mxu0 0.0
        %1281 = vmatpush1.msra.mxu0 0.0
        %1282 = vmatprep.subr.mxu0 0.0
        %1283 = vmatpush1.msra.mxu0 0.0
        %1284 = vmatprep.subr.mxu0 0.0
        %1285 = vmatpush1.msra.mxu0 0.0
        %1286 = vmatprep.subr.mxu0 0.0
        %1287 = vmatpush1.msra.mxu0 0.0
        %1288 = vmatprep.subr.mxu0 0.0
        %1289 = vmatpush1.msra.mxu0 0.0
        %1290 = vmatprep.mubr.f32.mxu0 0.0
        %1291 = vmatmul.mubr.f32.gmra.mrb[0].mxu0 %v1224
        %v1292 = vpop.f32.mrb[0].mxu0
        %v1293 = vadd.f32 0.0, %v1292
        %v1294 = vpop.f32.mrb[0].mxu0
        %1295 = vdwg.mxu0
        %v1296 = vadd.f32 %v1218, %v1293
        %v1297 = vsub.f32 1.0, %v1048
        %v1298 = vmul.f32 %v1297, -1e+09
        %v1299 = vmul.f32 %v1296, %v1296
        %vm1300 = vcmask 261120
        %v1301 = vsel %vm1300, %v1299, 0.0
        %1302 = vadd.xlane.f32.xlu0 %v1301
        %v1303 = vpop.xlane.xlu0 %1302
        %v1304 = vrcp.pop 32.0
        %v1305 = vmul.f32 %v1303, %v1304
        %v1306 = vadd.f32 %v1305, 1e-06
        %v1307 = vrsqrt.pop %v1306
        %v1308 = vmul.f32 %v1296, %v1307
        %v1309 = vld [vmem:[%s21] sm:$0x1]
        %v1311 = vlaneseq
        %v1312 = vshrl.u32 %v1311, 7
        %v1313 = vsub.s32 0, %v1312
        %v1314 = vrot.slane %v1309, %v1313
        %v1316 = vmul.f32 %v1308, %v1314
        %v1317 = vld [vmem:[%s23] sm:$0xff]
        %v1318 = vld [vmem:[%s23 + $0x8] sm:$0xff]
        %v1319 = vld [vmem:[%s23 + $0x10] sm:$0xff]
        %v1320 = vld [vmem:[%s23 + $0x18] sm:$0xff]
        %v1322 = vsel %vm1300, %v1316, 0
        %1324 = vmatprep.subr.mxu0 0.0
        %1325 = vmatpush1.msra.mxu0 %v1317
        %1326 = vmatprep.subr.mxu0 0.0
        %1327 = vmatpush1.msra.mxu0 %v1318
        %1328 = vmatprep.subr.mxu0 0.0
        %1329 = vmatpush1.msra.mxu0 %v1319
        %1330 = vmatprep.subr.mxu0 0.0
        %1331 = vmatpush1.msra.mxu0 %v1320
        %1332 = vmatprep.subr.mxu0 0.0
        %1333 = vmatpush1.msra.mxu0 0.0
        %1334 = vmatprep.subr.mxu0 0.0
        %1335 = vmatpush1.msra.mxu0 0.0
        %1336 = vmatprep.subr.mxu0 0.0
        %1337 = vmatpush1.msra.mxu0 0.0
        %1338 = vmatprep.subr.mxu0 0.0
        %1339 = vmatpush1.msra.mxu0 0.0
        %1340 = vmatprep.subr.mxu0 0.0
        %1341 = vmatpush1.msra.mxu0 0.0
        %1342 = vmatprep.subr.mxu0 0.0
        %1343 = vmatpush1.msra.mxu0 0.0
        %1344 = vmatprep.subr.mxu0 0.0
        %1345 = vmatpush1.msra.mxu0 0.0
        %1346 = vmatprep.subr.mxu0 0.0
        %1347 = vmatpush1.msra.mxu0 0.0
        %1348 = vmatprep.subr.mxu0 0.0
        %1349 = vmatpush1.msra.mxu0 0.0
        %1350 = vmatprep.subr.mxu0 0.0
        %1351 = vmatpush1.msra.mxu0 0.0
        %1352 = vmatprep.subr.mxu0 0.0
        %1353 = vmatpush1.msra.mxu0 0.0
        %1354 = vmatprep.subr.mxu0 0.0
        %1355 = vmatpush1.msra.mxu0 0.0
        %1356 = vmatprep.subr.mxu0 0.0
        %1357 = vmatpush1.msra.mxu0 0.0
        %1358 = vmatprep.subr.mxu0 0.0
        %1359 = vmatpush1.msra.mxu0 0.0
        %1360 = vmatprep.subr.mxu0 0.0
        %1361 = vmatpush1.msra.mxu0 0.0
        %1362 = vmatprep.subr.mxu0 0.0
        %1363 = vmatpush1.msra.mxu0 0.0
        %1364 = vmatprep.subr.mxu0 0.0
        %1365 = vmatpush1.msra.mxu0 0.0
        %1366 = vmatprep.subr.mxu0 0.0
        %1367 = vmatpush1.msra.mxu0 0.0
        %1368 = vmatprep.subr.mxu0 0.0
        %1369 = vmatpush1.msra.mxu0 0.0
        %1370 = vmatprep.subr.mxu0 0.0
        %1371 = vmatpush1.msra.mxu0 0.0
        %1372 = vmatprep.subr.mxu0 0.0
        %1373 = vmatpush1.msra.mxu0 0.0
        %1374 = vmatprep.subr.mxu0 0.0
        %1375 = vmatpush1.msra.mxu0 0.0
        %1376 = vmatprep.subr.mxu0 0.0
        %1377 = vmatpush1.msra.mxu0 0.0
        %1378 = vmatprep.subr.mxu0 0.0
        %1379 = vmatpush1.msra.mxu0 0.0
        %1380 = vmatprep.subr.mxu0 0.0
        %1381 = vmatpush1.msra.mxu0 0.0
        %1382 = vmatprep.subr.mxu0 0.0
        %1383 = vmatpush1.msra.mxu0 0.0
        %1384 = vmatprep.subr.mxu0 0.0
        %1385 = vmatpush1.msra.mxu0 0.0
        %1386 = vmatprep.subr.mxu0 0.0
        %1387 = vmatpush1.msra.mxu0 0.0
        %1388 = vmatprep.mubr.f32.mxu0 0.0
        %1389 = vmatmul.mubr.f32.gmra.mrb[0].mxu0 %v1322
        %v1390 = vpop.f32.mrb[0].mxu0
        %v1391 = vadd.f32 0.0, %v1390
        %v1392 = vpop.f32.mrb[0].mxu0
        %1393 = vdwg.mxu0
        %v1395 = vlaneseq
        %v1396 = vshrl.u32 %v1395, 7
        %v1397 = vsub.s32 0, %v1396
        %v1398 = vrot.slane %v1298, %v1397
        %1401 = vrot.lane.b32.xlu0 %v1391, 96
        %v1402 = vpop.permute.xlu0 %1401
        %v1403 = vsel %vm1069, %v1391, 0
        %v1405 = vsel %vm1069, %v1402, 0
        %1407 = vmatprep.subr.mxu0 0.0
        %1408 = vmatpush1.xpose.msra.mxu0 %v1405
        %1409 = vmatprep.subr.mxu0 0.0
        %1410 = vmatpush1.xpose.msra.mxu0 0.0
        %1411 = vmatprep.subr.mxu0 0.0
        %1412 = vmatpush1.xpose.msra.mxu0 0.0
        %1413 = vmatprep.subr.mxu0 0.0
        %1414 = vmatpush1.xpose.msra.mxu0 0.0
        %1415 = vmatprep.subr.mxu0 0.0
        %1416 = vmatpush1.xpose.msra.mxu0 0.0
        %1417 = vmatprep.subr.mxu0 0.0
        %1418 = vmatpush1.xpose.msra.mxu0 0.0
        %1419 = vmatprep.subr.mxu0 0.0
        %1420 = vmatpush1.xpose.msra.mxu0 0.0
        %1421 = vmatprep.subr.mxu0 0.0
        %1422 = vmatpush1.xpose.msra.mxu0 0.0
        %1423 = vmatprep.subr.mxu0 0.0
        %1424 = vmatpush1.xpose.msra.mxu0 0.0
        %1425 = vmatprep.subr.mxu0 0.0
        %1426 = vmatpush1.xpose.msra.mxu0 0.0
        %1427 = vmatprep.subr.mxu0 0.0
        %1428 = vmatpush1.xpose.msra.mxu0 0.0
        %1429 = vmatprep.subr.mxu0 0.0
        %1430 = vmatpush1.xpose.msra.mxu0 0.0
        %1431 = vmatprep.subr.mxu0 0.0
        %1432 = vmatpush1.xpose.msra.mxu0 0.0
        %1433 = vmatprep.subr.mxu0 0.0
        %1434 = vmatpush1.xpose.msra.mxu0 0.0
        %1435 = vmatprep.subr.mxu0 0.0
        %1436 = vmatpush1.xpose.msra.mxu0 0.0
        %1437 = vmatprep.subr.mxu0 0.0
        %1438 = vmatpush1.xpose.msra.mxu0 0.0
        %1439 = vmatprep.subr.mxu0 0.0
        %1440 = vmatpush1.xpose.msra.mxu0 0.0
        %1441 = vmatprep.subr.mxu0 0.0
        %1442 = vmatpush1.xpose.msra.mxu0 0.0
        %1443 = vmatprep.subr.mxu0 0.0
        %1444 = vmatpush1.xpose.msra.mxu0 0.0
        %1445 = vmatprep.subr.mxu0 0.0
        %1446 = vmatpush1.xpose.msra.mxu0 0.0
        %1447 = vmatprep.subr.mxu0 0.0
        %1448 = vmatpush1.xpose.msra.mxu0 0.0
        %1449 = vmatprep.subr.mxu0 0.0
        %1450 = vmatpush1.xpose.msra.mxu0 0.0
        %1451 = vmatprep.subr.mxu0 0.0
        %1452 = vmatpush1.xpose.msra.mxu0 0.0
        %1453 = vmatprep.subr.mxu0 0.0
        %1454 = vmatpush1.xpose.msra.mxu0 0.0
        %1455 = vmatprep.subr.mxu0 0.0
        %1456 = vmatpush1.xpose.msra.mxu0 0.0
        %1457 = vmatprep.subr.mxu0 0.0
        %1458 = vmatpush1.xpose.msra.mxu0 0.0
        %1459 = vmatprep.subr.mxu0 0.0
        %1460 = vmatpush1.xpose.msra.mxu0 0.0
        %1461 = vmatprep.subr.mxu0 0.0
        %1462 = vmatpush1.xpose.msra.mxu0 0.0
        %1463 = vmatprep.subr.mxu0 0.0
        %1464 = vmatpush1.xpose.msra.mxu0 0.0
        %1465 = vmatprep.subr.mxu0 0.0
        %1466 = vmatpush1.xpose.msra.mxu0 0.0
        %1467 = vmatprep.subr.mxu0 0.0
        %1468 = vmatpush1.xpose.msra.mxu0 0.0
        %1469 = vmatprep.subr.mxu0 0.0
        %1470 = vmatpush1.xpose.msra.mxu0 0.0
        %1471 = vmatprep.mubr.f32.mxu0 0.0
        %1472 = vmatmul.mubr.f32.gmra.mrb[0].mxu0 %v1403
        %v1473 = vpop.f32.mrb[0].mxu0
        %v1474 = vadd.f32 %v1398, %v1473
        %v1475 = vpop.f32.mrb[0].mxu0
        %1476 = vdwg.mxu0
        %vm1477 = vcmask 64512
        %v1478 = vsel %vm1477, %v1474, -inf
        %1479 = vmax.xlane.f32.xlu0 %v1478
        %v1480 = vpop.xlane.xlu0 %1479
        %v1481 = vsub.f32 %v1474, %v1480
        %v1482 = vmul.f32 %v1481, 1.442695
        %v1483 = vpow.pop %v1482
        %v1484 = vsel %vm1477, %v1483, 0.0
        %1485 = vadd.xlane.f32.xlu0 %v1484
        %v1486 = vpop.xlane.xlu0 %1485
        %v1487 = vrcp.pop %v1486
        %v1488 = vmul.f32 %v1483, %v1487
        %1489 = vrot.lane.b32.xlu0 %v1391, 64
        %v1490 = vpop.permute.xlu0 %1489
        %v1493 = vsel %vm1477, %v1488, 0
        %1495 = vmatprep.subr.mxu0 0.0
        %1496 = vmatpush1.msra.mxu0 %v1490
        %1497 = vmatprep.subr.mxu0 0.0
        %1498 = vmatpush1.msra.mxu0 0.0
        %1499 = vmatprep.subr.mxu0 0.0
        %1500 = vmatpush1.msra.mxu0 0.0
        %1501 = vmatprep.subr.mxu0 0.0
        %1502 = vmatpush1.msra.mxu0 0.0
        %1503 = vmatprep.subr.mxu0 0.0
        %1504 = vmatpush1.msra.mxu0 0.0
        %1505 = vmatprep.subr.mxu0 0.0
        %1506 = vmatpush1.msra.mxu0 0.0
        %1507 = vmatprep.subr.mxu0 0.0
        %1508 = vmatpush1.msra.mxu0 0.0
        %1509 = vmatprep.subr.mxu0 0.0
        %1510 = vmatpush1.msra.mxu0 0.0
        %1511 = vmatprep.subr.mxu0 0.0
        %1512 = vmatpush1.msra.mxu0 0.0
        %1513 = vmatprep.subr.mxu0 0.0
        %1514 = vmatpush1.msra.mxu0 0.0
        %1515 = vmatprep.subr.mxu0 0.0
        %1516 = vmatpush1.msra.mxu0 0.0
        %1517 = vmatprep.subr.mxu0 0.0
        %1518 = vmatpush1.msra.mxu0 0.0
        %1519 = vmatprep.subr.mxu0 0.0
        %1520 = vmatpush1.msra.mxu0 0.0
        %1521 = vmatprep.subr.mxu0 0.0
        %1522 = vmatpush1.msra.mxu0 0.0
        %1523 = vmatprep.subr.mxu0 0.0
        %1524 = vmatpush1.msra.mxu0 0.0
        %1525 = vmatprep.subr.mxu0 0.0
        %1526 = vmatpush1.msra.mxu0 0.0
        %1527 = vmatprep.subr.mxu0 0.0
        %1528 = vmatpush1.msra.mxu0 0.0
        %1529 = vmatprep.subr.mxu0 0.0
        %1530 = vmatpush1.msra.mxu0 0.0
        %1531 = vmatprep.subr.mxu0 0.0
        %1532 = vmatpush1.msra.mxu0 0.0
        %1533 = vmatprep.subr.mxu0 0.0
        %1534 = vmatpush1.msra.mxu0 0.0
        %1535 = vmatprep.subr.mxu0 0.0
        %1536 = vmatpush1.msra.mxu0 0.0
        %1537 = vmatprep.subr.mxu0 0.0
        %1538 = vmatpush1.msra.mxu0 0.0
        %1539 = vmatprep.subr.mxu0 0.0
        %1540 = vmatpush1.msra.mxu0 0.0
        %1541 = vmatprep.subr.mxu0 0.0
        %1542 = vmatpush1.msra.mxu0 0.0
        %1543 = vmatprep.subr.mxu0 0.0
        %1544 = vmatpush1.msra.mxu0 0.0
        %1545 = vmatprep.subr.mxu0 0.0
        %1546 = vmatpush1.msra.mxu0 0.0
        %1547 = vmatprep.subr.mxu0 0.0
        %1548 = vmatpush1.msra.mxu0 0.0
        %1549 = vmatprep.subr.mxu0 0.0
        %1550 = vmatpush1.msra.mxu0 0.0
        %1551 = vmatprep.subr.mxu0 0.0
        %1552 = vmatpush1.msra.mxu0 0.0
        %1553 = vmatprep.subr.mxu0 0.0
        %1554 = vmatpush1.msra.mxu0 0.0
        %1555 = vmatprep.subr.mxu0 0.0
        %1556 = vmatpush1.msra.mxu0 0.0
        %1557 = vmatprep.subr.mxu0 0.0
        %1558 = vmatpush1.msra.mxu0 0.0
        %1559 = vmatprep.mubr.f32.mxu0 0.0
        %1560 = vmatmul.mubr.f32.gmra.mrb[0].mxu0 %v1493
        %v1561 = vpop.f32.mrb[0].mxu0
        %v1562 = vadd.f32 0.0, %v1561
        %v1563 = vpop.f32.mrb[0].mxu0
        %1564 = vdwg.mxu0
        %v1565 = vld [vmem:[%s25] sm:$0xff]
        %v1566 = vld [vmem:[%s25 + $0x8] sm:$0xff]
        %1567 = vrot.lane.b32.xlu0 %v1391, 112
        %v1568 = vpop.permute.xlu0 %1567
        %1569 = vrot.lane.b32.xlu0 %v1391, 80
        %v1570 = vpop.permute.xlu0 %1569
        %v1571 = vsel %vm1069, %v1568, 0
        %v1573 = vsel %vm1069, %v1570, 0
        %1575 = vmatprep.subr.mxu0 0.0
        %1576 = vmatpush1.xpose.msra.mxu0 %v1573
        %1577 = vmatprep.subr.mxu0 0.0
        %1578 = vmatpush1.xpose.msra.mxu0 0.0
        %1579 = vmatprep.subr.mxu0 0.0
        %1580 = vmatpush1.xpose.msra.mxu0 0.0
        %1581 = vmatprep.subr.mxu0 0.0
        %1582 = vmatpush1.xpose.msra.mxu0 0.0
        %1583 = vmatprep.subr.mxu0 0.0
        %1584 = vmatpush1.xpose.msra.mxu0 0.0
        %1585 = vmatprep.subr.mxu0 0.0
        %1586 = vmatpush1.xpose.msra.mxu0 0.0
        %1587 = vmatprep.subr.mxu0 0.0
        %1588 = vmatpush1.xpose.msra.mxu0 0.0
        %1589 = vmatprep.subr.mxu0 0.0
        %1590 = vmatpush1.xpose.msra.mxu0 0.0
        %1591 = vmatprep.subr.mxu0 0.0
        %1592 = vmatpush1.xpose.msra.mxu0 0.0
        %1593 = vmatprep.subr.mxu0 0.0
        %1594 = vmatpush1.xpose.msra.mxu0 0.0
        %1595 = vmatprep.subr.mxu0 0.0
        %1596 = vmatpush1.xpose.msra.mxu0 0.0
        %1597 = vmatprep.subr.mxu0 0.0
        %1598 = vmatpush1.xpose.msra.mxu0 0.0
        %1599 = vmatprep.subr.mxu0 0.0
        %1600 = vmatpush1.xpose.msra.mxu0 0.0
        %1601 = vmatprep.subr.mxu0 0.0
        %1602 = vmatpush1.xpose.msra.mxu0 0.0
        %1603 = vmatprep.subr.mxu0 0.0
        %1604 = vmatpush1.xpose.msra.mxu0 0.0
        %1605 = vmatprep.subr.mxu0 0.0
        %1606 = vmatpush1.xpose.msra.mxu0 0.0
        %1607 = vmatprep.subr.mxu0 0.0
        %1608 = vmatpush1.xpose.msra.mxu0 0.0
        %1609 = vmatprep.subr.mxu0 0.0
        %1610 = vmatpush1.xpose.msra.mxu0 0.0
        %1611 = vmatprep.subr.mxu0 0.0
        %1612 = vmatpush1.xpose.msra.mxu0 0.0
        %1613 = vmatprep.subr.mxu0 0.0
        %1614 = vmatpush1.xpose.msra.mxu0 0.0
        %1615 = vmatprep.subr.mxu0 0.0
        %1616 = vmatpush1.xpose.msra.mxu0 0.0
        %1617 = vmatprep.subr.mxu0 0.0
        %1618 = vmatpush1.xpose.msra.mxu0 0.0
        %1619 = vmatprep.subr.mxu0 0.0
        %1620 = vmatpush1.xpose.msra.mxu0 0.0
        %1621 = vmatprep.subr.mxu0 0.0
        %1622 = vmatpush1.xpose.msra.mxu0 0.0
        %1623 = vmatprep.subr.mxu0 0.0
        %1624 = vmatpush1.xpose.msra.mxu0 0.0
        %1625 = vmatprep.subr.mxu0 0.0
        %1626 = vmatpush1.xpose.msra.mxu0 0.0
        %1627 = vmatprep.subr.mxu0 0.0
        %1628 = vmatpush1.xpose.msra.mxu0 0.0
        %1629 = vmatprep.subr.mxu0 0.0
        %1630 = vmatpush1.xpose.msra.mxu0 0.0
        %1631 = vmatprep.subr.mxu0 0.0
        %1632 = vmatpush1.xpose.msra.mxu0 0.0
        %1633 = vmatprep.subr.mxu0 0.0
        %1634 = vmatpush1.xpose.msra.mxu0 0.0
        %1635 = vmatprep.subr.mxu0 0.0
        %1636 = vmatpush1.xpose.msra.mxu0 0.0
        %1637 = vmatprep.subr.mxu0 0.0
        %1638 = vmatpush1.xpose.msra.mxu0 0.0
        %1639 = vmatprep.mubr.f32.mxu0 0.0
        %1640 = vmatmul.mubr.f32.gmra.mrb[0].mxu0 %v1571
        %v1641 = vpop.f32.mrb[0].mxu0
        %v1642 = vadd.f32 %v1398, %v1641
        %v1643 = vpop.f32.mrb[0].mxu0
        %1644 = vdwg.mxu0
        %v1645 = vsel %vm1477, %v1642, -inf
        %1646 = vmax.xlane.f32.xlu0 %v1645
        %v1647 = vpop.xlane.xlu0 %1646
        %v1648 = vsub.f32 %v1642, %v1647
        %v1649 = vmul.f32 %v1648, 1.442695
        %v1650 = vpow.pop %v1649
        %v1651 = vsel %vm1477, %v1650, 0.0
        %1652 = vadd.xlane.f32.xlu0 %v1651
        %v1653 = vpop.xlane.xlu0 %1652
        %v1654 = vrcp.pop %v1653
        %v1655 = vmul.f32 %v1650, %v1654
        %1656 = vrot.lane.b32.xlu0 %v1391, 48
        %v1657 = vpop.permute.xlu0 %1656
        %v1660 = vsel %vm1477, %v1655, 0
        %1662 = vmatprep.subr.mxu0 0.0
        %1663 = vmatpush1.msra.mxu0 %v1657
        %1664 = vmatprep.subr.mxu0 0.0
        %1665 = vmatpush1.msra.mxu0 0.0
        %1666 = vmatprep.subr.mxu0 0.0
        %1667 = vmatpush1.msra.mxu0 0.0
        %1668 = vmatprep.subr.mxu0 0.0
        %1669 = vmatpush1.msra.mxu0 0.0
        %1670 = vmatprep.subr.mxu0 0.0
        %1671 = vmatpush1.msra.mxu0 0.0
        %1672 = vmatprep.subr.mxu0 0.0
        %1673 = vmatpush1.msra.mxu0 0.0
        %1674 = vmatprep.subr.mxu0 0.0
        %1675 = vmatpush1.msra.mxu0 0.0
        %1676 = vmatprep.subr.mxu0 0.0
        %1677 = vmatpush1.msra.mxu0 0.0
        %1678 = vmatprep.subr.mxu0 0.0
        %1679 = vmatpush1.msra.mxu0 0.0
        %1680 = vmatprep.subr.mxu0 0.0
        %1681 = vmatpush1.msra.mxu0 0.0
        %1682 = vmatprep.subr.mxu0 0.0
        %1683 = vmatpush1.msra.mxu0 0.0
        %1684 = vmatprep.subr.mxu0 0.0
        %1685 = vmatpush1.msra.mxu0 0.0
        %1686 = vmatprep.subr.mxu0 0.0
        %1687 = vmatpush1.msra.mxu0 0.0
        %1688 = vmatprep.subr.mxu0 0.0
        %1689 = vmatpush1.msra.mxu0 0.0
        %1690 = vmatprep.subr.mxu0 0.0
        %1691 = vmatpush1.msra.mxu0 0.0
        %1692 = vmatprep.subr.mxu0 0.0
        %1693 = vmatpush1.msra.mxu0 0.0
        %1694 = vmatprep.subr.mxu0 0.0
        %1695 = vmatpush1.msra.mxu0 0.0
        %1696 = vmatprep.subr.mxu0 0.0
        %1697 = vmatpush1.msra.mxu0 0.0
        %1698 = vmatprep.subr.mxu0 0.0
        %1699 = vmatpush1.msra.mxu0 0.0
        %1700 = vmatprep.subr.mxu0 0.0
        %1701 = vmatpush1.msra.mxu0 0.0
        %1702 = vmatprep.subr.mxu0 0.0
        %1703 = vmatpush1.msra.mxu0 0.0
        %1704 = vmatprep.subr.mxu0 0.0
        %1705 = vmatpush1.msra.mxu0 0.0
        %1706 = vmatprep.subr.mxu0 0.0
        %1707 = vmatpush1.msra.mxu0 0.0
        %1708 = vmatprep.subr.mxu0 0.0
        %1709 = vmatpush1.msra.mxu0 0.0
        %1710 = vmatprep.subr.mxu0 0.0
        %1711 = vmatpush1.msra.mxu0 0.0
        %1712 = vmatprep.subr.mxu0 0.0
        %1713 = vmatpush1.msra.mxu0 0.0
        %1714 = vmatprep.subr.mxu0 0.0
        %1715 = vmatpush1.msra.mxu0 0.0
        %1716 = vmatprep.subr.mxu0 0.0
        %1717 = vmatpush1.msra.mxu0 0.0
        %1718 = vmatprep.subr.mxu0 0.0
        %1719 = vmatpush1.msra.mxu0 0.0
        %1720 = vmatprep.subr.mxu0 0.0
        %1721 = vmatpush1.msra.mxu0 0.0
        %1722 = vmatprep.subr.mxu0 0.0
        %1723 = vmatpush1.msra.mxu0 0.0
        %1724 = vmatprep.subr.mxu0 0.0
        %1725 = vmatpush1.msra.mxu0 0.0
        %1726 = vmatprep.mubr.f32.mxu0 0.0
        %1727 = vmatmul.mubr.f32.gmra.mrb[0].mxu0 %v1660
        %v1728 = vpop.f32.mrb[0].mxu0
        %v1729 = vadd.f32 0.0, %v1728
        %v1730 = vpop.f32.mrb[0].mxu0
        %1731 = vdwg.mxu0
        %v1732 = vld [vmem:[%s25 + $0x10] sm:$0xff]
        %v1733 = vld [vmem:[%s25 + $0x18] sm:$0xff]
        %v1735 = vsel %vm1069, %v1729, 0
        %1737 = vmatprep.subr.mxu0 0.0
        %1738 = vmatpush1.msra.mxu0 %v1732
        %1739 = vmatprep.subr.mxu0 0.0
        %1740 = vmatpush1.msra.mxu0 %v1733
        %1741 = vmatprep.subr.mxu0 0.0
        %1742 = vmatpush1.msra.mxu0 0.0
        %1743 = vmatprep.subr.mxu0 0.0
        %1744 = vmatpush1.msra.mxu0 0.0
        %1745 = vmatprep.subr.mxu0 0.0
        %1746 = vmatpush1.msra.mxu0 0.0
        %1747 = vmatprep.subr.mxu0 0.0
        %1748 = vmatpush1.msra.mxu0 0.0
        %1749 = vmatprep.subr.mxu0 0.0
        %1750 = vmatpush1.msra.mxu0 0.0
        %1751 = vmatprep.subr.mxu0 0.0
        %1752 = vmatpush1.msra.mxu0 0.0
        %1753 = vmatprep.subr.mxu0 0.0
        %1754 = vmatpush1.msra.mxu0 0.0
        %1755 = vmatprep.subr.mxu0 0.0
        %1756 = vmatpush1.msra.mxu0 0.0
        %1757 = vmatprep.subr.mxu0 0.0
        %1758 = vmatpush1.msra.mxu0 0.0
        %1759 = vmatprep.subr.mxu0 0.0
        %1760 = vmatpush1.msra.mxu0 0.0
        %1761 = vmatprep.subr.mxu0 0.0
        %1762 = vmatpush1.msra.mxu0 0.0
        %1763 = vmatprep.subr.mxu0 0.0
        %1764 = vmatpush1.msra.mxu0 0.0
        %1765 = vmatprep.subr.mxu0 0.0
        %1766 = vmatpush1.msra.mxu0 0.0
        %1767 = vmatprep.subr.mxu0 0.0
        %1768 = vmatpush1.msra.mxu0 0.0
        %1769 = vmatprep.subr.mxu0 0.0
        %1770 = vmatpush1.msra.mxu0 0.0
        %1771 = vmatprep.subr.mxu0 0.0
        %1772 = vmatpush1.msra.mxu0 0.0
        %1773 = vmatprep.subr.mxu0 0.0
        %1774 = vmatpush1.msra.mxu0 0.0
        %1775 = vmatprep.subr.mxu0 0.0
        %1776 = vmatpush1.msra.mxu0 0.0
        %1777 = vmatprep.subr.mxu0 0.0
        %1778 = vmatpush1.msra.mxu0 0.0
        %1779 = vmatprep.subr.mxu0 0.0
        %1780 = vmatpush1.msra.mxu0 0.0
        %1781 = vmatprep.subr.mxu0 0.0
        %1782 = vmatpush1.msra.mxu0 0.0
        %1783 = vmatprep.subr.mxu0 0.0
        %1784 = vmatpush1.msra.mxu0 0.0
        %1785 = vmatprep.subr.mxu0 0.0
        %1786 = vmatpush1.msra.mxu0 0.0
        %1787 = vmatprep.subr.mxu0 0.0
        %1788 = vmatpush1.msra.mxu0 0.0
        %1789 = vmatprep.subr.mxu0 0.0
        %1790 = vmatpush1.msra.mxu0 0.0
        %1791 = vmatprep.subr.mxu0 0.0
        %1792 = vmatpush1.msra.mxu0 0.0
        %1793 = vmatprep.subr.mxu0 0.0
        %1794 = vmatpush1.msra.mxu0 0.0
        %1795 = vmatprep.subr.mxu0 0.0
        %1796 = vmatpush1.msra.mxu0 0.0
        %1797 = vmatprep.subr.mxu0 0.0
        %1798 = vmatpush1.msra.mxu0 0.0
        %1799 = vmatprep.subr.mxu0 0.0
        %1800 = vmatpush1.msra.mxu0 0.0
        %1801 = vmatprep.mubr.f32.mxu0 0.0
        %1802 = vmatmul.mubr.f32.gmra.mrb[0].mxu0 %v1735
        %v1803 = vpop.f32.mrb[0].mxu0
        %v1804 = vadd.f32 0.0, %v1803
        %v1805 = vpop.f32.mrb[0].mxu0
        %1806 = vdwg.mxu0
        %v1808 = vsel %vm1069, %v1562, 0
        %1810 = vmatprep.subr.mxu0 0.0
        %1811 = vmatpush1.msra.mxu0 %v1565
        %1812 = vmatprep.subr.mxu0 0.0
        %1813 = vmatpush1.msra.mxu0 %v1566
        %1814 = vmatprep.subr.mxu0 0.0
        %1815 = vmatpush1.msra.mxu0 0.0
        %1816 = vmatprep.subr.mxu0 0.0
        %1817 = vmatpush1.msra.mxu0 0.0
        %1818 = vmatprep.subr.mxu0 0.0
        %1819 = vmatpush1.msra.mxu0 0.0
        %1820 = vmatprep.subr.mxu0 0.0
        %1821 = vmatpush1.msra.mxu0 0.0
        %1822 = vmatprep.subr.mxu0 0.0
        %1823 = vmatpush1.msra.mxu0 0.0
        %1824 = vmatprep.subr.mxu0 0.0
        %1825 = vmatpush1.msra.mxu0 0.0
        %1826 = vmatprep.subr.mxu0 0.0
        %1827 = vmatpush1.msra.mxu0 0.0
        %1828 = vmatprep.subr.mxu0 0.0
        %1829 = vmatpush1.msra.mxu0 0.0
        %1830 = vmatprep.subr.mxu0 0.0
        %1831 = vmatpush1.msra.mxu0 0.0
        %1832 = vmatprep.subr.mxu0 0.0
        %1833 = vmatpush1.msra.mxu0 0.0
        %1834 = vmatprep.subr.mxu0 0.0
        %1835 = vmatpush1.msra.mxu0 0.0
        %1836 = vmatprep.subr.mxu0 0.0
        %1837 = vmatpush1.msra.mxu0 0.0
        %1838 = vmatprep.subr.mxu0 0.0
        %1839 = vmatpush1.msra.mxu0 0.0
        %1840 = vmatprep.subr.mxu0 0.0
        %1841 = vmatpush1.msra.mxu0 0.0
        %1842 = vmatprep.subr.mxu0 0.0
        %1843 = vmatpush1.msra.mxu0 0.0
        %1844 = vmatprep.subr.mxu0 0.0
        %1845 = vmatpush1.msra.mxu0 0.0
        %1846 = vmatprep.subr.mxu0 0.0
        %1847 = vmatpush1.msra.mxu0 0.0
        %1848 = vmatprep.subr.mxu0 0.0
        %1849 = vmatpush1.msra.mxu0 0.0
        %1850 = vmatprep.subr.mxu0 0.0
        %1851 = vmatpush1.msra.mxu0 0.0
        %1852 = vmatprep.subr.mxu0 0.0
        %1853 = vmatpush1.msra.mxu0 0.0
        %1854 = vmatprep.subr.mxu0 0.0
        %1855 = vmatpush1.msra.mxu0 0.0
        %1856 = vmatprep.subr.mxu0 0.0
        %1857 = vmatpush1.msra.mxu0 0.0
        %1858 = vmatprep.subr.mxu0 0.0
        %1859 = vmatpush1.msra.mxu0 0.0
        %1860 = vmatprep.subr.mxu0 0.0
        %1861 = vmatpush1.msra.mxu0 0.0
        %1862 = vmatprep.subr.mxu0 0.0
        %1863 = vmatpush1.msra.mxu0 0.0
        %1864 = vmatprep.subr.mxu0 0.0
        %1865 = vmatpush1.msra.mxu0 0.0
        %1866 = vmatprep.subr.mxu0 0.0
        %1867 = vmatpush1.msra.mxu0 0.0
        %1868 = vmatprep.subr.mxu0 0.0
        %1869 = vmatpush1.msra.mxu0 0.0
        %1870 = vmatprep.subr.mxu0 0.0
        %1871 = vmatpush1.msra.mxu0 0.0
        %1872 = vmatprep.subr.mxu0 0.0
        %1873 = vmatpush1.msra.mxu0 0.0
        %1874 = vmatprep.mubr.f32.mxu0 0.0
        %1875 = vmatmul.mubr.f32.gmra.mrb[0].mxu0 %v1808
        %v1876 = vpop.f32.mrb[0].mxu0
        %v1877 = vadd.f32 %v1804, %v1876
        %v1878 = vpop.f32.mrb[0].mxu0
        %1879 = vdwg.mxu0
        %v1880 = vadd.f32 %v1296, %v1877
        %v1881 = vmul.f32 %v1880, %v1880
        %v1882 = vsel %vm1300, %v1881, 0.0
        %1883 = vadd.xlane.f32.xlu0 %v1882
        %v1884 = vpop.xlane.xlu0 %1883
        %v1885 = vmul.f32 %v1884, %v1304
        %v1886 = vadd.f32 %v1885, 1e-06
        %v1887 = vrsqrt.pop %v1886
        %v1888 = vmul.f32 %v1880, %v1887
        %v1889 = vld [vmem:[%s27] sm:$0x1]
        %v1891 = vlaneseq
        %v1892 = vshrl.u32 %v1891, 7
        %v1893 = vsub.s32 0, %v1892
        %v1894 = vrot.slane %v1889, %v1893
        %v1896 = vmul.f32 %v1888, %v1894
        %v1897 = vld [vmem:[%s29] sm:$0xff]
        %v1898 = vld [vmem:[%s29 + $0x8] sm:$0xff]
        %v1899 = vld [vmem:[%s29 + $0x10] sm:$0xff]
        %v1900 = vld [vmem:[%s29 + $0x18] sm:$0xff]
        %v1902 = vsel %vm1300, %v1896, 0
        %1904 = vmatprep.subr.mxu0 0.0
        %1905 = vmatpush1.msra.mxu0 %v1897
        %1906 = vmatprep.subr.mxu0 0.0
        %1907 = vmatpush1.msra.mxu0 %v1898
        %1908 = vmatprep.subr.mxu0 0.0
        %1909 = vmatpush1.msra.mxu0 %v1899
        %1910 = vmatprep.subr.mxu0 0.0
        %1911 = vmatpush1.msra.mxu0 %v1900
        %1912 = vmatprep.subr.mxu0 0.0
        %1913 = vmatpush1.msra.mxu0 0.0
        %1914 = vmatprep.subr.mxu0 0.0
        %1915 = vmatpush1.msra.mxu0 0.0
        %1916 = vmatprep.subr.mxu0 0.0
        %1917 = vmatpush1.msra.mxu0 0.0
        %1918 = vmatprep.subr.mxu0 0.0
        %1919 = vmatpush1.msra.mxu0 0.0
        %1920 = vmatprep.subr.mxu0 0.0
        %1921 = vmatpush1.msra.mxu0 0.0
        %1922 = vmatprep.subr.mxu0 0.0
        %1923 = vmatpush1.msra.mxu0 0.0
        %1924 = vmatprep.subr.mxu0 0.0
        %1925 = vmatpush1.msra.mxu0 0.0
        %1926 = vmatprep.subr.mxu0 0.0
        %1927 = vmatpush1.msra.mxu0 0.0
        %1928 = vmatprep.subr.mxu0 0.0
        %1929 = vmatpush1.msra.mxu0 0.0
        %1930 = vmatprep.subr.mxu0 0.0
        %1931 = vmatpush1.msra.mxu0 0.0
        %1932 = vmatprep.subr.mxu0 0.0
        %1933 = vmatpush1.msra.mxu0 0.0
        %1934 = vmatprep.subr.mxu0 0.0
        %1935 = vmatpush1.msra.mxu0 0.0
        %1936 = vmatprep.subr.mxu0 0.0
        %1937 = vmatpush1.msra.mxu0 0.0
        %1938 = vmatprep.subr.mxu0 0.0
        %1939 = vmatpush1.msra.mxu0 0.0
        %1940 = vmatprep.subr.mxu0 0.0
        %1941 = vmatpush1.msra.mxu0 0.0
        %1942 = vmatprep.subr.mxu0 0.0
        %1943 = vmatpush1.msra.mxu0 0.0
        %1944 = vmatprep.subr.mxu0 0.0
        %1945 = vmatpush1.msra.mxu0 0.0
        %1946 = vmatprep.subr.mxu0 0.0
        %1947 = vmatpush1.msra.mxu0 0.0
        %1948 = vmatprep.subr.mxu0 0.0
        %1949 = vmatpush1.msra.mxu0 0.0
        %1950 = vmatprep.subr.mxu0 0.0
        %1951 = vmatpush1.msra.mxu0 0.0
        %1952 = vmatprep.subr.mxu0 0.0
        %1953 = vmatpush1.msra.mxu0 0.0
        %1954 = vmatprep.subr.mxu0 0.0
        %1955 = vmatpush1.msra.mxu0 0.0
        %1956 = vmatprep.subr.mxu0 0.0
        %1957 = vmatpush1.msra.mxu0 0.0
        %1958 = vmatprep.subr.mxu0 0.0
        %1959 = vmatpush1.msra.mxu0 0.0
        %1960 = vmatprep.subr.mxu0 0.0
        %1961 = vmatpush1.msra.mxu0 0.0
        %1962 = vmatprep.subr.mxu0 0.0
        %1963 = vmatpush1.msra.mxu0 0.0
        %1964 = vmatprep.subr.mxu0 0.0
        %1965 = vmatpush1.msra.mxu0 0.0
        %1966 = vmatprep.subr.mxu0 0.0
        %1967 = vmatpush1.msra.mxu0 0.0
        %1968 = vmatprep.mubr.f32.mxu0 0.0
        %1969 = vmatmul.mubr.f32.gmra.mrb[0].mxu0 %v1902
        %v1970 = vpop.f32.mrb[0].mxu0
        %v1971 = vadd.f32 0.0, %v1970
        %v1972 = vpop.f32.mrb[0].mxu0
        %1973 = vdwg.mxu0
        %v1974 = vmul.f32 %v1971, %v1971
        %v1975 = vmul.f32 %v1971, %v1974
        %v1976 = vmul.f32 %v1975, 0.044715
        %v1977 = vadd.f32 %v1971, %v1976
        %v1978 = vmul.f32 %v1977, 0.7978846
        %v1979 = vtanh.pop %v1978
        %v1980 = vadd.f32 %v1979, 1.0
        %v1981 = vmul.f32 %v1980, 0.5
        %v1982 = vmul.f32 %v1971, %v1981
        %1984 = vrot.lane.b32.xlu0 %v1971, 64
        %v1985 = vpop.permute.xlu0 %1984
        %v1987 = vmul.f32 %v1982, %v1985
        %v1988 = vld [vmem:[%s31] sm:$0xff]
        %v1989 = vld [vmem:[%s31 + $0x8] sm:$0xff]
        %v1990 = vld [vmem:[%s31 + $0x10] sm:$0xff]
        %v1991 = vld [vmem:[%s31 + $0x18] sm:$0xff]
        %v1992 = vld [vmem:[%s31 + $0x20] sm:$0xff]
        %v1993 = vld [vmem:[%s31 + $0x28] sm:$0xff]
        %v1994 = vld [vmem:[%s31 + $0x30] sm:$0xff]
        %v1995 = vld [vmem:[%s31 + $0x38] sm:$0xff]
        %vm1996 = vcmask 523264
        %v1998 = vsel %vm1996, %v1987, 0
        %2000 = vmatprep.subr.mxu0 0.0
        %2001 = vmatpush1.msra.mxu0 %v1988
        %2002 = vmatprep.subr.mxu0 0.0
        %2003 = vmatpush1.msra.mxu0 %v1989
        %2004 = vmatprep.subr.mxu0 0.0
        %2005 = vmatpush1.msra.mxu0 %v1990
        %2006 = vmatprep.subr.mxu0 0.0
        %2007 = vmatpush1.msra.mxu0 %v1991
        %2008 = vmatprep.subr.mxu0 0.0
        %2009 = vmatpush1.msra.mxu0 %v1992
        %2010 = vmatprep.subr.mxu0 0.0
        %2011 = vmatpush1.msra.mxu0 %v1993
        %2012 = vmatprep.subr.mxu0 0.0
        %2013 = vmatpush1.msra.mxu0 %v1994
        %2014 = vmatprep.subr.mxu0 0.0
        %2015 = vmatpush1.msra.mxu0 %v1995
        %2016 = vmatprep.subr.mxu0 0.0
        %2017 = vmatpush1.msra.mxu0 0.0
        %2018 = vmatprep.subr.mxu0 0.0
        %2019 = vmatpush1.msra.mxu0 0.0
        %2020 = vmatprep.subr.mxu0 0.0
        %2021 = vmatpush1.msra.mxu0 0.0
        %2022 = vmatprep.subr.mxu0 0.0
        %2023 = vmatpush1.msra.mxu0 0.0
        %2024 = vmatprep.subr.mxu0 0.0
        %2025 = vmatpush1.msra.mxu0 0.0
        %2026 = vmatprep.subr.mxu0 0.0
        %2027 = vmatpush1.msra.mxu0 0.0
        %2028 = vmatprep.subr.mxu0 0.0
        %2029 = vmatpush1.msra.mxu0 0.0
        %2030 = vmatprep.subr.mxu0 0.0
        %2031 = vmatpush1.msra.mxu0 0.0
        %2032 = vmatprep.subr.mxu0 0.0
        %2033 = vmatpush1.msra.mxu0 0.0
        %2034 = vmatprep.subr.mxu0 0.0
        %2035 = vmatpush1.msra.mxu0 0.0
        %2036 = vmatprep.subr.mxu0 0.0
        %2037 = vmatpush1.msra.mxu0 0.0
        %2038 = vmatprep.subr.mxu0 0.0
        %2039 = vmatpush1.msra.mxu0 0.0
        %2040 = vmatprep.subr.mxu0 0.0
        %2041 = vmatpush1.msra.mxu0 0.0
        %2042 = vmatprep.subr.mxu0 0.0
        %2043 = vmatpush1.msra.mxu0 0.0
        %2044 = vmatprep.subr.mxu0 0.0
        %2045 = vmatpush1.msra.mxu0 0.0
        %2046 = vmatprep.subr.mxu0 0.0
        %2047 = vmatpush1.msra.mxu0 0.0
        %2048 = vmatprep.subr.mxu0 0.0
        %2049 = vmatpush1.msra.mxu0 0.0
        %2050 = vmatprep.subr.mxu0 0.0
        %2051 = vmatpush1.msra.mxu0 0.0
        %2052 = vmatprep.subr.mxu0 0.0
        %2053 = vmatpush1.msra.mxu0 0.0
        %2054 = vmatprep.subr.mxu0 0.0
        %2055 = vmatpush1.msra.mxu0 0.0
        %2056 = vmatprep.subr.mxu0 0.0
        %2057 = vmatpush1.msra.mxu0 0.0
        %2058 = vmatprep.subr.mxu0 0.0
        %2059 = vmatpush1.msra.mxu0 0.0
        %2060 = vmatprep.subr.mxu0 0.0
        %2061 = vmatpush1.msra.mxu0 0.0
        %2062 = vmatprep.subr.mxu0 0.0
        %2063 = vmatpush1.msra.mxu0 0.0
        %2064 = vmatprep.mubr.f32.mxu0 0.0
        %2065 = vmatmul.mubr.f32.gmra.mrb[0].mxu0 %v1998
        %v2066 = vpop.f32.mrb[0].mxu0
        %v2067 = vadd.f32 0.0, %v2066
        %v2068 = vpop.f32.mrb[0].mxu0
        %2069 = vdwg.mxu0
        %v2070 = vadd.f32 %v1880, %v2067
        %v2071 = vmul.f32 %v2070, %v2070
        %v2072 = vsel %vm1300, %v2071, 0.0
        %2073 = vadd.xlane.f32.xlu0 %v2072
        %v2074 = vpop.xlane.xlu0 %2073
        %v2075 = vmul.f32 %v2074, %v1304
        %v2076 = vadd.f32 %v2075, 1e-06
        %v2077 = vrsqrt.pop %v2076
        %v2078 = vmul.f32 %v2070, %v2077
        %v2079 = vld [vmem:[%s33] sm:$0x1]
        %v2081 = vlaneseq
        %v2082 = vshrl.u32 %v2081, 7
        %v2083 = vsub.s32 0, %v2082
        %v2084 = vrot.slane %v2079, %v2083
        %v2086 = vmul.f32 %v2078, %v2084
        %v2087 = vld [vmem:[%s1030] sm:$0xff]
        %v2088 = vld [vmem:[%s1033] sm:$0x1]
        %v2089 = vld [vmem:[%s1037] sm:$0xff]
        %2090 = vset.pattern.permute.xlu0 0
        %2091 = vperm.xlu0 %2090, %v2087
        %v2092 = vpop.permute.xlu0 %2091
        %vm2093 = vcmp.eq.s32.totalorder %v1050, %v2092
        %v2094 = vsel %vm2093, 1, 0
        %v2095 = vcvt.s32.f32 %v2094
        %v2096 = vld [vmem:[%s35] sm:$0xff]
        %v2097 = vld [vmem:[%s35 + $0x8] sm:$0xff]
        %v2098 = vld [vmem:[%s35 + $0x10] sm:$0xff]
        %v2099 = vld [vmem:[%s35 + $0x18] sm:$0xff]
        %v2100 = vld [vmem:[%s35 + $0x20] sm:$0xff]
        %v2101 = vld [vmem:[%s35 + $0x28] sm:$0xff]
        %v2102 = vld [vmem:[%s35 + $0x30] sm:$0xff]
        %v2103 = vld [vmem:[%s35 + $0x38] sm:$0xff]
        %v2105 = vsel %vm1996, %v2095, 0
        %2107 = vmatprep.subr.mxu0 0.0
        %2108 = vmatpush1.msra.mxu0 %v2096
        %2109 = vmatprep.subr.mxu0 0.0
        %2110 = vmatpush1.msra.mxu0 %v2097
        %2111 = vmatprep.subr.mxu0 0.0
        %2112 = vmatpush1.msra.mxu0 %v2098
        %2113 = vmatprep.subr.mxu0 0.0
        %2114 = vmatpush1.msra.mxu0 %v2099
        %2115 = vmatprep.subr.mxu0 0.0
        %2116 = vmatpush1.msra.mxu0 %v2100
        %2117 = vmatprep.subr.mxu0 0.0
        %2118 = vmatpush1.msra.mxu0 %v2101
        %2119 = vmatprep.subr.mxu0 0.0
        %2120 = vmatpush1.msra.mxu0 %v2102
        %2121 = vmatprep.subr.mxu0 0.0
        %2122 = vmatpush1.msra.mxu0 %v2103
        %2123 = vmatprep.subr.mxu0 0.0
        %2124 = vmatpush1.msra.mxu0 0.0
        %2125 = vmatprep.subr.mxu0 0.0
        %2126 = vmatpush1.msra.mxu0 0.0
        %2127 = vmatprep.subr.mxu0 0.0
        %2128 = vmatpush1.msra.mxu0 0.0
        %2129 = vmatprep.subr.mxu0 0.0
        %2130 = vmatpush1.msra.mxu0 0.0
        %2131 = vmatprep.subr.mxu0 0.0
        %2132 = vmatpush1.msra.mxu0 0.0
        %2133 = vmatprep.subr.mxu0 0.0
        %2134 = vmatpush1.msra.mxu0 0.0
        %2135 = vmatprep.subr.mxu0 0.0
        %2136 = vmatpush1.msra.mxu0 0.0
        %2137 = vmatprep.subr.mxu0 0.0
        %2138 = vmatpush1.msra.mxu0 0.0
        %2139 = vmatprep.subr.mxu0 0.0
        %2140 = vmatpush1.msra.mxu0 0.0
        %2141 = vmatprep.subr.mxu0 0.0
        %2142 = vmatpush1.msra.mxu0 0.0
        %2143 = vmatprep.subr.mxu0 0.0
        %2144 = vmatpush1.msra.mxu0 0.0
        %2145 = vmatprep.subr.mxu0 0.0
        %2146 = vmatpush1.msra.mxu0 0.0
        %2147 = vmatprep.subr.mxu0 0.0
        %2148 = vmatpush1.msra.mxu0 0.0
        %2149 = vmatprep.subr.mxu0 0.0
        %2150 = vmatpush1.msra.mxu0 0.0
        %2151 = vmatprep.subr.mxu0 0.0
        %2152 = vmatpush1.msra.mxu0 0.0
        %2153 = vmatprep.subr.mxu0 0.0
        %2154 = vmatpush1.msra.mxu0 0.0
        %2155 = vmatprep.subr.mxu0 0.0
        %2156 = vmatpush1.msra.mxu0 0.0
        %2157 = vmatprep.subr.mxu0 0.0
        %2158 = vmatpush1.msra.mxu0 0.0
        %2159 = vmatprep.subr.mxu0 0.0
        %2160 = vmatpush1.msra.mxu0 0.0
        %2161 = vmatprep.subr.mxu0 0.0
        %2162 = vmatpush1.msra.mxu0 0.0
        %2163 = vmatprep.subr.mxu0 0.0
        %2164 = vmatpush1.msra.mxu0 0.0
        %2165 = vmatprep.subr.mxu0 0.0
        %2166 = vmatpush1.msra.mxu0 0.0
        %2167 = vmatprep.subr.mxu0 0.0
        %2168 = vmatpush1.msra.mxu0 0.0
        %2169 = vmatprep.subr.mxu0 0.0
        %2170 = vmatpush1.msra.mxu0 0.0
        %2171 = vmatprep.mubr.f32.mxu0 0.0
        %2172 = vmatmul.mubr.f32.gmra.mrb[0].mxu0 %v2105
        %v2173 = vpop.f32.mrb[0].mxu0
        %v2174 = vadd.f32 0.0, %v2173
        %v2175 = vpop.f32.mrb[0].mxu0
        %2176 = vdwg.mxu0
        %v2177 = vsub.f32 1.0, %v2088
        %v2178 = vmul.f32 %v2177, -1e+09
        %v2179 = vmul.f32 %v2174, %v2174
        %v2180 = vsel %vm1300, %v2179, 0.0
        %2181 = vadd.xlane.f32.xlu0 %v2180
        %v2182 = vpop.xlane.xlu0 %2181
        %v2183 = vmul.f32 %v2182, %v1304
        %v2184 = vadd.f32 %v2183, 1e-06
        %v2185 = vrsqrt.pop %v2184
        %v2186 = vmul.f32 %v2174, %v2185
        %v2187 = vld [vmem:[%s39] sm:$0x1]
        %v2189 = vlaneseq
        %v2190 = vshrl.u32 %v2189, 7
        %v2191 = vsub.s32 0, %v2190
        %v2192 = vrot.slane %v2187, %v2191
        %v2194 = vmul.f32 %v2186, %v2192
        %v2195 = vld [vmem:[%s41] sm:$0xff]
        %v2196 = vld [vmem:[%s41 + $0x8] sm:$0xff]
        %v2197 = vld [vmem:[%s41 + $0x10] sm:$0xff]
        %v2198 = vld [vmem:[%s41 + $0x18] sm:$0xff]
        %v2200 = vsel %vm1300, %v2194, 0
        %2202 = vmatprep.subr.mxu0 0.0
        %2203 = vmatpush1.msra.mxu0 %v2195
        %2204 = vmatprep.subr.mxu0 0.0
        %2205 = vmatpush1.msra.mxu0 %v2196
        %2206 = vmatprep.subr.mxu0 0.0
        %2207 = vmatpush1.msra.mxu0 %v2197
        %2208 = vmatprep.subr.mxu0 0.0
        %2209 = vmatpush1.msra.mxu0 %v2198
        %2210 = vmatprep.subr.mxu0 0.0
        %2211 = vmatpush1.msra.mxu0 0.0
        %2212 = vmatprep.subr.mxu0 0.0
        %2213 = vmatpush1.msra.mxu0 0.0
        %2214 = vmatprep.subr.mxu0 0.0
        %2215 = vmatpush1.msra.mxu0 0.0
        %2216 = vmatprep.subr.mxu0 0.0
        %2217 = vmatpush1.msra.mxu0 0.0
        %2218 = vmatprep.subr.mxu0 0.0
        %2219 = vmatpush1.msra.mxu0 0.0
        %2220 = vmatprep.subr.mxu0 0.0
        %2221 = vmatpush1.msra.mxu0 0.0
        %2222 = vmatprep.subr.mxu0 0.0
        %2223 = vmatpush1.msra.mxu0 0.0
        %2224 = vmatprep.subr.mxu0 0.0
        %2225 = vmatpush1.msra.mxu0 0.0
        %2226 = vmatprep.subr.mxu0 0.0
        %2227 = vmatpush1.msra.mxu0 0.0
        %2228 = vmatprep.subr.mxu0 0.0
        %2229 = vmatpush1.msra.mxu0 0.0
        %2230 = vmatprep.subr.mxu0 0.0
        %2231 = vmatpush1.msra.mxu0 0.0
        %2232 = vmatprep.subr.mxu0 0.0
        %2233 = vmatpush1.msra.mxu0 0.0
        %2234 = vmatprep.subr.mxu0 0.0
        %2235 = vmatpush1.msra.mxu0 0.0
        %2236 = vmatprep.subr.mxu0 0.0
        %2237 = vmatpush1.msra.mxu0 0.0
        %2238 = vmatprep.subr.mxu0 0.0
        %2239 = vmatpush1.msra.mxu0 0.0
        %2240 = vmatprep.subr.mxu0 0.0
        %2241 = vmatpush1.msra.mxu0 0.0
        %2242 = vmatprep.subr.mxu0 0.0
        %2243 = vmatpush1.msra.mxu0 0.0
        %2244 = vmatprep.subr.mxu0 0.0
        %2245 = vmatpush1.msra.mxu0 0.0
        %2246 = vmatprep.subr.mxu0 0.0
        %2247 = vmatpush1.msra.mxu0 0.0
        %2248 = vmatprep.subr.mxu0 0.0
        %2249 = vmatpush1.msra.mxu0 0.0
        %2250 = vmatprep.subr.mxu0 0.0
        %2251 = vmatpush1.msra.mxu0 0.0
        %2252 = vmatprep.subr.mxu0 0.0
        %2253 = vmatpush1.msra.mxu0 0.0
        %2254 = vmatprep.subr.mxu0 0.0
        %2255 = vmatpush1.msra.mxu0 0.0
        %2256 = vmatprep.subr.mxu0 0.0
        %2257 = vmatpush1.msra.mxu0 0.0
        %2258 = vmatprep.subr.mxu0 0.0
        %2259 = vmatpush1.msra.mxu0 0.0
        %2260 = vmatprep.subr.mxu0 0.0
        %2261 = vmatpush1.msra.mxu0 0.0
        %2262 = vmatprep.subr.mxu0 0.0
        %2263 = vmatpush1.msra.mxu0 0.0
        %2264 = vmatprep.subr.mxu0 0.0
        %2265 = vmatpush1.msra.mxu0 0.0
        %2266 = vmatprep.mubr.f32.mxu0 0.0
        %2267 = vmatmul.mubr.f32.gmra.mrb[0].mxu0 %v2200
        %v2268 = vpop.f32.mrb[0].mxu0
        %v2269 = vadd.f32 0.0, %v2268
        %v2270 = vpop.f32.mrb[0].mxu0
        %2271 = vdwg.mxu0
        %v2273 = vlaneseq
        %v2274 = vshrl.u32 %v2273, 7
        %v2275 = vsub.s32 0, %v2274
        %v2276 = vrot.slane %v2178, %v2275
        %2279 = vrot.lane.b32.xlu0 %v2269, 96
        %v2280 = vpop.permute.xlu0 %2279
        %v2281 = vsel %vm1069, %v2269, 0
        %v2283 = vsel %vm1069, %v2280, 0
        %2285 = vmatprep.subr.mxu0 0.0
        %2286 = vmatpush1.xpose.msra.mxu0 %v2283
        %2287 = vmatprep.subr.mxu0 0.0
        %2288 = vmatpush1.xpose.msra.mxu0 0.0
        %2289 = vmatprep.subr.mxu0 0.0
        %2290 = vmatpush1.xpose.msra.mxu0 0.0
        %2291 = vmatprep.subr.mxu0 0.0
        %2292 = vmatpush1.xpose.msra.mxu0 0.0
        %2293 = vmatprep.subr.mxu0 0.0
        %2294 = vmatpush1.xpose.msra.mxu0 0.0
        %2295 = vmatprep.subr.mxu0 0.0
        %2296 = vmatpush1.xpose.msra.mxu0 0.0
        %2297 = vmatprep.subr.mxu0 0.0
        %2298 = vmatpush1.xpose.msra.mxu0 0.0
        %2299 = vmatprep.subr.mxu0 0.0
        %2300 = vmatpush1.xpose.msra.mxu0 0.0
        %2301 = vmatprep.subr.mxu0 0.0
        %2302 = vmatpush1.xpose.msra.mxu0 0.0
        %2303 = vmatprep.subr.mxu0 0.0
        %2304 = vmatpush1.xpose.msra.mxu0 0.0
        %2305 = vmatprep.subr.mxu0 0.0
        %2306 = vmatpush1.xpose.msra.mxu0 0.0
        %2307 = vmatprep.subr.mxu0 0.0
        %2308 = vmatpush1.xpose.msra.mxu0 0.0
        %2309 = vmatprep.subr.mxu0 0.0
        %2310 = vmatpush1.xpose.msra.mxu0 0.0
        %2311 = vmatprep.subr.mxu0 0.0
        %2312 = vmatpush1.xpose.msra.mxu0 0.0
        %2313 = vmatprep.subr.mxu0 0.0
        %2314 = vmatpush1.xpose.msra.mxu0 0.0
        %2315 = vmatprep.subr.mxu0 0.0
        %2316 = vmatpush1.xpose.msra.mxu0 0.0
        %2317 = vmatprep.subr.mxu0 0.0
        %2318 = vmatpush1.xpose.msra.mxu0 0.0
        %2319 = vmatprep.subr.mxu0 0.0
        %2320 = vmatpush1.xpose.msra.mxu0 0.0
        %2321 = vmatprep.subr.mxu0 0.0
        %2322 = vmatpush1.xpose.msra.mxu0 0.0
        %2323 = vmatprep.subr.mxu0 0.0
        %2324 = vmatpush1.xpose.msra.mxu0 0.0
        %2325 = vmatprep.subr.mxu0 0.0
        %2326 = vmatpush1.xpose.msra.mxu0 0.0
        %2327 = vmatprep.subr.mxu0 0.0
        %2328 = vmatpush1.xpose.msra.mxu0 0.0
        %2329 = vmatprep.subr.mxu0 0.0
        %2330 = vmatpush1.xpose.msra.mxu0 0.0
        %2331 = vmatprep.subr.mxu0 0.0
        %2332 = vmatpush1.xpose.msra.mxu0 0.0
        %2333 = vmatprep.subr.mxu0 0.0
        %2334 = vmatpush1.xpose.msra.mxu0 0.0
        %2335 = vmatprep.subr.mxu0 0.0
        %2336 = vmatpush1.xpose.msra.mxu0 0.0
        %2337 = vmatprep.subr.mxu0 0.0
        %2338 = vmatpush1.xpose.msra.mxu0 0.0
        %2339 = vmatprep.subr.mxu0 0.0
        %2340 = vmatpush1.xpose.msra.mxu0 0.0
        %2341 = vmatprep.subr.mxu0 0.0
        %2342 = vmatpush1.xpose.msra.mxu0 0.0
        %2343 = vmatprep.subr.mxu0 0.0
        %2344 = vmatpush1.xpose.msra.mxu0 0.0
        %2345 = vmatprep.subr.mxu0 0.0
        %2346 = vmatpush1.xpose.msra.mxu0 0.0
        %2347 = vmatprep.subr.mxu0 0.0
        %2348 = vmatpush1.xpose.msra.mxu0 0.0
        %2349 = vmatprep.mubr.f32.mxu0 0.0
        %2350 = vmatmul.mubr.f32.gmra.mrb[0].mxu0 %v2281
        %v2351 = vpop.f32.mrb[0].mxu0
        %v2352 = vadd.f32 %v2276, %v2351
        %v2353 = vpop.f32.mrb[0].mxu0
        %2354 = vdwg.mxu0
        %v2355 = vld [vmem:[%s37] sm:$0xff]
        %v2356 = vadd.f32 %v2352, %v2355
        %v2357 = vsel %vm1477, %v2356, -inf
        %2358 = vmax.xlane.f32.xlu0 %v2357
        %v2359 = vpop.xlane.xlu0 %2358
        %v2360 = vsub.f32 %v2356, %v2359
        %v2361 = vmul.f32 %v2360, 1.442695
        %v2362 = vpow.pop %v2361
        %v2363 = vsel %vm1477, %v2362, 0.0
        %2364 = vadd.xlane.f32.xlu0 %v2363
        %v2365 = vpop.xlane.xlu0 %2364
        %v2366 = vrcp.pop %v2365
        %v2367 = vmul.f32 %v2362, %v2366
        %2368 = vrot.lane.b32.xlu0 %v2269, 64
        %v2369 = vpop.permute.xlu0 %2368
        %v2372 = vsel %vm1477, %v2367, 0
        %2374 = vmatprep.subr.mxu0 0.0
        %2375 = vmatpush1.msra.mxu0 %v2369
        %2376 = vmatprep.subr.mxu0 0.0
        %2377 = vmatpush1.msra.mxu0 0.0
        %2378 = vmatprep.subr.mxu0 0.0
        %2379 = vmatpush1.msra.mxu0 0.0
        %2380 = vmatprep.subr.mxu0 0.0
        %2381 = vmatpush1.msra.mxu0 0.0
        %2382 = vmatprep.subr.mxu0 0.0
        %2383 = vmatpush1.msra.mxu0 0.0
        %2384 = vmatprep.subr.mxu0 0.0
        %2385 = vmatpush1.msra.mxu0 0.0
        %2386 = vmatprep.subr.mxu0 0.0
        %2387 = vmatpush1.msra.mxu0 0.0
        %2388 = vmatprep.subr.mxu0 0.0
        %2389 = vmatpush1.msra.mxu0 0.0
        %2390 = vmatprep.subr.mxu0 0.0
        %2391 = vmatpush1.msra.mxu0 0.0
        %2392 = vmatprep.subr.mxu0 0.0
        %2393 = vmatpush1.msra.mxu0 0.0
        %2394 = vmatprep.subr.mxu0 0.0
        %2395 = vmatpush1.msra.mxu0 0.0
        %2396 = vmatprep.subr.mxu0 0.0
        %2397 = vmatpush1.msra.mxu0 0.0
        %2398 = vmatprep.subr.mxu0 0.0
        %2399 = vmatpush1.msra.mxu0 0.0
        %2400 = vmatprep.subr.mxu0 0.0
        %2401 = vmatpush1.msra.mxu0 0.0
        %2402 = vmatprep.subr.mxu0 0.0
        %2403 = vmatpush1.msra.mxu0 0.0
        %2404 = vmatprep.subr.mxu0 0.0
        %2405 = vmatpush1.msra.mxu0 0.0
        %2406 = vmatprep.subr.mxu0 0.0
        %2407 = vmatpush1.msra.mxu0 0.0
        %2408 = vmatprep.subr.mxu0 0.0
        %2409 = vmatpush1.msra.mxu0 0.0
        %2410 = vmatprep.subr.mxu0 0.0
        %2411 = vmatpush1.msra.mxu0 0.0
        %2412 = vmatprep.subr.mxu0 0.0
        %2413 = vmatpush1.msra.mxu0 0.0
        %2414 = vmatprep.subr.mxu0 0.0
        %2415 = vmatpush1.msra.mxu0 0.0
        %2416 = vmatprep.subr.mxu0 0.0
        %2417 = vmatpush1.msra.mxu0 0.0
        %2418 = vmatprep.subr.mxu0 0.0
        %2419 = vmatpush1.msra.mxu0 0.0
        %2420 = vmatprep.subr.mxu0 0.0
        %2421 = vmatpush1.msra.mxu0 0.0
        %2422 = vmatprep.subr.mxu0 0.0
        %2423 = vmatpush1.msra.mxu0 0.0
        %2424 = vmatprep.subr.mxu0 0.0
        %2425 = vmatpush1.msra.mxu0 0.0
        %2426 = vmatprep.subr.mxu0 0.0
        %2427 = vmatpush1.msra.mxu0 0.0
        %2428 = vmatprep.subr.mxu0 0.0
        %2429 = vmatpush1.msra.mxu0 0.0
        %2430 = vmatprep.subr.mxu0 0.0
        %2431 = vmatpush1.msra.mxu0 0.0
        %2432 = vmatprep.subr.mxu0 0.0
        %2433 = vmatpush1.msra.mxu0 0.0
        %2434 = vmatprep.subr.mxu0 0.0
        %2435 = vmatpush1.msra.mxu0 0.0
        %2436 = vmatprep.subr.mxu0 0.0
        %2437 = vmatpush1.msra.mxu0 0.0
        %2438 = vmatprep.mubr.f32.mxu0 0.0
        %2439 = vmatmul.mubr.f32.gmra.mrb[0].mxu0 %v2372
        %v2440 = vpop.f32.mrb[0].mxu0
        %v2441 = vadd.f32 0.0, %v2440
        %v2442 = vpop.f32.mrb[0].mxu0
        %2443 = vdwg.mxu0
        %v2444 = vld [vmem:[%s43] sm:$0xff]
        %v2445 = vld [vmem:[%s43 + $0x8] sm:$0xff]
        %2446 = vrot.lane.b32.xlu0 %v2269, 112
        %v2447 = vpop.permute.xlu0 %2446
        %2448 = vrot.lane.b32.xlu0 %v2269, 80
        %v2449 = vpop.permute.xlu0 %2448
        %v2450 = vsel %vm1069, %v2447, 0
        %v2452 = vsel %vm1069, %v2449, 0
        %2454 = vmatprep.subr.mxu0 0.0
        %2455 = vmatpush1.xpose.msra.mxu0 %v2452
        %2456 = vmatprep.subr.mxu0 0.0
        %2457 = vmatpush1.xpose.msra.mxu0 0.0
        %2458 = vmatprep.subr.mxu0 0.0
        %2459 = vmatpush1.xpose.msra.mxu0 0.0
        %2460 = vmatprep.subr.mxu0 0.0
        %2461 = vmatpush1.xpose.msra.mxu0 0.0
        %2462 = vmatprep.subr.mxu0 0.0
        %2463 = vmatpush1.xpose.msra.mxu0 0.0
        %2464 = vmatprep.subr.mxu0 0.0
        %2465 = vmatpush1.xpose.msra.mxu0 0.0
        %2466 = vmatprep.subr.mxu0 0.0
        %2467 = vmatpush1.xpose.msra.mxu0 0.0
        %2468 = vmatprep.subr.mxu0 0.0
        %2469 = vmatpush1.xpose.msra.mxu0 0.0
        %2470 = vmatprep.subr.mxu0 0.0
        %2471 = vmatpush1.xpose.msra.mxu0 0.0
        %2472 = vmatprep.subr.mxu0 0.0
        %2473 = vmatpush1.xpose.msra.mxu0 0.0
        %2474 = vmatprep.subr.mxu0 0.0
        %2475 = vmatpush1.xpose.msra.mxu0 0.0
        %2476 = vmatprep.subr.mxu0 0.0
        %2477 = vmatpush1.xpose.msra.mxu0 0.0
        %2478 = vmatprep.subr.mxu0 0.0
        %2479 = vmatpush1.xpose.msra.mxu0 0.0
        %2480 = vmatprep.subr.mxu0 0.0
        %2481 = vmatpush1.xpose.msra.mxu0 0.0
        %2482 = vmatprep.subr.mxu0 0.0
        %2483 = vmatpush1.xpose.msra.mxu0 0.0
        %2484 = vmatprep.subr.mxu0 0.0
        %2485 = vmatpush1.xpose.msra.mxu0 0.0
        %2486 = vmatprep.subr.mxu0 0.0
        %2487 = vmatpush1.xpose.msra.mxu0 0.0
        %2488 = vmatprep.subr.mxu0 0.0
        %2489 = vmatpush1.xpose.msra.mxu0 0.0
        %2490 = vmatprep.subr.mxu0 0.0
        %2491 = vmatpush1.xpose.msra.mxu0 0.0
        %2492 = vmatprep.subr.mxu0 0.0
        %2493 = vmatpush1.xpose.msra.mxu0 0.0
        %2494 = vmatprep.subr.mxu0 0.0
        %2495 = vmatpush1.xpose.msra.mxu0 0.0
        %2496 = vmatprep.subr.mxu0 0.0
        %2497 = vmatpush1.xpose.msra.mxu0 0.0
        %2498 = vmatprep.subr.mxu0 0.0
        %2499 = vmatpush1.xpose.msra.mxu0 0.0
        %2500 = vmatprep.subr.mxu0 0.0
        %2501 = vmatpush1.xpose.msra.mxu0 0.0
        %2502 = vmatprep.subr.mxu0 0.0
        %2503 = vmatpush1.xpose.msra.mxu0 0.0
        %2504 = vmatprep.subr.mxu0 0.0
        %2505 = vmatpush1.xpose.msra.mxu0 0.0
        %2506 = vmatprep.subr.mxu0 0.0
        %2507 = vmatpush1.xpose.msra.mxu0 0.0
        %2508 = vmatprep.subr.mxu0 0.0
        %2509 = vmatpush1.xpose.msra.mxu0 0.0
        %2510 = vmatprep.subr.mxu0 0.0
        %2511 = vmatpush1.xpose.msra.mxu0 0.0
        %2512 = vmatprep.subr.mxu0 0.0
        %2513 = vmatpush1.xpose.msra.mxu0 0.0
        %2514 = vmatprep.subr.mxu0 0.0
        %2515 = vmatpush1.xpose.msra.mxu0 0.0
        %2516 = vmatprep.subr.mxu0 0.0
        %2517 = vmatpush1.xpose.msra.mxu0 0.0
        %2518 = vmatprep.mubr.f32.mxu0 0.0
        %2519 = vmatmul.mubr.f32.gmra.mrb[0].mxu0 %v2450
        %v2520 = vpop.f32.mrb[0].mxu0
        %v2521 = vadd.f32 %v2276, %v2520
        %v2522 = vpop.f32.mrb[0].mxu0
        %2523 = vdwg.mxu0
        %s2524 = scalar_lea.vmem %s37, 8
        %v2525 = vld [vmem:[%s2524] sm:$0xff]
        %v2526 = vadd.f32 %v2521, %v2525
        %v2527 = vsel %vm1477, %v2526, -inf
        %2528 = vmax.xlane.f32.xlu0 %v2527
        %v2529 = vpop.xlane.xlu0 %2528
        %v2530 = vsub.f32 %v2526, %v2529
        %v2531 = vmul.f32 %v2530, 1.442695
        %v2532 = vpow.pop %v2531
        %v2533 = vsel %vm1477, %v2532, 0.0
        %2534 = vadd.xlane.f32.xlu0 %v2533
        %v2535 = vpop.xlane.xlu0 %2534
        %v2536 = vrcp.pop %v2535
        %v2537 = vmul.f32 %v2532, %v2536
        %2538 = vrot.lane.b32.xlu0 %v2269, 48
        %v2539 = vpop.permute.xlu0 %2538
        %v2542 = vsel %vm1477, %v2537, 0
        %2544 = vmatprep.subr.mxu0 0.0
        %2545 = vmatpush1.msra.mxu0 %v2539
        %2546 = vmatprep.subr.mxu0 0.0
        %2547 = vmatpush1.msra.mxu0 0.0
        %2548 = vmatprep.subr.mxu0 0.0
        %2549 = vmatpush1.msra.mxu0 0.0
        %2550 = vmatprep.subr.mxu0 0.0
        %2551 = vmatpush1.msra.mxu0 0.0
        %2552 = vmatprep.subr.mxu0 0.0
        %2553 = vmatpush1.msra.mxu0 0.0
        %2554 = vmatprep.subr.mxu0 0.0
        %2555 = vmatpush1.msra.mxu0 0.0
        %2556 = vmatprep.subr.mxu0 0.0
        %2557 = vmatpush1.msra.mxu0 0.0
        %2558 = vmatprep.subr.mxu0 0.0
        %2559 = vmatpush1.msra.mxu0 0.0
        %2560 = vmatprep.subr.mxu0 0.0
        %2561 = vmatpush1.msra.mxu0 0.0
        %2562 = vmatprep.subr.mxu0 0.0
        %2563 = vmatpush1.msra.mxu0 0.0
        %2564 = vmatprep.subr.mxu0 0.0
        %2565 = vmatpush1.msra.mxu0 0.0
        %2566 = vmatprep.subr.mxu0 0.0
        %2567 = vmatpush1.msra.mxu0 0.0
        %2568 = vmatprep.subr.mxu0 0.0
        %2569 = vmatpush1.msra.mxu0 0.0
        %2570 = vmatprep.subr.mxu0 0.0
        %2571 = vmatpush1.msra.mxu0 0.0
        %2572 = vmatprep.subr.mxu0 0.0
        %2573 = vmatpush1.msra.mxu0 0.0
        %2574 = vmatprep.subr.mxu0 0.0
        %2575 = vmatpush1.msra.mxu0 0.0
        %2576 = vmatprep.subr.mxu0 0.0
        %2577 = vmatpush1.msra.mxu0 0.0
        %2578 = vmatprep.subr.mxu0 0.0
        %2579 = vmatpush1.msra.mxu0 0.0
        %2580 = vmatprep.subr.mxu0 0.0
        %2581 = vmatpush1.msra.mxu0 0.0
        %2582 = vmatprep.subr.mxu0 0.0
        %2583 = vmatpush1.msra.mxu0 0.0
        %2584 = vmatprep.subr.mxu0 0.0
        %2585 = vmatpush1.msra.mxu0 0.0
        %2586 = vmatprep.subr.mxu0 0.0
        %2587 = vmatpush1.msra.mxu0 0.0
        %2588 = vmatprep.subr.mxu0 0.0
        %2589 = vmatpush1.msra.mxu0 0.0
        %2590 = vmatprep.subr.mxu0 0.0
        %2591 = vmatpush1.msra.mxu0 0.0
        %2592 = vmatprep.subr.mxu0 0.0
        %2593 = vmatpush1.msra.mxu0 0.0
        %2594 = vmatprep.subr.mxu0 0.0
        %2595 = vmatpush1.msra.mxu0 0.0
        %2596 = vmatprep.subr.mxu0 0.0
        %2597 = vmatpush1.msra.mxu0 0.0
        %2598 = vmatprep.subr.mxu0 0.0
        %2599 = vmatpush1.msra.mxu0 0.0
        %2600 = vmatprep.subr.mxu0 0.0
        %2601 = vmatpush1.msra.mxu0 0.0
        %2602 = vmatprep.subr.mxu0 0.0
        %2603 = vmatpush1.msra.mxu0 0.0
        %2604 = vmatprep.subr.mxu0 0.0
        %2605 = vmatpush1.msra.mxu0 0.0
        %2606 = vmatprep.subr.mxu0 0.0
        %2607 = vmatpush1.msra.mxu0 0.0
        %2608 = vmatprep.mubr.f32.mxu0 0.0
        %2609 = vmatmul.mubr.f32.gmra.mrb[0].mxu0 %v2542
        %v2610 = vpop.f32.mrb[0].mxu0
        %v2611 = vadd.f32 0.0, %v2610
        %v2612 = vpop.f32.mrb[0].mxu0
        %2613 = vdwg.mxu0
        %v2614 = vld [vmem:[%s43 + $0x10] sm:$0xff]
        %v2615 = vld [vmem:[%s43 + $0x18] sm:$0xff]
        %v2617 = vsel %vm1069, %v2611, 0
        %2619 = vmatprep.subr.mxu0 0.0
        %2620 = vmatpush1.msra.mxu0 %v2614
        %2621 = vmatprep.subr.mxu0 0.0
        %2622 = vmatpush1.msra.mxu0 %v2615
        %2623 = vmatprep.subr.mxu0 0.0
        %2624 = vmatpush1.msra.mxu0 0.0
        %2625 = vmatprep.subr.mxu0 0.0
        %2626 = vmatpush1.msra.mxu0 0.0
        %2627 = vmatprep.subr.mxu0 0.0
        %2628 = vmatpush1.msra.mxu0 0.0
        %2629 = vmatprep.subr.mxu0 0.0
        %2630 = vmatpush1.msra.mxu0 0.0
        %2631 = vmatprep.subr.mxu0 0.0
        %2632 = vmatpush1.msra.mxu0 0.0
        %2633 = vmatprep.subr.mxu0 0.0
        %2634 = vmatpush1.msra.mxu0 0.0
        %2635 = vmatprep.subr.mxu0 0.0
        %2636 = vmatpush1.msra.mxu0 0.0
        %2637 = vmatprep.subr.mxu0 0.0
        %2638 = vmatpush1.msra.mxu0 0.0
        %2639 = vmatprep.subr.mxu0 0.0
        %2640 = vmatpush1.msra.mxu0 0.0
        %2641 = vmatprep.subr.mxu0 0.0
        %2642 = vmatpush1.msra.mxu0 0.0
        %2643 = vmatprep.subr.mxu0 0.0
        %2644 = vmatpush1.msra.mxu0 0.0
        %2645 = vmatprep.subr.mxu0 0.0
        %2646 = vmatpush1.msra.mxu0 0.0
        %2647 = vmatprep.subr.mxu0 0.0
        %2648 = vmatpush1.msra.mxu0 0.0
        %2649 = vmatprep.subr.mxu0 0.0
        %2650 = vmatpush1.msra.mxu0 0.0
        %2651 = vmatprep.subr.mxu0 0.0
        %2652 = vmatpush1.msra.mxu0 0.0
        %2653 = vmatprep.subr.mxu0 0.0
        %2654 = vmatpush1.msra.mxu0 0.0
        %2655 = vmatprep.subr.mxu0 0.0
        %2656 = vmatpush1.msra.mxu0 0.0
        %2657 = vmatprep.subr.mxu0 0.0
        %2658 = vmatpush1.msra.mxu0 0.0
        %2659 = vmatprep.subr.mxu0 0.0
        %2660 = vmatpush1.msra.mxu0 0.0
        %2661 = vmatprep.subr.mxu0 0.0
        %2662 = vmatpush1.msra.mxu0 0.0
        %2663 = vmatprep.subr.mxu0 0.0
        %2664 = vmatpush1.msra.mxu0 0.0
        %2665 = vmatprep.subr.mxu0 0.0
        %2666 = vmatpush1.msra.mxu0 0.0
        %2667 = vmatprep.subr.mxu0 0.0
        %2668 = vmatpush1.msra.mxu0 0.0
        %2669 = vmatprep.subr.mxu0 0.0
        %2670 = vmatpush1.msra.mxu0 0.0
        %2671 = vmatprep.subr.mxu0 0.0
        %2672 = vmatpush1.msra.mxu0 0.0
        %2673 = vmatprep.subr.mxu0 0.0
        %2674 = vmatpush1.msra.mxu0 0.0
        %2675 = vmatprep.subr.mxu0 0.0
        %2676 = vmatpush1.msra.mxu0 0.0
        %2677 = vmatprep.subr.mxu0 0.0
        %2678 = vmatpush1.msra.mxu0 0.0
        %2679 = vmatprep.subr.mxu0 0.0
        %2680 = vmatpush1.msra.mxu0 0.0
        %2681 = vmatprep.subr.mxu0 0.0
        %2682 = vmatpush1.msra.mxu0 0.0
        %2683 = vmatprep.mubr.f32.mxu0 0.0
        %2684 = vmatmul.mubr.f32.gmra.mrb[0].mxu0 %v2617
        %v2685 = vpop.f32.mrb[0].mxu0
        %v2686 = vadd.f32 0.0, %v2685
        %v2687 = vpop.f32.mrb[0].mxu0
        %2688 = vdwg.mxu0
        %v2690 = vsel %vm1069, %v2441, 0
        %2692 = vmatprep.subr.mxu0 0.0
        %2693 = vmatpush1.msra.mxu0 %v2444
        %2694 = vmatprep.subr.mxu0 0.0
        %2695 = vmatpush1.msra.mxu0 %v2445
        %2696 = vmatprep.subr.mxu0 0.0
        %2697 = vmatpush1.msra.mxu0 0.0
        %2698 = vmatprep.subr.mxu0 0.0
        %2699 = vmatpush1.msra.mxu0 0.0
        %2700 = vmatprep.subr.mxu0 0.0
        %2701 = vmatpush1.msra.mxu0 0.0
        %2702 = vmatprep.subr.mxu0 0.0
        %2703 = vmatpush1.msra.mxu0 0.0
        %2704 = vmatprep.subr.mxu0 0.0
        %2705 = vmatpush1.msra.mxu0 0.0
        %2706 = vmatprep.subr.mxu0 0.0
        %2707 = vmatpush1.msra.mxu0 0.0
        %2708 = vmatprep.subr.mxu0 0.0
        %2709 = vmatpush1.msra.mxu0 0.0
        %2710 = vmatprep.subr.mxu0 0.0
        %2711 = vmatpush1.msra.mxu0 0.0
        %2712 = vmatprep.subr.mxu0 0.0
        %2713 = vmatpush1.msra.mxu0 0.0
        %2714 = vmatprep.subr.mxu0 0.0
        %2715 = vmatpush1.msra.mxu0 0.0
        %2716 = vmatprep.subr.mxu0 0.0
        %2717 = vmatpush1.msra.mxu0 0.0
        %2718 = vmatprep.subr.mxu0 0.0
        %2719 = vmatpush1.msra.mxu0 0.0
        %2720 = vmatprep.subr.mxu0 0.0
        %2721 = vmatpush1.msra.mxu0 0.0
        %2722 = vmatprep.subr.mxu0 0.0
        %2723 = vmatpush1.msra.mxu0 0.0
        %2724 = vmatprep.subr.mxu0 0.0
        %2725 = vmatpush1.msra.mxu0 0.0
        %2726 = vmatprep.subr.mxu0 0.0
        %2727 = vmatpush1.msra.mxu0 0.0
        %2728 = vmatprep.subr.mxu0 0.0
        %2729 = vmatpush1.msra.mxu0 0.0
        %2730 = vmatprep.subr.mxu0 0.0
        %2731 = vmatpush1.msra.mxu0 0.0
        %2732 = vmatprep.subr.mxu0 0.0
        %2733 = vmatpush1.msra.mxu0 0.0
        %2734 = vmatprep.subr.mxu0 0.0
        %2735 = vmatpush1.msra.mxu0 0.0
        %2736 = vmatprep.subr.mxu0 0.0
        %2737 = vmatpush1.msra.mxu0 0.0
        %2738 = vmatprep.subr.mxu0 0.0
        %2739 = vmatpush1.msra.mxu0 0.0
        %2740 = vmatprep.subr.mxu0 0.0
        %2741 = vmatpush1.msra.mxu0 0.0
        %2742 = vmatprep.subr.mxu0 0.0
        %2743 = vmatpush1.msra.mxu0 0.0
        %2744 = vmatprep.subr.mxu0 0.0
        %2745 = vmatpush1.msra.mxu0 0.0
        %2746 = vmatprep.subr.mxu0 0.0
        %2747 = vmatpush1.msra.mxu0 0.0
        %2748 = vmatprep.subr.mxu0 0.0
        %2749 = vmatpush1.msra.mxu0 0.0
        %2750 = vmatprep.subr.mxu0 0.0
        %2751 = vmatpush1.msra.mxu0 0.0
        %2752 = vmatprep.subr.mxu0 0.0
        %2753 = vmatpush1.msra.mxu0 0.0
        %2754 = vmatprep.subr.mxu0 0.0
        %2755 = vmatpush1.msra.mxu0 0.0
        %2756 = vmatprep.mubr.f32.mxu0 0.0
        %2757 = vmatmul.mubr.f32.gmra.mrb[0].mxu0 %v2690
        %v2758 = vpop.f32.mrb[0].mxu0
        %v2759 = vadd.f32 %v2686, %v2758
        %v2760 = vpop.f32.mrb[0].mxu0
        %2761 = vdwg.mxu0
        %v2762 = vadd.f32 %v2174, %v2759
        %v2763 = vmul.f32 %v2762, %v2762
        %v2764 = vsel %vm1300, %v2763, 0.0
        %2765 = vadd.xlane.f32.xlu0 %v2764
        %v2766 = vpop.xlane.xlu0 %2765
        %v2767 = vmul.f32 %v2766, %v1304
        %v2768 = vadd.f32 %v2767, 1e-06
        %v2769 = vrsqrt.pop %v2768
        %v2770 = vmul.f32 %v2762, %v2769
        %v2771 = vld [vmem:[%s45] sm:$0x1]
        %v2773 = vlaneseq
        %v2774 = vshrl.u32 %v2773, 7
        %v2775 = vsub.s32 0, %v2774
        %v2776 = vrot.slane %v2771, %v2775
        %v2778 = vmul.f32 %v2770, %v2776
        %v2779 = vld [vmem:[%s47] sm:$0xff]
        %v2780 = vld [vmem:[%s47 + $0x8] sm:$0xff]
        %v2781 = vld [vmem:[%s47 + $0x10] sm:$0xff]
        %v2782 = vld [vmem:[%s47 + $0x18] sm:$0xff]
        %v2784 = vsel %vm1300, %v2778, 0
        %2786 = vmatprep.subr.mxu0 0.0
        %2787 = vmatpush1.msra.mxu0 %v2779
        %2788 = vmatprep.subr.mxu0 0.0
        %2789 = vmatpush1.msra.mxu0 %v2780
        %2790 = vmatprep.subr.mxu0 0.0
        %2791 = vmatpush1.msra.mxu0 %v2781
        %2792 = vmatprep.subr.mxu0 0.0
        %2793 = vmatpush1.msra.mxu0 %v2782
        %2794 = vmatprep.subr.mxu0 0.0
        %2795 = vmatpush1.msra.mxu0 0.0
        %2796 = vmatprep.subr.mxu0 0.0
        %2797 = vmatpush1.msra.mxu0 0.0
        %2798 = vmatprep.subr.mxu0 0.0
        %2799 = vmatpush1.msra.mxu0 0.0
        %2800 = vmatprep.subr.mxu0 0.0
        %2801 = vmatpush1.msra.mxu0 0.0
        %2802 = vmatprep.subr.mxu0 0.0
        %2803 = vmatpush1.msra.mxu0 0.0
        %2804 = vmatprep.subr.mxu0 0.0
        %2805 = vmatpush1.msra.mxu0 0.0
        %2806 = vmatprep.subr.mxu0 0.0
        %2807 = vmatpush1.msra.mxu0 0.0
        %2808 = vmatprep.subr.mxu0 0.0
        %2809 = vmatpush1.msra.mxu0 0.0
        %2810 = vmatprep.subr.mxu0 0.0
        %2811 = vmatpush1.msra.mxu0 0.0
        %2812 = vmatprep.subr.mxu0 0.0
        %2813 = vmatpush1.msra.mxu0 0.0
        %2814 = vmatprep.subr.mxu0 0.0
        %2815 = vmatpush1.msra.mxu0 0.0
        %2816 = vmatprep.subr.mxu0 0.0
        %2817 = vmatpush1.msra.mxu0 0.0
        %2818 = vmatprep.subr.mxu0 0.0
        %2819 = vmatpush1.msra.mxu0 0.0
        %2820 = vmatprep.subr.mxu0 0.0
        %2821 = vmatpush1.msra.mxu0 0.0
        %2822 = vmatprep.subr.mxu0 0.0
        %2823 = vmatpush1.msra.mxu0 0.0
        %2824 = vmatprep.subr.mxu0 0.0
        %2825 = vmatpush1.msra.mxu0 0.0
        %2826 = vmatprep.subr.mxu0 0.0
        %2827 = vmatpush1.msra.mxu0 0.0
        %2828 = vmatprep.subr.mxu0 0.0
        %2829 = vmatpush1.msra.mxu0 0.0
        %2830 = vmatprep.subr.mxu0 0.0
        %2831 = vmatpush1.msra.mxu0 0.0
        %2832 = vmatprep.subr.mxu0 0.0
        %2833 = vmatpush1.msra.mxu0 0.0
        %2834 = vmatprep.subr.mxu0 0.0
        %2835 = vmatpush1.msra.mxu0 0.0
        %2836 = vmatprep.subr.mxu0 0.0
        %2837 = vmatpush1.msra.mxu0 0.0
        %2838 = vmatprep.subr.mxu0 0.0
        %2839 = vmatpush1.msra.mxu0 0.0
        %2840 = vmatprep.subr.mxu0 0.0
        %2841 = vmatpush1.msra.mxu0 0.0
        %2842 = vmatprep.subr.mxu0 0.0
        %2843 = vmatpush1.msra.mxu0 0.0
        %2844 = vmatprep.subr.mxu0 0.0
        %2845 = vmatpush1.msra.mxu0 0.0
        %2846 = vmatprep.subr.mxu0 0.0
        %2847 = vmatpush1.msra.mxu0 0.0
        %2848 = vmatprep.subr.mxu0 0.0
        %2849 = vmatpush1.msra.mxu0 0.0
        %2850 = vmatprep.mubr.f32.mxu0 0.0
        %2851 = vmatmul.mubr.f32.gmra.mrb[0].mxu0 %v2784
        %v2852 = vpop.f32.mrb[0].mxu0
        %v2853 = vadd.f32 0.0, %v2852
        %v2854 = vpop.f32.mrb[0].mxu0
        %2855 = vdwg.mxu0
        %v2856 = vld [vmem:[%s49] sm:$0xff]
        %v2857 = vld [vmem:[%s49 + $0x8] sm:$0xff]
        %v2858 = vld [vmem:[%s49 + $0x10] sm:$0xff]
        %v2859 = vld [vmem:[%s49 + $0x18] sm:$0xff]
        %v2861 = vsel %vm1300, %v2086, 0
        %2863 = vmatprep.subr.mxu0 0.0
        %2864 = vmatpush1.msra.mxu0 %v2856
        %2865 = vmatprep.subr.mxu0 0.0
        %2866 = vmatpush1.msra.mxu0 %v2857
        %2867 = vmatprep.subr.mxu0 0.0
        %2868 = vmatpush1.msra.mxu0 %v2858
        %2869 = vmatprep.subr.mxu0 0.0
        %2870 = vmatpush1.msra.mxu0 %v2859
        %2871 = vmatprep.subr.mxu0 0.0
        %2872 = vmatpush1.msra.mxu0 0.0
        %2873 = vmatprep.subr.mxu0 0.0
        %2874 = vmatpush1.msra.mxu0 0.0
        %2875 = vmatprep.subr.mxu0 0.0
        %2876 = vmatpush1.msra.mxu0 0.0
        %2877 = vmatprep.subr.mxu0 0.0
        %2878 = vmatpush1.msra.mxu0 0.0
        %2879 = vmatprep.subr.mxu0 0.0
        %2880 = vmatpush1.msra.mxu0 0.0
        %2881 = vmatprep.subr.mxu0 0.0
        %2882 = vmatpush1.msra.mxu0 0.0
        %2883 = vmatprep.subr.mxu0 0.0
        %2884 = vmatpush1.msra.mxu0 0.0
        %2885 = vmatprep.subr.mxu0 0.0
        %2886 = vmatpush1.msra.mxu0 0.0
        %2887 = vmatprep.subr.mxu0 0.0
        %2888 = vmatpush1.msra.mxu0 0.0
        %2889 = vmatprep.subr.mxu0 0.0
        %2890 = vmatpush1.msra.mxu0 0.0
        %2891 = vmatprep.subr.mxu0 0.0
        %2892 = vmatpush1.msra.mxu0 0.0
        %2893 = vmatprep.subr.mxu0 0.0
        %2894 = vmatpush1.msra.mxu0 0.0
        %2895 = vmatprep.subr.mxu0 0.0
        %2896 = vmatpush1.msra.mxu0 0.0
        %2897 = vmatprep.subr.mxu0 0.0
        %2898 = vmatpush1.msra.mxu0 0.0
        %2899 = vmatprep.subr.mxu0 0.0
        %2900 = vmatpush1.msra.mxu0 0.0
        %2901 = vmatprep.subr.mxu0 0.0
        %2902 = vmatpush1.msra.mxu0 0.0
        %2903 = vmatprep.subr.mxu0 0.0
        %2904 = vmatpush1.msra.mxu0 0.0
        %2905 = vmatprep.subr.mxu0 0.0
        %2906 = vmatpush1.msra.mxu0 0.0
        %2907 = vmatprep.subr.mxu0 0.0
        %2908 = vmatpush1.msra.mxu0 0.0
        %2909 = vmatprep.subr.mxu0 0.0
        %2910 = vmatpush1.msra.mxu0 0.0
        %2911 = vmatprep.subr.mxu0 0.0
        %2912 = vmatpush1.msra.mxu0 0.0
        %2913 = vmatprep.subr.mxu0 0.0
        %2914 = vmatpush1.msra.mxu0 0.0
        %2915 = vmatprep.subr.mxu0 0.0
        %2916 = vmatpush1.msra.mxu0 0.0
        %2917 = vmatprep.subr.mxu0 0.0
        %2918 = vmatpush1.msra.mxu0 0.0
        %2919 = vmatprep.subr.mxu0 0.0
        %2920 = vmatpush1.msra.mxu0 0.0
        %2921 = vmatprep.subr.mxu0 0.0
        %2922 = vmatpush1.msra.mxu0 0.0
        %2923 = vmatprep.subr.mxu0 0.0
        %2924 = vmatpush1.msra.mxu0 0.0
        %2925 = vmatprep.subr.mxu0 0.0
        %2926 = vmatpush1.msra.mxu0 0.0
        %2927 = vmatprep.mubr.f32.mxu0 0.0
        %2928 = vmatmul.mubr.f32.gmra.mrb[0].mxu0 %v2861
        %v2929 = vpop.f32.mrb[0].mxu0
        %v2930 = vadd.f32 0.0, %v2929
        %v2931 = vpop.f32.mrb[0].mxu0
        %2932 = vdwg.mxu0
        %v2934 = vsel %vm1069, %v2853, 0
        %v2937 = vsel %vm1069, %v2930, 0
        %2939 = vmatprep.subr.mxu0 0.0
        %2940 = vmatpush1.xpose.msra.mxu0 %v2937
        %2941 = vmatprep.subr.mxu0 0.0
        %2942 = vmatpush1.xpose.msra.mxu0 0.0
        %2943 = vmatprep.subr.mxu0 0.0
        %2944 = vmatpush1.xpose.msra.mxu0 0.0
        %2945 = vmatprep.subr.mxu0 0.0
        %2946 = vmatpush1.xpose.msra.mxu0 0.0
        %2947 = vmatprep.subr.mxu0 0.0
        %2948 = vmatpush1.xpose.msra.mxu0 0.0
        %2949 = vmatprep.subr.mxu0 0.0
        %2950 = vmatpush1.xpose.msra.mxu0 0.0
        %2951 = vmatprep.subr.mxu0 0.0
        %2952 = vmatpush1.xpose.msra.mxu0 0.0
        %2953 = vmatprep.subr.mxu0 0.0
        %2954 = vmatpush1.xpose.msra.mxu0 0.0
        %2955 = vmatprep.subr.mxu0 0.0
        %2956 = vmatpush1.xpose.msra.mxu0 0.0
        %2957 = vmatprep.subr.mxu0 0.0
        %2958 = vmatpush1.xpose.msra.mxu0 0.0
        %2959 = vmatprep.subr.mxu0 0.0
        %2960 = vmatpush1.xpose.msra.mxu0 0.0
        %2961 = vmatprep.subr.mxu0 0.0
        %2962 = vmatpush1.xpose.msra.mxu0 0.0
        %2963 = vmatprep.subr.mxu0 0.0
        %2964 = vmatpush1.xpose.msra.mxu0 0.0
        %2965 = vmatprep.subr.mxu0 0.0
        %2966 = vmatpush1.xpose.msra.mxu0 0.0
        %2967 = vmatprep.subr.mxu0 0.0
        %2968 = vmatpush1.xpose.msra.mxu0 0.0
        %2969 = vmatprep.subr.mxu0 0.0
        %2970 = vmatpush1.xpose.msra.mxu0 0.0
        %2971 = vmatprep.subr.mxu0 0.0
        %2972 = vmatpush1.xpose.msra.mxu0 0.0
        %2973 = vmatprep.subr.mxu0 0.0
        %2974 = vmatpush1.xpose.msra.mxu0 0.0
        %2975 = vmatprep.subr.mxu0 0.0
        %2976 = vmatpush1.xpose.msra.mxu0 0.0
        %2977 = vmatprep.subr.mxu0 0.0
        %2978 = vmatpush1.xpose.msra.mxu0 0.0
        %2979 = vmatprep.subr.mxu0 0.0
        %2980 = vmatpush1.xpose.msra.mxu0 0.0
        %2981 = vmatprep.subr.mxu0 0.0
        %2982 = vmatpush1.xpose.msra.mxu0 0.0
        %2983 = vmatprep.subr.mxu0 0.0
        %2984 = vmatpush1.xpose.msra.mxu0 0.0
        %2985 = vmatprep.subr.mxu0 0.0
        %2986 = vmatpush1.xpose.msra.mxu0 0.0
        %2987 = vmatprep.subr.mxu0 0.0
        %2988 = vmatpush1.xpose.msra.mxu0 0.0
        %2989 = vmatprep.subr.mxu0 0.0
        %2990 = vmatpush1.xpose.msra.mxu0 0.0
        %2991 = vmatprep.subr.mxu0 0.0
        %2992 = vmatpush1.xpose.msra.mxu0 0.0
        %2993 = vmatprep.subr.mxu0 0.0
        %2994 = vmatpush1.xpose.msra.mxu0 0.0
        %2995 = vmatprep.subr.mxu0 0.0
        %2996 = vmatpush1.xpose.msra.mxu0 0.0
        %2997 = vmatprep.subr.mxu0 0.0
        %2998 = vmatpush1.xpose.msra.mxu0 0.0
        %2999 = vmatprep.subr.mxu0 0.0
        %3000 = vmatpush1.xpose.msra.mxu0 0.0
        %3001 = vmatprep.subr.mxu0 0.0
        %3002 = vmatpush1.xpose.msra.mxu0 0.0
        %3003 = vmatprep.mubr.f32.mxu0 0.0
        %3004 = vmatmul.mubr.f32.gmra.mrb[0].mxu0 %v2934
        %v3005 = vpop.f32.mrb[0].mxu0
        %v3006 = vadd.f32 %v1398, %v3005
        %v3007 = vpop.f32.mrb[0].mxu0
        %3008 = vdwg.mxu0
        %v3009 = vsel %vm1477, %v3006, -inf
        %3010 = vmax.xlane.f32.xlu0 %v3009
        %v3011 = vpop.xlane.xlu0 %3010
        %v3012 = vsub.f32 %v3006, %v3011
        %v3013 = vmul.f32 %v3012, 1.442695
        %v3014 = vpow.pop %v3013
        %v3015 = vsel %vm1477, %v3014, 0.0
        %3016 = vadd.xlane.f32.xlu0 %v3015
        %v3017 = vpop.xlane.xlu0 %3016
        %v3018 = vrcp.pop %v3017
        %v3019 = vmul.f32 %v3014, %v3018
        %3020 = vrot.lane.b32.xlu0 %v2930, 96
        %v3021 = vpop.permute.xlu0 %3020
        %v3024 = vsel %vm1477, %v3019, 0
        %3026 = vmatprep.subr.mxu0 0.0
        %3027 = vmatpush1.msra.mxu0 %v3021
        %3028 = vmatprep.subr.mxu0 0.0
        %3029 = vmatpush1.msra.mxu0 0.0
        %3030 = vmatprep.subr.mxu0 0.0
        %3031 = vmatpush1.msra.mxu0 0.0
        %3032 = vmatprep.subr.mxu0 0.0
        %3033 = vmatpush1.msra.mxu0 0.0
        %3034 = vmatprep.subr.mxu0 0.0
        %3035 = vmatpush1.msra.mxu0 0.0
        %3036 = vmatprep.subr.mxu0 0.0
        %3037 = vmatpush1.msra.mxu0 0.0
        %3038 = vmatprep.subr.mxu0 0.0
        %3039 = vmatpush1.msra.mxu0 0.0
        %3040 = vmatprep.subr.mxu0 0.0
        %3041 = vmatpush1.msra.mxu0 0.0
        %3042 = vmatprep.subr.mxu0 0.0
        %3043 = vmatpush1.msra.mxu0 0.0
        %3044 = vmatprep.subr.mxu0 0.0
        %3045 = vmatpush1.msra.mxu0 0.0
        %3046 = vmatprep.subr.mxu0 0.0
        %3047 = vmatpush1.msra.mxu0 0.0
        %3048 = vmatprep.subr.mxu0 0.0
        %3049 = vmatpush1.msra.mxu0 0.0
        %3050 = vmatprep.subr.mxu0 0.0
        %3051 = vmatpush1.msra.mxu0 0.0
        %3052 = vmatprep.subr.mxu0 0.0
        %3053 = vmatpush1.msra.mxu0 0.0
        %3054 = vmatprep.subr.mxu0 0.0
        %3055 = vmatpush1.msra.mxu0 0.0
        %3056 = vmatprep.subr.mxu0 0.0
        %3057 = vmatpush1.msra.mxu0 0.0
        %3058 = vmatprep.subr.mxu0 0.0
        %3059 = vmatpush1.msra.mxu0 0.0
        %3060 = vmatprep.subr.mxu0 0.0
        %3061 = vmatpush1.msra.mxu0 0.0
        %3062 = vmatprep.subr.mxu0 0.0
        %3063 = vmatpush1.msra.mxu0 0.0
        %3064 = vmatprep.subr.mxu0 0.0
        %3065 = vmatpush1.msra.mxu0 0.0
        %3066 = vmatprep.subr.mxu0 0.0
        %3067 = vmatpush1.msra.mxu0 0.0
        %3068 = vmatprep.subr.mxu0 0.0
        %3069 = vmatpush1.msra.mxu0 0.0
        %3070 = vmatprep.subr.mxu0 0.0
        %3071 = vmatpush1.msra.mxu0 0.0
        %3072 = vmatprep.subr.mxu0 0.0
        %3073 = vmatpush1.msra.mxu0 0.0
        %3074 = vmatprep.subr.mxu0 0.0
        %3075 = vmatpush1.msra.mxu0 0.0
        %3076 = vmatprep.subr.mxu0 0.0
        %3077 = vmatpush1.msra.mxu0 0.0
        %3078 = vmatprep.subr.mxu0 0.0
        %3079 = vmatpush1.msra.mxu0 0.0
        %3080 = vmatprep.subr.mxu0 0.0
        %3081 = vmatpush1.msra.mxu0 0.0
        %3082 = vmatprep.subr.mxu0 0.0
        %3083 = vmatpush1.msra.mxu0 0.0
        %3084 = vmatprep.subr.mxu0 0.0
        %3085 = vmatpush1.msra.mxu0 0.0
        %3086 = vmatprep.subr.mxu0 0.0
        %3087 = vmatpush1.msra.mxu0 0.0
        %3088 = vmatprep.subr.mxu0 0.0
        %3089 = vmatpush1.msra.mxu0 0.0
        %3090 = vmatprep.mubr.f32.mxu0 0.0
        %3091 = vmatmul.mubr.f32.gmra.mrb[0].mxu0 %v3024
        %v3092 = vpop.f32.mrb[0].mxu0
        %v3093 = vadd.f32 0.0, %v3092
        %v3094 = vpop.f32.mrb[0].mxu0
        %3095 = vdwg.mxu0
        %v3096 = vld [vmem:[%s51] sm:$0xff]
        %v3097 = vld [vmem:[%s51 + $0x8] sm:$0xff]
        %3098 = vrot.lane.b32.xlu0 %v2853, 112
        %v3099 = vpop.permute.xlu0 %3098
        %3100 = vrot.lane.b32.xlu0 %v2930, 112
        %v3101 = vpop.permute.xlu0 %3100
        %v3102 = vsel %vm1069, %v3099, 0
        %v3104 = vsel %vm1069, %v3101, 0
        %3106 = vmatprep.subr.mxu0 0.0
        %3107 = vmatpush1.xpose.msra.mxu0 %v3104
        %3108 = vmatprep.subr.mxu0 0.0
        %3109 = vmatpush1.xpose.msra.mxu0 0.0
        %3110 = vmatprep.subr.mxu0 0.0
        %3111 = vmatpush1.xpose.msra.mxu0 0.0
        %3112 = vmatprep.subr.mxu0 0.0
        %3113 = vmatpush1.xpose.msra.mxu0 0.0
        %3114 = vmatprep.subr.mxu0 0.0
        %3115 = vmatpush1.xpose.msra.mxu0 0.0
        %3116 = vmatprep.subr.mxu0 0.0
        %3117 = vmatpush1.xpose.msra.mxu0 0.0
        %3118 = vmatprep.subr.mxu0 0.0
        %3119 = vmatpush1.xpose.msra.mxu0 0.0
        %3120 = vmatprep.subr.mxu0 0.0
        %3121 = vmatpush1.xpose.msra.mxu0 0.0
        %3122 = vmatprep.subr.mxu0 0.0
        %3123 = vmatpush1.xpose.msra.mxu0 0.0
        %3124 = vmatprep.subr.mxu0 0.0
        %3125 = vmatpush1.xpose.msra.mxu0 0.0
        %3126 = vmatprep.subr.mxu0 0.0
        %3127 = vmatpush1.xpose.msra.mxu0 0.0
        %3128 = vmatprep.subr.mxu0 0.0
        %3129 = vmatpush1.xpose.msra.mxu0 0.0
        %3130 = vmatprep.subr.mxu0 0.0
        %3131 = vmatpush1.xpose.msra.mxu0 0.0
        %3132 = vmatprep.subr.mxu0 0.0
        %3133 = vmatpush1.xpose.msra.mxu0 0.0
        %3134 = vmatprep.subr.mxu0 0.0
        %3135 = vmatpush1.xpose.msra.mxu0 0.0
        %3136 = vmatprep.subr.mxu0 0.0
        %3137 = vmatpush1.xpose.msra.mxu0 0.0
        %3138 = vmatprep.subr.mxu0 0.0
        %3139 = vmatpush1.xpose.msra.mxu0 0.0
        %3140 = vmatprep.subr.mxu0 0.0
        %3141 = vmatpush1.xpose.msra.mxu0 0.0
        %3142 = vmatprep.subr.mxu0 0.0
        %3143 = vmatpush1.xpose.msra.mxu0 0.0
        %3144 = vmatprep.subr.mxu0 0.0
        %3145 = vmatpush1.xpose.msra.mxu0 0.0
        %3146 = vmatprep.subr.mxu0 0.0
        %3147 = vmatpush1.xpose.msra.mxu0 0.0
        %3148 = vmatprep.subr.mxu0 0.0
        %3149 = vmatpush1.xpose.msra.mxu0 0.0
        %3150 = vmatprep.subr.mxu0 0.0
        %3151 = vmatpush1.xpose.msra.mxu0 0.0
        %3152 = vmatprep.subr.mxu0 0.0
        %3153 = vmatpush1.xpose.msra.mxu0 0.0
        %3154 = vmatprep.subr.mxu0 0.0
        %3155 = vmatpush1.xpose.msra.mxu0 0.0
        %3156 = vmatprep.subr.mxu0 0.0
        %3157 = vmatpush1.xpose.msra.mxu0 0.0
        %3158 = vmatprep.subr.mxu0 0.0
        %3159 = vmatpush1.xpose.msra.mxu0 0.0
        %3160 = vmatprep.subr.mxu0 0.0
        %3161 = vmatpush1.xpose.msra.mxu0 0.0
        %3162 = vmatprep.subr.mxu0 0.0
        %3163 = vmatpush1.xpose.msra.mxu0 0.0
        %3164 = vmatprep.subr.mxu0 0.0
        %3165 = vmatpush1.xpose.msra.mxu0 0.0
        %3166 = vmatprep.subr.mxu0 0.0
        %3167 = vmatpush1.xpose.msra.mxu0 0.0
        %3168 = vmatprep.subr.mxu0 0.0
        %3169 = vmatpush1.xpose.msra.mxu0 0.0
        %3170 = vmatprep.mubr.f32.mxu0 0.0
        %3171 = vmatmul.mubr.f32.gmra.mrb[0].mxu0 %v3102
        %v3172 = vpop.f32.mrb[0].mxu0
        %v3173 = vadd.f32 %v1398, %v3172
        %v3174 = vpop.f32.mrb[0].mxu0
        %3175 = vdwg.mxu0
        %v3176 = vsel %vm1477, %v3173, -inf
        %3177 = vmax.xlane.f32.xlu0 %v3176
        %v3178 = vpop.xlane.xlu0 %3177
        %v3179 = vsub.f32 %v3173, %v3178
        %v3180 = vmul.f32 %v3179, 1.442695
        %v3181 = vpow.pop %v3180
        %v3182 = vsel %vm1477, %v3181, 0.0
        %3183 = vadd.xlane.f32.xlu0 %v3182
        %v3184 = vpop.xlane.xlu0 %3183
        %v3185 = vrcp.pop %v3184
        %v3186 = vmul.f32 %v3181, %v3185
        %3187 = vrot.lane.b32.xlu0 %v2930, 80
        %v3188 = vpop.permute.xlu0 %3187
        %v3191 = vsel %vm1477, %v3186, 0
        %3193 = vmatprep.subr.mxu0 0.0
        %3194 = vmatpush1.msra.mxu0 %v3188
        %3195 = vmatprep.subr.mxu0 0.0
        %3196 = vmatpush1.msra.mxu0 0.0
        %3197 = vmatprep.subr.mxu0 0.0
        %3198 = vmatpush1.msra.mxu0 0.0
        %3199 = vmatprep.subr.mxu0 0.0
        %3200 = vmatpush1.msra.mxu0 0.0
        %3201 = vmatprep.subr.mxu0 0.0
        %3202 = vmatpush1.msra.mxu0 0.0
        %3203 = vmatprep.subr.mxu0 0.0
        %3204 = vmatpush1.msra.mxu0 0.0
        %3205 = vmatprep.subr.mxu0 0.0
        %3206 = vmatpush1.msra.mxu0 0.0
        %3207 = vmatprep.subr.mxu0 0.0
        %3208 = vmatpush1.msra.mxu0 0.0
        %3209 = vmatprep.subr.mxu0 0.0
        %3210 = vmatpush1.msra.mxu0 0.0
        %3211 = vmatprep.subr.mxu0 0.0
        %3212 = vmatpush1.msra.mxu0 0.0
        %3213 = vmatprep.subr.mxu0 0.0
        %3214 = vmatpush1.msra.mxu0 0.0
        %3215 = vmatprep.subr.mxu0 0.0
        %3216 = vmatpush1.msra.mxu0 0.0
        %3217 = vmatprep.subr.mxu0 0.0
        %3218 = vmatpush1.msra.mxu0 0.0
        %3219 = vmatprep.subr.mxu0 0.0
        %3220 = vmatpush1.msra.mxu0 0.0
        %3221 = vmatprep.subr.mxu0 0.0
        %3222 = vmatpush1.msra.mxu0 0.0
        %3223 = vmatprep.subr.mxu0 0.0
        %3224 = vmatpush1.msra.mxu0 0.0
        %3225 = vmatprep.subr.mxu0 0.0
        %3226 = vmatpush1.msra.mxu0 0.0
        %3227 = vmatprep.subr.mxu0 0.0
        %3228 = vmatpush1.msra.mxu0 0.0
        %3229 = vmatprep.subr.mxu0 0.0
        %3230 = vmatpush1.msra.mxu0 0.0
        %3231 = vmatprep.subr.mxu0 0.0
        %3232 = vmatpush1.msra.mxu0 0.0
        %3233 = vmatprep.subr.mxu0 0.0
        %3234 = vmatpush1.msra.mxu0 0.0
        %3235 = vmatprep.subr.mxu0 0.0
        %3236 = vmatpush1.msra.mxu0 0.0
        %3237 = vmatprep.subr.mxu0 0.0
        %3238 = vmatpush1.msra.mxu0 0.0
        %3239 = vmatprep.subr.mxu0 0.0
        %3240 = vmatpush1.msra.mxu0 0.0
        %3241 = vmatprep.subr.mxu0 0.0
        %3242 = vmatpush1.msra.mxu0 0.0
        %3243 = vmatprep.subr.mxu0 0.0
        %3244 = vmatpush1.msra.mxu0 0.0
        %3245 = vmatprep.subr.mxu0 0.0
        %3246 = vmatpush1.msra.mxu0 0.0
        %3247 = vmatprep.subr.mxu0 0.0
        %3248 = vmatpush1.msra.mxu0 0.0
        %3249 = vmatprep.subr.mxu0 0.0
        %3250 = vmatpush1.msra.mxu0 0.0
        %3251 = vmatprep.subr.mxu0 0.0
        %3252 = vmatpush1.msra.mxu0 0.0
        %3253 = vmatprep.subr.mxu0 0.0
        %3254 = vmatpush1.msra.mxu0 0.0
        %3255 = vmatprep.subr.mxu0 0.0
        %3256 = vmatpush1.msra.mxu0 0.0
        %3257 = vmatprep.mubr.f32.mxu0 0.0
        %3258 = vmatmul.mubr.f32.gmra.mrb[0].mxu0 %v3191
        %v3259 = vpop.f32.mrb[0].mxu0
        %v3260 = vadd.f32 0.0, %v3259
        %v3261 = vpop.f32.mrb[0].mxu0
        %3262 = vdwg.mxu0
        %v3263 = vld [vmem:[%s51 + $0x10] sm:$0xff]
        %v3264 = vld [vmem:[%s51 + $0x18] sm:$0xff]
        %v3266 = vsel %vm1069, %v3260, 0
        %3268 = vmatprep.subr.mxu0 0.0
        %3269 = vmatpush1.msra.mxu0 %v3263
        %3270 = vmatprep.subr.mxu0 0.0
        %3271 = vmatpush1.msra.mxu0 %v3264
        %3272 = vmatprep.subr.mxu0 0.0
        %3273 = vmatpush1.msra.mxu0 0.0
        %3274 = vmatprep.subr.mxu0 0.0
        %3275 = vmatpush1.msra.mxu0 0.0
        %3276 = vmatprep.subr.mxu0 0.0
        %3277 = vmatpush1.msra.mxu0 0.0
        %3278 = vmatprep.subr.mxu0 0.0
        %3279 = vmatpush1.msra.mxu0 0.0
        %3280 = vmatprep.subr.mxu0 0.0
        %3281 = vmatpush1.msra.mxu0 0.0
        %3282 = vmatprep.subr.mxu0 0.0
        %3283 = vmatpush1.msra.mxu0 0.0
        %3284 = vmatprep.subr.mxu0 0.0
        %3285 = vmatpush1.msra.mxu0 0.0
        %3286 = vmatprep.subr.mxu0 0.0
        %3287 = vmatpush1.msra.mxu0 0.0
        %3288 = vmatprep.subr.mxu0 0.0
        %3289 = vmatpush1.msra.mxu0 0.0
        %3290 = vmatprep.subr.mxu0 0.0
        %3291 = vmatpush1.msra.mxu0 0.0
        %3292 = vmatprep.subr.mxu0 0.0
        %3293 = vmatpush1.msra.mxu0 0.0
        %3294 = vmatprep.subr.mxu0 0.0
        %3295 = vmatpush1.msra.mxu0 0.0
        %3296 = vmatprep.subr.mxu0 0.0
        %3297 = vmatpush1.msra.mxu0 0.0
        %3298 = vmatprep.subr.mxu0 0.0
        %3299 = vmatpush1.msra.mxu0 0.0
        %3300 = vmatprep.subr.mxu0 0.0
        %3301 = vmatpush1.msra.mxu0 0.0
        %3302 = vmatprep.subr.mxu0 0.0
        %3303 = vmatpush1.msra.mxu0 0.0
        %3304 = vmatprep.subr.mxu0 0.0
        %3305 = vmatpush1.msra.mxu0 0.0
        %3306 = vmatprep.subr.mxu0 0.0
        %3307 = vmatpush1.msra.mxu0 0.0
        %3308 = vmatprep.subr.mxu0 0.0
        %3309 = vmatpush1.msra.mxu0 0.0
        %3310 = vmatprep.subr.mxu0 0.0
        %3311 = vmatpush1.msra.mxu0 0.0
        %3312 = vmatprep.subr.mxu0 0.0
        %3313 = vmatpush1.msra.mxu0 0.0
        %3314 = vmatprep.subr.mxu0 0.0
        %3315 = vmatpush1.msra.mxu0 0.0
        %3316 = vmatprep.subr.mxu0 0.0
        %3317 = vmatpush1.msra.mxu0 0.0
        %3318 = vmatprep.subr.mxu0 0.0
        %3319 = vmatpush1.msra.mxu0 0.0
        %3320 = vmatprep.subr.mxu0 0.0
        %3321 = vmatpush1.msra.mxu0 0.0
        %3322 = vmatprep.subr.mxu0 0.0
        %3323 = vmatpush1.msra.mxu0 0.0
        %3324 = vmatprep.subr.mxu0 0.0
        %3325 = vmatpush1.msra.mxu0 0.0
        %3326 = vmatprep.subr.mxu0 0.0
        %3327 = vmatpush1.msra.mxu0 0.0
        %3328 = vmatprep.subr.mxu0 0.0
        %3329 = vmatpush1.msra.mxu0 0.0
        %3330 = vmatprep.subr.mxu0 0.0
        %3331 = vmatpush1.msra.mxu0 0.0
        %3332 = vmatprep.mubr.f32.mxu0 0.0
        %3333 = vmatmul.mubr.f32.gmra.mrb[0].mxu0 %v3266
        %v3334 = vpop.f32.mrb[0].mxu0
        %v3335 = vadd.f32 0.0, %v3334
        %v3336 = vpop.f32.mrb[0].mxu0
        %3337 = vdwg.mxu0
        %v3339 = vsel %vm1069, %v3093, 0
        %3341 = vmatprep.subr.mxu0 0.0
        %3342 = vmatpush1.msra.mxu0 %v3096
        %3343 = vmatprep.subr.mxu0 0.0
        %3344 = vmatpush1.msra.mxu0 %v3097
        %3345 = vmatprep.subr.mxu0 0.0
        %3346 = vmatpush1.msra.mxu0 0.0
        %3347 = vmatprep.subr.mxu0 0.0
        %3348 = vmatpush1.msra.mxu0 0.0
        %3349 = vmatprep.subr.mxu0 0.0
        %3350 = vmatpush1.msra.mxu0 0.0
        %3351 = vmatprep.subr.mxu0 0.0
        %3352 = vmatpush1.msra.mxu0 0.0
        %3353 = vmatprep.subr.mxu0 0.0
        %3354 = vmatpush1.msra.mxu0 0.0
        %3355 = vmatprep.subr.mxu0 0.0
        %3356 = vmatpush1.msra.mxu0 0.0
        %3357 = vmatprep.subr.mxu0 0.0
        %3358 = vmatpush1.msra.mxu0 0.0
        %3359 = vmatprep.subr.mxu0 0.0
        %3360 = vmatpush1.msra.mxu0 0.0
        %3361 = vmatprep.subr.mxu0 0.0
        %3362 = vmatpush1.msra.mxu0 0.0
        %3363 = vmatprep.subr.mxu0 0.0
        %3364 = vmatpush1.msra.mxu0 0.0
        %3365 = vmatprep.subr.mxu0 0.0
        %3366 = vmatpush1.msra.mxu0 0.0
        %3367 = vmatprep.subr.mxu0 0.0
        %3368 = vmatpush1.msra.mxu0 0.0
        %3369 = vmatprep.subr.mxu0 0.0
        %3370 = vmatpush1.msra.mxu0 0.0
        %3371 = vmatprep.subr.mxu0 0.0
        %3372 = vmatpush1.msra.mxu0 0.0
        %3373 = vmatprep.subr.mxu0 0.0
        %3374 = vmatpush1.msra.mxu0 0.0
        %3375 = vmatprep.subr.mxu0 0.0
        %3376 = vmatpush1.msra.mxu0 0.0
        %3377 = vmatprep.subr.mxu0 0.0
        %3378 = vmatpush1.msra.mxu0 0.0
        %3379 = vmatprep.subr.mxu0 0.0
        %3380 = vmatpush1.msra.mxu0 0.0
        %3381 = vmatprep.subr.mxu0 0.0
        %3382 = vmatpush1.msra.mxu0 0.0
        %3383 = vmatprep.subr.mxu0 0.0
        %3384 = vmatpush1.msra.mxu0 0.0
        %3385 = vmatprep.subr.mxu0 0.0
        %3386 = vmatpush1.msra.mxu0 0.0
        %3387 = vmatprep.subr.mxu0 0.0
        %3388 = vmatpush1.msra.mxu0 0.0
        %3389 = vmatprep.subr.mxu0 0.0
        %3390 = vmatpush1.msra.mxu0 0.0
        %3391 = vmatprep.subr.mxu0 0.0
        %3392 = vmatpush1.msra.mxu0 0.0
        %3393 = vmatprep.subr.mxu0 0.0
        %3394 = vmatpush1.msra.mxu0 0.0
        %3395 = vmatprep.subr.mxu0 0.0
        %3396 = vmatpush1.msra.mxu0 0.0
        %3397 = vmatprep.subr.mxu0 0.0
        %3398 = vmatpush1.msra.mxu0 0.0
        %3399 = vmatprep.subr.mxu0 0.0
        %3400 = vmatpush1.msra.mxu0 0.0
        %3401 = vmatprep.subr.mxu0 0.0
        %3402 = vmatpush1.msra.mxu0 0.0
        %3403 = vmatprep.subr.mxu0 0.0
        %3404 = vmatpush1.msra.mxu0 0.0
        %3405 = vmatprep.mubr.f32.mxu0 0.0
        %3406 = vmatmul.mubr.f32.gmra.mrb[0].mxu0 %v3339
        %v3407 = vpop.f32.mrb[0].mxu0
        %v3408 = vadd.f32 %v3335, %v3407
        %v3409 = vpop.f32.mrb[0].mxu0
        %3410 = vdwg.mxu0
        %v3411 = vadd.f32 %v2762, %v3408
        %v3412 = vmul.f32 %v3411, %v3411
        %v3413 = vsel %vm1300, %v3412, 0.0
        %3414 = vadd.xlane.f32.xlu0 %v3413
        %v3415 = vpop.xlane.xlu0 %3414
        %v3416 = vmul.f32 %v3415, %v1304
        %v3417 = vadd.f32 %v3416, 1e-06
        %v3418 = vrsqrt.pop %v3417
        %v3419 = vmul.f32 %v3411, %v3418
        %v3420 = vld [vmem:[%s53] sm:$0x1]
        %v3422 = vlaneseq
        %v3423 = vshrl.u32 %v3422, 7
        %v3424 = vsub.s32 0, %v3423
        %v3425 = vrot.slane %v3420, %v3424
        %v3427 = vmul.f32 %v3419, %v3425
        %v3428 = vld [vmem:[%s55] sm:$0xff]
        %v3429 = vld [vmem:[%s55 + $0x8] sm:$0xff]
        %v3430 = vld [vmem:[%s55 + $0x10] sm:$0xff]
        %v3431 = vld [vmem:[%s55 + $0x18] sm:$0xff]
        %v3433 = vsel %vm1300, %v3427, 0
        %3435 = vmatprep.subr.mxu0 0.0
        %3436 = vmatpush1.msra.mxu0 %v3428
        %3437 = vmatprep.subr.mxu0 0.0
        %3438 = vmatpush1.msra.mxu0 %v3429
        %3439 = vmatprep.subr.mxu0 0.0
        %3440 = vmatpush1.msra.mxu0 %v3430
        %3441 = vmatprep.subr.mxu0 0.0
        %3442 = vmatpush1.msra.mxu0 %v3431
        %3443 = vmatprep.subr.mxu0 0.0
        %3444 = vmatpush1.msra.mxu0 0.0
        %3445 = vmatprep.subr.mxu0 0.0
        %3446 = vmatpush1.msra.mxu0 0.0
        %3447 = vmatprep.subr.mxu0 0.0
        %3448 = vmatpush1.msra.mxu0 0.0
        %3449 = vmatprep.subr.mxu0 0.0
        %3450 = vmatpush1.msra.mxu0 0.0
        %3451 = vmatprep.subr.mxu0 0.0
        %3452 = vmatpush1.msra.mxu0 0.0
        %3453 = vmatprep.subr.mxu0 0.0
        %3454 = vmatpush1.msra.mxu0 0.0
        %3455 = vmatprep.subr.mxu0 0.0
        %3456 = vmatpush1.msra.mxu0 0.0
        %3457 = vmatprep.subr.mxu0 0.0
        %3458 = vmatpush1.msra.mxu0 0.0
        %3459 = vmatprep.subr.mxu0 0.0
        %3460 = vmatpush1.msra.mxu0 0.0
        %3461 = vmatprep.subr.mxu0 0.0
        %3462 = vmatpush1.msra.mxu0 0.0
        %3463 = vmatprep.subr.mxu0 0.0
        %3464 = vmatpush1.msra.mxu0 0.0
        %3465 = vmatprep.subr.mxu0 0.0
        %3466 = vmatpush1.msra.mxu0 0.0
        %3467 = vmatprep.subr.mxu0 0.0
        %3468 = vmatpush1.msra.mxu0 0.0
        %3469 = vmatprep.subr.mxu0 0.0
        %3470 = vmatpush1.msra.mxu0 0.0
        %3471 = vmatprep.subr.mxu0 0.0
        %3472 = vmatpush1.msra.mxu0 0.0
        %3473 = vmatprep.subr.mxu0 0.0
        %3474 = vmatpush1.msra.mxu0 0.0
        %3475 = vmatprep.subr.mxu0 0.0
        %3476 = vmatpush1.msra.mxu0 0.0
        %3477 = vmatprep.subr.mxu0 0.0
        %3478 = vmatpush1.msra.mxu0 0.0
        %3479 = vmatprep.subr.mxu0 0.0
        %3480 = vmatpush1.msra.mxu0 0.0
        %3481 = vmatprep.subr.mxu0 0.0
        %3482 = vmatpush1.msra.mxu0 0.0
        %3483 = vmatprep.subr.mxu0 0.0
        %3484 = vmatpush1.msra.mxu0 0.0
        %3485 = vmatprep.subr.mxu0 0.0
        %3486 = vmatpush1.msra.mxu0 0.0
        %3487 = vmatprep.subr.mxu0 0.0
        %3488 = vmatpush1.msra.mxu0 0.0
        %3489 = vmatprep.subr.mxu0 0.0
        %3490 = vmatpush1.msra.mxu0 0.0
        %3491 = vmatprep.subr.mxu0 0.0
        %3492 = vmatpush1.msra.mxu0 0.0
        %3493 = vmatprep.subr.mxu0 0.0
        %3494 = vmatpush1.msra.mxu0 0.0
        %3495 = vmatprep.subr.mxu0 0.0
        %3496 = vmatpush1.msra.mxu0 0.0
        %3497 = vmatprep.subr.mxu0 0.0
        %3498 = vmatpush1.msra.mxu0 0.0
        %3499 = vmatprep.mubr.f32.mxu0 0.0
        %3500 = vmatmul.mubr.f32.gmra.mrb[0].mxu0 %v3433
        %v3501 = vpop.f32.mrb[0].mxu0
        %v3502 = vadd.f32 0.0, %v3501
        %v3503 = vpop.f32.mrb[0].mxu0
        %3504 = vdwg.mxu0
        %v3505 = vmul.f32 %v3502, %v3502
        %v3506 = vmul.f32 %v3502, %v3505
        %v3507 = vmul.f32 %v3506, 0.044715
        %v3508 = vadd.f32 %v3502, %v3507
        %v3509 = vmul.f32 %v3508, 0.7978846
        %v3510 = vtanh.pop %v3509
        %v3511 = vadd.f32 %v3510, 1.0
        %v3512 = vmul.f32 %v3511, 0.5
        %v3513 = vmul.f32 %v3502, %v3512
        %3515 = vrot.lane.b32.xlu0 %v3502, 64
        %v3516 = vpop.permute.xlu0 %3515
        %v3518 = vmul.f32 %v3513, %v3516
        %v3519 = vld [vmem:[%s57] sm:$0xff]
        %v3520 = vld [vmem:[%s57 + $0x8] sm:$0xff]
        %v3521 = vld [vmem:[%s57 + $0x10] sm:$0xff]
        %v3522 = vld [vmem:[%s57 + $0x18] sm:$0xff]
        %v3523 = vld [vmem:[%s57 + $0x20] sm:$0xff]
        %v3524 = vld [vmem:[%s57 + $0x28] sm:$0xff]
        %v3525 = vld [vmem:[%s57 + $0x30] sm:$0xff]
        %v3526 = vld [vmem:[%s57 + $0x38] sm:$0xff]
        %v3528 = vsel %vm1996, %v3518, 0
        %3530 = vmatprep.subr.mxu0 0.0
        %3531 = vmatpush1.msra.mxu0 %v3519
        %3532 = vmatprep.subr.mxu0 0.0
        %3533 = vmatpush1.msra.mxu0 %v3520
        %3534 = vmatprep.subr.mxu0 0.0
        %3535 = vmatpush1.msra.mxu0 %v3521
        %3536 = vmatprep.subr.mxu0 0.0
        %3537 = vmatpush1.msra.mxu0 %v3522
        %3538 = vmatprep.subr.mxu0 0.0
        %3539 = vmatpush1.msra.mxu0 %v3523
        %3540 = vmatprep.subr.mxu0 0.0
        %3541 = vmatpush1.msra.mxu0 %v3524
        %3542 = vmatprep.subr.mxu0 0.0
        %3543 = vmatpush1.msra.mxu0 %v3525
        %3544 = vmatprep.subr.mxu0 0.0
        %3545 = vmatpush1.msra.mxu0 %v3526
        %3546 = vmatprep.subr.mxu0 0.0
        %3547 = vmatpush1.msra.mxu0 0.0
        %3548 = vmatprep.subr.mxu0 0.0
        %3549 = vmatpush1.msra.mxu0 0.0
        %3550 = vmatprep.subr.mxu0 0.0
        %3551 = vmatpush1.msra.mxu0 0.0
        %3552 = vmatprep.subr.mxu0 0.0
        %3553 = vmatpush1.msra.mxu0 0.0
        %3554 = vmatprep.subr.mxu0 0.0
        %3555 = vmatpush1.msra.mxu0 0.0
        %3556 = vmatprep.subr.mxu0 0.0
        %3557 = vmatpush1.msra.mxu0 0.0
        %3558 = vmatprep.subr.mxu0 0.0
        %3559 = vmatpush1.msra.mxu0 0.0
        %3560 = vmatprep.subr.mxu0 0.0
        %3561 = vmatpush1.msra.mxu0 0.0
        %3562 = vmatprep.subr.mxu0 0.0
        %3563 = vmatpush1.msra.mxu0 0.0
        %3564 = vmatprep.subr.mxu0 0.0
        %3565 = vmatpush1.msra.mxu0 0.0
        %3566 = vmatprep.subr.mxu0 0.0
        %3567 = vmatpush1.msra.mxu0 0.0
        %3568 = vmatprep.subr.mxu0 0.0
        %3569 = vmatpush1.msra.mxu0 0.0
        %3570 = vmatprep.subr.mxu0 0.0
        %3571 = vmatpush1.msra.mxu0 0.0
        %3572 = vmatprep.subr.mxu0 0.0
        %3573 = vmatpush1.msra.mxu0 0.0
        %3574 = vmatprep.subr.mxu0 0.0
        %3575 = vmatpush1.msra.mxu0 0.0
        %3576 = vmatprep.subr.mxu0 0.0
        %3577 = vmatpush1.msra.mxu0 0.0
        %3578 = vmatprep.subr.mxu0 0.0
        %3579 = vmatpush1.msra.mxu0 0.0
        %3580 = vmatprep.subr.mxu0 0.0
        %3581 = vmatpush1.msra.mxu0 0.0
        %3582 = vmatprep.subr.mxu0 0.0
        %3583 = vmatpush1.msra.mxu0 0.0
        %3584 = vmatprep.subr.mxu0 0.0
        %3585 = vmatpush1.msra.mxu0 0.0
        %3586 = vmatprep.subr.mxu0 0.0
        %3587 = vmatpush1.msra.mxu0 0.0
        %3588 = vmatprep.subr.mxu0 0.0
        %3589 = vmatpush1.msra.mxu0 0.0
        %3590 = vmatprep.subr.mxu0 0.0
        %3591 = vmatpush1.msra.mxu0 0.0
        %3592 = vmatprep.subr.mxu0 0.0
        %3593 = vmatpush1.msra.mxu0 0.0
        %3594 = vmatprep.mubr.f32.mxu0 0.0
        %3595 = vmatmul.mubr.f32.gmra.mrb[0].mxu0 %v3528
        %v3596 = vpop.f32.mrb[0].mxu0
        %v3597 = vadd.f32 0.0, %v3596
        %v3598 = vpop.f32.mrb[0].mxu0
        %3599 = vdwg.mxu0
        %v3600 = vadd.f32 %v3411, %v3597
        %v3601 = vmul.f32 %v3600, %v3600
        %v3602 = vsel %vm1300, %v3601, 0.0
        %3603 = vadd.xlane.f32.xlu0 %v3602
        %v3604 = vpop.xlane.xlu0 %3603
        %v3605 = vmul.f32 %v3604, %v1304
        %v3606 = vadd.f32 %v3605, 1e-06
        %v3607 = vrsqrt.pop %v3606
        %v3608 = vmul.f32 %v3600, %v3607
        %v3609 = vld [vmem:[%s59] sm:$0x1]
        %v3611 = vlaneseq
        %v3612 = vshrl.u32 %v3611, 7
        %v3613 = vsub.s32 0, %v3612
        %v3614 = vrot.slane %v3609, %v3613
        %v3616 = vmul.f32 %v3608, %v3614
        %v3617 = vld [vmem:[%s61] sm:$0xff]
        %v3618 = vld [vmem:[%s61 + $0x8] sm:$0xff]
        %v3619 = vld [vmem:[%s61 + $0x10] sm:$0xff]
        %v3620 = vld [vmem:[%s61 + $0x18] sm:$0xff]
        %v3622 = vsel %vm1300, %v3616, 0
        %3624 = vmatprep.subr.mxu0 0.0
        %3625 = vmatpush1.msra.mxu0 %v3617
        %3626 = vmatprep.subr.mxu0 0.0
        %3627 = vmatpush1.msra.mxu0 %v3618
        %3628 = vmatprep.subr.mxu0 0.0
        %3629 = vmatpush1.msra.mxu0 %v3619
        %3630 = vmatprep.subr.mxu0 0.0
        %3631 = vmatpush1.msra.mxu0 %v3620
        %3632 = vmatprep.subr.mxu0 0.0
        %3633 = vmatpush1.msra.mxu0 0.0
        %3634 = vmatprep.subr.mxu0 0.0
        %3635 = vmatpush1.msra.mxu0 0.0
        %3636 = vmatprep.subr.mxu0 0.0
        %3637 = vmatpush1.msra.mxu0 0.0
        %3638 = vmatprep.subr.mxu0 0.0
        %3639 = vmatpush1.msra.mxu0 0.0
        %3640 = vmatprep.subr.mxu0 0.0
        %3641 = vmatpush1.msra.mxu0 0.0
        %3642 = vmatprep.subr.mxu0 0.0
        %3643 = vmatpush1.msra.mxu0 0.0
        %3644 = vmatprep.subr.mxu0 0.0
        %3645 = vmatpush1.msra.mxu0 0.0
        %3646 = vmatprep.subr.mxu0 0.0
        %3647 = vmatpush1.msra.mxu0 0.0
        %3648 = vmatprep.subr.mxu0 0.0
        %3649 = vmatpush1.msra.mxu0 0.0
        %3650 = vmatprep.subr.mxu0 0.0
        %3651 = vmatpush1.msra.mxu0 0.0
        %3652 = vmatprep.subr.mxu0 0.0
        %3653 = vmatpush1.msra.mxu0 0.0
        %3654 = vmatprep.subr.mxu0 0.0
        %3655 = vmatpush1.msra.mxu0 0.0
        %3656 = vmatprep.subr.mxu0 0.0
        %3657 = vmatpush1.msra.mxu0 0.0
        %3658 = vmatprep.subr.mxu0 0.0
        %3659 = vmatpush1.msra.mxu0 0.0
        %3660 = vmatprep.subr.mxu0 0.0
        %3661 = vmatpush1.msra.mxu0 0.0
        %3662 = vmatprep.subr.mxu0 0.0
        %3663 = vmatpush1.msra.mxu0 0.0
        %3664 = vmatprep.subr.mxu0 0.0
        %3665 = vmatpush1.msra.mxu0 0.0
        %3666 = vmatprep.subr.mxu0 0.0
        %3667 = vmatpush1.msra.mxu0 0.0
        %3668 = vmatprep.subr.mxu0 0.0
        %3669 = vmatpush1.msra.mxu0 0.0
        %3670 = vmatprep.subr.mxu0 0.0
        %3671 = vmatpush1.msra.mxu0 0.0
        %3672 = vmatprep.subr.mxu0 0.0
        %3673 = vmatpush1.msra.mxu0 0.0
        %3674 = vmatprep.subr.mxu0 0.0
        %3675 = vmatpush1.msra.mxu0 0.0
        %3676 = vmatprep.subr.mxu0 0.0
        %3677 = vmatpush1.msra.mxu0 0.0
        %3678 = vmatprep.subr.mxu0 0.0
        %3679 = vmatpush1.msra.mxu0 0.0
        %3680 = vmatprep.subr.mxu0 0.0
        %3681 = vmatpush1.msra.mxu0 0.0
        %3682 = vmatprep.subr.mxu0 0.0
        %3683 = vmatpush1.msra.mxu0 0.0
        %3684 = vmatprep.subr.mxu0 0.0
        %3685 = vmatpush1.msra.mxu0 0.0
        %3686 = vmatprep.subr.mxu0 0.0
        %3687 = vmatpush1.msra.mxu0 0.0
        %3688 = vmatprep.mubr.f32.mxu0 0.0
        %3689 = vmatmul.mubr.f32.gmra.mrb[0].mxu0 %v3622
        %v3690 = vpop.f32.mrb[0].mxu0
        %v3691 = vadd.f32 0.0, %v3690
        %v3692 = vpop.f32.mrb[0].mxu0
        %3693 = vdwg.mxu0
        %v3694 = vsel %vm1996, %v3691, -inf
        %3695 = vmax.xlane.f32.xlu0 %v3694
        %v3696 = vpop.xlane.xlu0 %3695
        %v3697 = vsub.f32 %v3691, %v3696
        %v3698 = vmul.f32 %v3697, 1.442695
        %v3699 = vpow.pop %v3698
        %v3700 = vsel %vm1996, %v3699, 0.0
        %3701 = vadd.xlane.f32.xlu0 %v3700
        %v3702 = vpop.xlane.xlu0 %3701
        %v3703 = vlog2.pop %v3702
        %v3704 = vmul.f32 %v3703, 0.6931472
        %v3705 = vadd.f32 %v3704, %v3696
        %3706 = vset.pattern.permute.xlu0 0
        %3707 = vperm.xlu0 %3706, %v2089
        %v3708 = vpop.permute.xlu0 %3707
        %vm3709 = vcmp.eq.s32.totalorder %v1050, %v3708
        %v3710 = vsel %vm3709, %v3691, 0.0
        %v3711 = vsel %vm1996, %v3710, 0.0
        %3712 = vadd.xlane.f32.xlu0 %v3711
        %v3713 = vpop.xlane.xlu0 %3712
        %vm3714 = vcmp.ne.s32.totalorder %v2089, 4294967196
        %v3715 = vsel %vm3714, 1, 0
        %v3716 = vcvt.s32.f32 %v3715
        %v3717 = vsub.f32 %v3705, %v3713
        %v3718 = vmul.f32 %v3717, %v3716
        %v3719 = vld [vmem:[#allocation2] sm:$0x1]
        %vm3720 = vcmask 7168
        %v3721 = vsel %vm3720, %v3718, 0.0
        %v3722 = vrot.slane %v3721, 4
        %v3723 = vadd.f32 %v3721, %v3722
        %v3724 = vrot.slane %v3723, 2
        %v3725 = vadd.f32 %v3723, %v3724
        %v3726 = vrot.slane %v3725, 1
        %v3727 = vadd.f32 %v3725, %v3726
        %v3728 = vadd.f32 %v3719, %v3727
        %vm3729 = vcmask 0
        %3730 = vst.msk [vmem:[#allocation2] sm:$0x1] %vm3729, %v3728
        %v3731 = vld [vmem:[#allocation3] sm:$0x1]
        %v3732 = vsel %vm3720, %v3716, 0.0
        %v3733 = vrot.slane %v3732, 4
        %v3734 = vadd.f32 %v3732, %v3733
        %v3735 = vrot.slane %v3734, 2
        %v3736 = vadd.f32 %v3734, %v3735
        %v3737 = vrot.slane %v3736, 1
        %v3738 = vadd.f32 %v3736, %v3737
        %v3739 = vadd.f32 %v3731, %v3738
        %3740 = vst.msk [vmem:[#allocation3] sm:$0x1] %vm3729, %v3739
        %v3741 = vld [vmem:[#allocation2] sm:$0x1]
        %v3742 = vld [vmem:[#allocation3] sm:$0x1]
        %v3743 = vmax.f32 %v3742, 1.0
        %v3744 = vrcp.pop %v3743
        %v3745 = vmul.f32 %v3741, %v3744
        %3746 = vst.msk [vmem:[#allocation4] sm:$0x1] %vm3729, %v3745
        // Predicated region
        $region149: #{benetech_forward.1} parent=143 // pred_check
          %p3747 = pneg %p774
        $region150: #{benetech_forward.1} parent=143 // pred_check_branch
          %3749 = sbr.rel (%p3747) target = $region152
        $region151: #{benetech_forward.1} parent=143 // pred_region
          %s3751 = ssub.s32 16, 16
          %3752 = vsyncadd [#allocation5], %s3751
          %s3754 = sshll.u32 [#allocation4], 4
          %s3755 = int_to_ptr.vmem [resolvable:$true] %s3754
          %3757 = dma.vmem_to_hbm [thread:$0]  %s3755, 16, %s63, [#allocation5]
        $region152: #{benetech_forward.1} parent=143 // pred_fallthru
          _
        // Predicated region
        $region153: #{benetech_forward.1} parent=143 // pred_check
          %p3758 = pneg %p774
        $region154: #{benetech_forward.1} parent=143 // pred_check_branch
          %3760 = sbr.rel (%p3758) target = $region156
        $region155: #{benetech_forward.1} parent=143 // pred_region
          %3761 = dma.done [#allocation5], 16
        $region156: #{benetech_forward.1} parent=143 // pred_fallthru
          _
      $region144: #{benetech_forward.1} parent=5 // pred_fallthru
        _
      %p3762 = scmp.le.s32.totalorder 2, %s70
      // Predicated region
      $region157: #{benetech_forward.1} parent=5 // pred_check
        %p3763 = pneg %p3762
      $region158: #{benetech_forward.1} parent=5 // pred_check_branch
        %3765 = sbr.rel (%p3763) target = $region160
      $region159: #{benetech_forward.1} parent=5 // pred_region
        %s3766 = ssub.s32 %s70, 2
      $region160: #{benetech_forward.1} parent=5 // pred_fallthru
        _
    $region6: #{benetech_forward.1} parent=1 // loop_footer
      %s74 = sadd.s32 1, %s70
    $region7: #{benetech_forward.1} parent=1 // loop_footer_branch
      %69 = sbr.rel target = $region3
    $region8: #{benetech_forward.1} parent=1 // loop_exit
      _
    %3767 = vsyncpa [#allocation5], 1
    %s3768 = scalar_lea.sflag [#allocation5], 1
    %3769 = vsyncpa %s3768, 1

</llo_original>
